<compile_context>
chip_gen: v5e
topology: v5e:2x2
jax: 0.10.0
libtpu: 0.0.40
codegen_flags: <defaults>
</compile_context>

<pallas_src>
import jax
import jax.numpy as jnp
from jax.experimental import pallas as pl
from jax.experimental.pallas import tpu as pltpu

_LANE = 128


def _basic_block_kernel(x_ref, w1_ref, b1_ref, w2_ref, b2_ref, out_ref, halo):
    """One grid step == one batch element (NHWC, channels lane-padded).

    x_ref  : (1, H, W, Cp)   activations (compute dtype, no spatial pad)
    w1_ref : (9*Cp, Pp)      conv1 weights, bn1 scale folded, (ky,kx,Cin) packed
    b1_ref : (1, Pp)         bn1 bias (f32)
    w2_ref : (9*Pp, Pp)      conv2 weights, bn2 scale folded
    b2_ref : (1, Pp)         bn2 bias (f32)
    out_ref: (1, H, W, Pp)   output (compute dtype)
    halo   : (H+2, W+2, Cp)  zero-bordered scratch shared by conv1 and conv2
    """
    _, H, W, Cp = x_ref.shape
    Pp = out_ref.shape[-1]
    cdt = halo.dtype

    # Zero only the 1-px border; the interior is fully rewritten each step.
    halo[0:1, :, :] = jnp.zeros((1, W + 2, Cp), cdt)
    halo[H + 1:H + 2, :, :] = jnp.zeros((1, W + 2, Cp), cdt)
    halo[1:H + 1, 0:1, :] = jnp.zeros((H, 1, Cp), cdt)
    halo[1:H + 1, W + 1:W + 2, :] = jnp.zeros((H, 1, Cp), cdt)

    # conv1 input -> halo interior (built in VMEM; no host-side spatial pad).
    halo[1:H + 1, 1:W + 1, :] = x_ref[0].astype(cdt)

    def conv3x3(w_ref):
        # One im2col patch (H*W, 9*Cp) and a single K=9*Cp MXU matmul.
        taps = [halo[ky:ky + H, kx:kx + W, :]
                for ky in range(3) for kx in range(3)]
        patch = jnp.concatenate(taps, axis=-1).reshape(H * W, 9 * Cp)
        return jnp.dot(patch, w_ref[...], preferred_element_type=jnp.float32)

    # conv1 -> bn1 (bias only; scale folded into w1) -> relu
    out1 = jnp.maximum(conv3x3(w1_ref) + b1_ref[...], 0.0)      # (H*W, Pp) f32

    # Reuse the same halo scratch as conv2's input (border stays zero).
    halo[1:H + 1, 1:W + 1, :] = out1.reshape(H, W, Pp).astype(cdt)

    # conv2 -> bn2 (bias) -> +identity residual -> relu
    out2 = conv3x3(w2_ref) + b2_ref[...]                        # (H*W, Pp) f32
    res = x_ref[0].astype(jnp.float32).reshape(H * W, Cp)
    y = jnp.maximum(out2 + res, 0.0)
    out_ref[0] = y.reshape(H, W, Pp).astype(out_ref.dtype)


def _round_up(x, m):
    return (x + m - 1) // m * m


def basic_block_forward(x_nchw, params, eps=1e-5, compute_dtype=jnp.bfloat16):
    """BasicBlock forward (stride=1, downsample=None). Input/output NCHW."""
    N, C, H, W = x_nchw.shape
    P = params["w1"].shape[0]
    # Identity residual (stride=1, downsample=None) requires inplanes == planes.
    assert params["w1"].shape == (P, C, 3, 3) and params["w2"].shape == (P, P, 3, 3)
    assert C == P

    # Lane-dense channel padding (padded weight/bias rows are zero -> padded
    # output channels are exactly zero and are sliced off at the end).
    Cp = _round_up(C, _LANE)
    Pp = Cp

    def fold_bn(gamma, beta, mean, var):
        scale = gamma / jnp.sqrt(var + eps)
        return scale, beta - mean * scale

    s1, b1 = fold_bn(params["bn1_gamma"], params["bn1_beta"],
                     params["bn1_mean"], params["bn1_var"])
    s2, b2 = fold_bn(params["bn2_gamma"], params["bn2_beta"],
                     params["bn2_mean"], params["bn2_var"])

    # PyTorch (O, I, kh, kw) -> (kh, kw, I, O), fold bn scale into out channel.
    w1 = jnp.transpose(params["w1"], (2, 3, 1, 0)) * s1[None, None, None, :]
    w2 = jnp.transpose(params["w2"], (2, 3, 1, 0)) * s2[None, None, None, :]

    def pack_w(w, cin, cin_p):
        wp = jnp.zeros((3, 3, cin_p, Pp), jnp.float32).at[:, :, :cin, :P].set(w)
        return wp.reshape(9 * cin_p, Pp).astype(compute_dtype)

    w1p = pack_w(w1, C, Cp)
    w2p = pack_w(w2, P, Pp)
    b1p = jnp.zeros((1, Pp), jnp.float32).at[:, :P].set(b1[None, :])
    b2p = jnp.zeros((1, Pp), jnp.float32).at[:, :P].set(b2[None, :])

    # NCHW -> NHWC + cast + lane-pad channels: one fused layout pass, and NO
    # spatial halo pad (that is built in VMEM inside the kernel).
    x = jnp.transpose(x_nchw, (0, 2, 3, 1))
    x = jnp.pad(x, ((0, 0), (0, 0), (0, 0), (0, Cp - C))).astype(compute_dtype)

    itemsize = jnp.dtype(compute_dtype).itemsize
    blk_in = H * W * Cp * itemsize
    blk_out = H * W * Pp * itemsize
    w_bytes = 9 * (Cp + Pp) * Pp * itemsize + 2 * Pp * 4
    halo_bytes = (H + 2) * (W + 2) * Cp * itemsize
    patch_bytes = 2 * H * W * 9 * Cp * itemsize          # patch + concat temps
    acc_bytes = 3 * H * W * Pp * 4                        # f32 matmul/elemwise temps
    working = (2 * (blk_in + blk_out) + 2 * w_bytes + halo_bytes
               + patch_bytes + acc_bytes)

    try:
        vmem_cap = pltpu.get_tpu_info().vmem_capacity_bytes
    except Exception:
        vmem_cap = 64 << 20
    # Leave headroom for Mosaic internal scratch / pipeline double buffers.
    vmem_limit = int(max(16 << 20, min(int(0.75 * vmem_cap), 2 * working)))

    flops = 2 * N * H * W * 9 * (Cp * Pp + Pp * Pp) + 8 * N * H * W * Pp
    bytes_accessed = int(N * (blk_in + blk_out) + w_bytes)
    cost = pl.CostEstimate(flops=flops, transcendentals=0,
                           bytes_accessed=bytes_accessed)

    grid_spec = pltpu.PrefetchScalarGridSpec(
        num_scalar_prefetch=0,
        grid=(N,),
        in_specs=[
            pl.BlockSpec((1, H, W, Cp), lambda n: (n, 0, 0, 0)),   # x (no halo)
            pl.BlockSpec((9 * Cp, Pp), lambda n: (0, 0)),          # w1 (scaled)
            pl.BlockSpec((1, Pp), lambda n: (0, 0)),               # b1
            pl.BlockSpec((9 * Pp, Pp), lambda n: (0, 0)),          # w2 (scaled)
            pl.BlockSpec((1, Pp), lambda n: (0, 0)),               # b2
        ],
        out_specs=pl.BlockSpec((1, H, W, Pp), lambda n: (n, 0, 0, 0)),
        scratch_shapes=[pltpu.VMEM((H + 2, W + 2, Cp), compute_dtype)],
    )

    out = pl.pallas_call(
        _basic_block_kernel,
        out_shape=jax.ShapeDtypeStruct((N, H, W, Pp), compute_dtype),
        grid_spec=grid_spec,
        compiler_params=pltpu.CompilerParams(
            dimension_semantics=("parallel",),
            vmem_limit_bytes=vmem_limit),
        cost_estimate=cost,
    )(x, w1p, b1p, w2p, b2p)

    # Drop lane padding, back to NCHW in the caller's dtype.
    out = out[..., :P]
    return jnp.transpose(out, (0, 3, 1, 2)).astype(x_nchw.dtype)


def reference_forward(x_nchw, params, eps=1e-5):
    """Pure-JAX f32 reference (lax conv) with identical semantics."""
    def conv3x3(x, w):
        return jax.lax.conv_general_dilated(
            x, w, window_strides=(1, 1), padding=((1, 1), (1, 1)),
            dimension_numbers=("NCHW", "OIHW", "NCHW"))

    def bn(x, g, b, m, v):
        g = g.reshape(1, -1, 1, 1)
        b = b.reshape(1, -1, 1, 1)
        m = m.reshape(1, -1, 1, 1)
        v = v.reshape(1, -1, 1, 1)
        return (x - m) / jnp.sqrt(v + eps) * g + b

    out = conv3x3(x_nchw, params["w1"])
    out = jnp.maximum(bn(out, params["bn1_gamma"], params["bn1_beta"],
                         params["bn1_mean"], params["bn1_var"]), 0.0)
    out = conv3x3(out, params["w2"])
    out = bn(out, params["bn2_gamma"], params["bn2_beta"],
             params["bn2_mean"], params["bn2_var"])
    return jnp.maximum(out + x_nchw, 0.0)


def make_params(key, inplanes, planes):
    k = jax.random.split(key, 8)
    return {
        "w1": 0.1 * jax.random.normal(k[0], (planes, inplanes, 3, 3), jnp.float32),
        "w2": 0.1 * jax.random.normal(k[1], (planes, planes, 3, 3), jnp.float32),
        "bn1_gamma": 1.0 + 0.1 * jax.random.normal(k[2], (planes,), jnp.float32),
        "bn1_beta": 0.1 * jax.random.normal(k[3], (planes,), jnp.float32),
        "bn1_mean": 0.05 * jax.random.normal(k[4], (planes,), jnp.float32),
        "bn1_var": jnp.abs(1.0 + 0.1 * jax.random.normal(k[5], (planes,), jnp.float32)),
        "bn2_gamma": 1.0 + 0.1 * jax.random.normal(k[6], (planes,), jnp.float32),
        "bn2_beta": 0.1 * jax.random.normal(k[7], (planes,), jnp.float32),
        "bn2_mean": jnp.zeros((planes,), jnp.float32),
        "bn2_var": jnp.ones((planes,), jnp.float32),
    }


if __name__ == "__main__":
    key = jax.random.PRNGKey(0)
    kx, kp = jax.random.split(key)

    # BasicBlock with stride=1, downsample=None => inplanes == planes.
    N, C, H, W = 2, 4, 16, 16
    x = jax.random.normal(kx, (N, C, H, W), jnp.float32)
    params = make_params(kp, inplanes=C, planes=C)

    ref = jax.block_until_ready(reference_forward(x, params))

    # Strict path: f32 matmuls / f32 residual.
    out_f32 = jax.block_until_ready(
        basic_block_forward(x, params, compute_dtype=jnp.float32))
    assert out_f32.shape == ref.shape == (N, C, H, W)
    assert jnp.allclose(out_f32, ref, atol=2e-3, rtol=2e-3), (
        float(jnp.max(jnp.abs(out_f32 - ref))))

    # Default fast path: bf16 MXU matmuls (f32 accumulation), bf16 HBM output.
    out_bf16 = jax.block_until_ready(
        basic_block_forward(x, params, compute_dtype=jnp.bfloat16))
    assert out_bf16.shape == ref.shape
    assert jnp.allclose(out_bf16.astype(jnp.float32), ref, atol=5e-2, rtol=5e-2), (
        float(jnp.max(jnp.abs(out_bf16.astype(jnp.float32) - ref))))

    print("KERNEL_OK")
</pallas_src>

<mosaic_0001>
module attributes {stable_mosaic.version = 11 : i64} {
  func.func @_basic_block_kernel(%arg0: i32, %arg1: memref<1x16x16x128xf32, #tpu.memory_space<vmem>>, %arg2: memref<1152x128xf32, #tpu.memory_space<vmem>>, %arg3: memref<1x128xf32, #tpu.memory_space<vmem>>, %arg4: memref<1152x128xf32, #tpu.memory_space<vmem>>, %arg5: memref<1x128xf32, #tpu.memory_space<vmem>>, %arg6: memref<1x16x16x128xf32, #tpu.memory_space<vmem>>, %arg7: memref<18x18x128xf32, #tpu.memory_space<vmem>>) attributes {dimension_semantics = [#tpu.dimension_semantics<parallel>], iteration_bounds = array<i64: 2>, scalar_prefetch = 0 : i64, scratch_operands = 1 : i64, tpu.core_type = #tpu.core_type<tc>, window_params = [{transform_indices = @transform_0, window_bounds = array<i64: 1, 16, 16, 128>}, {pipeline_mode = #tpu.pipeline_mode<synchronous>, transform_indices = @transform_1, window_bounds = array<i64: 1152, 128>}, {pipeline_mode = #tpu.pipeline_mode<synchronous>, transform_indices = @transform_2, window_bounds = array<i64: 1, 128>}, {pipeline_mode = #tpu.pipeline_mode<synchronous>, transform_indices = @transform_3, window_bounds = array<i64: 1152, 128>}, {pipeline_mode = #tpu.pipeline_mode<synchronous>, transform_indices = @transform_4, window_bounds = array<i64: 1, 128>}, {transform_indices = @transform_5, window_bounds = array<i64: 1, 16, 16, 128>}]} {
    %cst = arith.constant 0.000000e+00 : f32
    %0 = vector.broadcast %cst : f32 to vector<1x18x128xf32>
    %c0 = arith.constant 0 : index
    %c0_0 = arith.constant 0 : index
    %c0_1 = arith.constant 0 : index
    %1 = vector.load %arg7[%c0, %c0_0, %c0_1] : memref<18x18x128xf32, #tpu.memory_space<vmem>>, vector<1x18x128xf32>
    tpu.vector_store %arg7[%c0, %c0_0, %c0_1], %0 {strides = array<i32>} : memref<18x18x128xf32, #tpu.memory_space<vmem>>, vector<1x18x128xf32>,
    %cst_2 = arith.constant 0.000000e+00 : f32
    %2 = vector.broadcast %cst_2 : f32 to vector<1x18x128xf32>
    %c17 = arith.constant 17 : index
    %c0_3 = arith.constant 0 : index
    %c0_4 = arith.constant 0 : index
    %3 = vector.load %arg7[%c17, %c0_3, %c0_4] : memref<18x18x128xf32, #tpu.memory_space<vmem>>, vector<1x18x128xf32>
    tpu.vector_store %arg7[%c17, %c0_3, %c0_4], %2 {strides = array<i32>} : memref<18x18x128xf32, #tpu.memory_space<vmem>>, vector<1x18x128xf32>,
    %cst_5 = arith.constant 0.000000e+00 : f32
    %4 = vector.broadcast %cst_5 : f32 to vector<16x1x128xf32>
    %c1 = arith.constant 1 : index
    %c0_6 = arith.constant 0 : index
    %c0_7 = arith.constant 0 : index
    %5 = vector.load %arg7[%c1, %c0_6, %c0_7] : memref<18x18x128xf32, #tpu.memory_space<vmem>>, vector<16x1x128xf32>
    tpu.vector_store %arg7[%c1, %c0_6, %c0_7], %4 {strides = array<i32>} : memref<18x18x128xf32, #tpu.memory_space<vmem>>, vector<16x1x128xf32>,
    %cst_8 = arith.constant 0.000000e+00 : f32
    %6 = vector.broadcast %cst_8 : f32 to vector<16x1x128xf32>
    %c1_9 = arith.constant 1 : index
    %c17_10 = arith.constant 17 : index
    %c0_11 = arith.constant 0 : index
    %7 = vector.load %arg7[%c1_9, %c17_10, %c0_11] : memref<18x18x128xf32, #tpu.memory_space<vmem>>, vector<16x1x128xf32>
    tpu.vector_store %arg7[%c1_9, %c17_10, %c0_11], %6 {strides = array<i32>} : memref<18x18x128xf32, #tpu.memory_space<vmem>>, vector<16x1x128xf32>,
    %c0_12 = arith.constant 0 : index
    %c0_13 = arith.constant 0 : index
    %c0_14 = arith.constant 0 : index
    %c0_15 = arith.constant 0 : index
    %8 = vector.load %arg1[%c0_12, %c0_13, %c0_14, %c0_15] : memref<1x16x16x128xf32, #tpu.memory_space<vmem>>, vector<1x16x16x128xf32>
    %9 = vector.shape_cast %8 : vector<1x16x16x128xf32> to vector<16x16x128xf32>
    %c1_16 = arith.constant 1 : index
    %c1_17 = arith.constant 1 : index
    %c0_18 = arith.constant 0 : index
    %10 = vector.load %arg7[%c1_16, %c1_17, %c0_18] : memref<18x18x128xf32, #tpu.memory_space<vmem>>, vector<16x16x128xf32>
    tpu.vector_store %arg7[%c1_16, %c1_17, %c0_18], %9 {strides = array<i32>} : memref<18x18x128xf32, #tpu.memory_space<vmem>>, vector<16x16x128xf32>,
    %c0_19 = arith.constant 0 : index
    %c0_20 = arith.constant 0 : index
    %c0_21 = arith.constant 0 : index
    %11 = vector.load %arg7[%c0_19, %c0_20, %c0_21] : memref<18x18x128xf32, #tpu.memory_space<vmem>>, vector<16x16x128xf32>
    %c0_22 = arith.constant 0 : index
    %c1_23 = arith.constant 1 : index
    %c0_24 = arith.constant 0 : index
    %12 = vector.load %arg7[%c0_22, %c1_23, %c0_24] : memref<18x18x128xf32, #tpu.memory_space<vmem>>, vector<16x16x128xf32>
    %c0_25 = arith.constant 0 : index
    %c2 = arith.constant 2 : index
    %c0_26 = arith.constant 0 : index
    %13 = vector.load %arg7[%c0_25, %c2, %c0_26] : memref<18x18x128xf32, #tpu.memory_space<vmem>>, vector<16x16x128xf32>
    %c1_27 = arith.constant 1 : index
    %c0_28 = arith.constant 0 : index
    %c0_29 = arith.constant 0 : index
    %14 = vector.load %arg7[%c1_27, %c0_28, %c0_29] : memref<18x18x128xf32, #tpu.memory_space<vmem>>, vector<16x16x128xf32>
    %c1_30 = arith.constant 1 : index
    %c1_31 = arith.constant 1 : index
    %c0_32 = arith.constant 0 : index
    %15 = vector.load %arg7[%c1_30, %c1_31, %c0_32] : memref<18x18x128xf32, #tpu.memory_space<vmem>>, vector<16x16x128xf32>
    %c1_33 = arith.constant 1 : index
    %c2_34 = arith.constant 2 : index
    %c0_35 = arith.constant 0 : index
    %16 = vector.load %arg7[%c1_33, %c2_34, %c0_35] : memref<18x18x128xf32, #tpu.memory_space<vmem>>, vector<16x16x128xf32>
    %c2_36 = arith.constant 2 : index
    %c0_37 = arith.constant 0 : index
    %c0_38 = arith.constant 0 : index
    %17 = vector.load %arg7[%c2_36, %c0_37, %c0_38] : memref<18x18x128xf32, #tpu.memory_space<vmem>>, vector<16x16x128xf32>
    %c2_39 = arith.constant 2 : index
    %c1_40 = arith.constant 1 : index
    %c0_41 = arith.constant 0 : index
    %18 = vector.load %arg7[%c2_39, %c1_40, %c0_41] : memref<18x18x128xf32, #tpu.memory_space<vmem>>, vector<16x16x128xf32>
    %c2_42 = arith.constant 2 : index
    %c2_43 = arith.constant 2 : index
    %c0_44 = arith.constant 0 : index
    %19 = vector.load %arg7[%c2_42, %c2_43, %c0_44] : memref<18x18x128xf32, #tpu.memory_space<vmem>>, vector<16x16x128xf32>
    %20 = tpu.concatenate %11, %12, %13, %14, %15, %16, %17, %18, %19 in 2 : vector<16x16x128xf32>, vector<16x16x128xf32>, vector<16x16x128xf32>, vector<16x16x128xf32>, vector<16x16x128xf32>, vector<16x16x128xf32>, vector<16x16x128xf32>, vector<16x16x128xf32>, vector<16x16x128xf32> -> vector<16x16x1152xf32>
    %21 = vector.shape_cast %20 : vector<16x16x1152xf32> to vector<256x1152xf32>
    %c0_45 = arith.constant 0 : index
    %c0_46 = arith.constant 0 : index
    %22 = vector.load %arg2[%c0_45, %c0_46] : memref<1152x128xf32, #tpu.memory_space<vmem>>, vector<1152x128xf32>
    %cst_47 = arith.constant dense<0.000000e+00> : vector<256x128xf32>
    %23 = tpu.matmul %21, %22, %cst_47 {dimension_numbers = #tpu.dot_dimension_numbers<[1], [0], [0], [1], [0, 0, 1, 1], [], []>} : vector<256x1152xf32>, vector<1152x128xf32>, vector<256x128xf32> -> vector<256x128xf32>
    %c0_48 = arith.constant 0 : index
    %c0_49 = arith.constant 0 : index
    %24 = vector.load %arg3[%c0_48, %c0_49] : memref<1x128xf32, #tpu.memory_space<vmem>>, vector<1x128xf32>
    %25 = vector.broadcast %24 : vector<1x128xf32> to vector<256x128xf32>
    %26 = arith.addf %23, %25 : vector<256x128xf32>
    %cst_50 = arith.constant 0.000000e+00 : f32
    %27 = vector.broadcast %cst_50 : f32 to vector<256x128xf32>
    %28 = arith.maximumf %26, %27 : vector<256x128xf32>
    %29 = vector.shape_cast %28 : vector<256x128xf32> to vector<16x16x128xf32>
    %c1_51 = arith.constant 1 : index
    %c1_52 = arith.constant 1 : index
    %c0_53 = arith.constant 0 : index
    %30 = vector.load %arg7[%c1_51, %c1_52, %c0_53] : memref<18x18x128xf32, #tpu.memory_space<vmem>>, vector<16x16x128xf32>
    tpu.vector_store %arg7[%c1_51, %c1_52, %c0_53], %29 {strides = array<i32>} : memref<18x18x128xf32, #tpu.memory_space<vmem>>, vector<16x16x128xf32>,
    %c0_54 = arith.constant 0 : index
    %c0_55 = arith.constant 0 : index
    %c0_56 = arith.constant 0 : index
    %31 = vector.load %arg7[%c0_54, %c0_55, %c0_56] : memref<18x18x128xf32, #tpu.memory_space<vmem>>, vector<16x16x128xf32>
    %c0_57 = arith.constant 0 : index
    %c1_58 = arith.constant 1 : index
    %c0_59 = arith.constant 0 : index
    %32 = vector.load %arg7[%c0_57, %c1_58, %c0_59] : memref<18x18x128xf32, #tpu.memory_space<vmem>>, vector<16x16x128xf32>
    %c0_60 = arith.constant 0 : index
    %c2_61 = arith.constant 2 : index
    %c0_62 = arith.constant 0 : index
    %33 = vector.load %arg7[%c0_60, %c2_61, %c0_62] : memref<18x18x128xf32, #tpu.memory_space<vmem>>, vector<16x16x128xf32>
    %c1_63 = arith.constant 1 : index
    %c0_64 = arith.constant 0 : index
    %c0_65 = arith.constant 0 : index
    %34 = vector.load %arg7[%c1_63, %c0_64, %c0_65] : memref<18x18x128xf32, #tpu.memory_space<vmem>>, vector<16x16x128xf32>
    %c1_66 = arith.constant 1 : index
    %c1_67 = arith.constant 1 : index
    %c0_68 = arith.constant 0 : index
    %35 = vector.load %arg7[%c1_66, %c1_67, %c0_68] : memref<18x18x128xf32, #tpu.memory_space<vmem>>, vector<16x16x128xf32>
    %c1_69 = arith.constant 1 : index
    %c2_70 = arith.constant 2 : index
    %c0_71 = arith.constant 0 : index
    %36 = vector.load %arg7[%c1_69, %c2_70, %c0_71] : memref<18x18x128xf32, #tpu.memory_space<vmem>>, vector<16x16x128xf32>
    %c2_72 = arith.constant 2 : index
    %c0_73 = arith.constant 0 : index
    %c0_74 = arith.constant 0 : index
    %37 = vector.load %arg7[%c2_72, %c0_73, %c0_74] : memref<18x18x128xf32, #tpu.memory_space<vmem>>, vector<16x16x128xf32>
    %c2_75 = arith.constant 2 : index
    %c1_76 = arith.constant 1 : index
    %c0_77 = arith.constant 0 : index
    %38 = vector.load %arg7[%c2_75, %c1_76, %c0_77] : memref<18x18x128xf32, #tpu.memory_space<vmem>>, vector<16x16x128xf32>
    %c2_78 = arith.constant 2 : index
    %c2_79 = arith.constant 2 : index
    %c0_80 = arith.constant 0 : index
    %39 = vector.load %arg7[%c2_78, %c2_79, %c0_80] : memref<18x18x128xf32, #tpu.memory_space<vmem>>, vector<16x16x128xf32>
    %40 = tpu.concatenate %31, %32, %33, %34, %35, %36, %37, %38, %39 in 2 : vector<16x16x128xf32>, vector<16x16x128xf32>, vector<16x16x128xf32>, vector<16x16x128xf32>, vector<16x16x128xf32>, vector<16x16x128xf32>, vector<16x16x128xf32>, vector<16x16x128xf32>, vector<16x16x128xf32> -> vector<16x16x1152xf32>
    %41 = vector.shape_cast %40 : vector<16x16x1152xf32> to vector<256x1152xf32>
    %c0_81 = arith.constant 0 : index
    %c0_82 = arith.constant 0 : index
    %42 = vector.load %arg4[%c0_81, %c0_82] : memref<1152x128xf32, #tpu.memory_space<vmem>>, vector<1152x128xf32>
    %cst_83 = arith.constant dense<0.000000e+00> : vector<256x128xf32>
    %43 = tpu.matmul %41, %42, %cst_83 {dimension_numbers = #tpu.dot_dimension_numbers<[1], [0], [0], [1], [0, 0, 1, 1], [], []>} : vector<256x1152xf32>, vector<1152x128xf32>, vector<256x128xf32> -> vector<256x128xf32>
    %c0_84 = arith.constant 0 : index
    %c0_85 = arith.constant 0 : index
    %44 = vector.load %arg5[%c0_84, %c0_85] : memref<1x128xf32, #tpu.memory_space<vmem>>, vector<1x128xf32>
    %45 = vector.broadcast %44 : vector<1x128xf32> to vector<256x128xf32>
    %46 = arith.addf %43, %45 : vector<256x128xf32>
    %c0_86 = arith.constant 0 : index
    %c0_87 = arith.constant 0 : index
    %c0_88 = arith.constant 0 : index
    %c0_89 = arith.constant 0 : index
    %47 = vector.load %arg1[%c0_86, %c0_87, %c0_88, %c0_89] : memref<1x16x16x128xf32, #tpu.memory_space<vmem>>, vector<1x16x16x128xf32>
    %48 = vector.shape_cast %47 : vector<1x16x16x128xf32> to vector<16x16x128xf32>
    %49 = vector.shape_cast %48 : vector<16x16x128xf32> to vector<256x128xf32>
    %50 = arith.addf %46, %49 : vector<256x128xf32>
    %cst_90 = arith.constant 0.000000e+00 : f32
    %51 = vector.broadcast %cst_90 : f32 to vector<256x128xf32>
    %52 = arith.maximumf %50, %51 : vector<256x128xf32>
    %53 = vector.shape_cast %52 : vector<256x128xf32> to vector<16x16x128xf32>
    %c0_91 = arith.constant 0 : index
    %c0_92 = arith.constant 0 : index
    %c0_93 = arith.constant 0 : index
    %c0_94 = arith.constant 0 : index
    %54 = vector.load %arg6[%c0_91, %c0_92, %c0_93, %c0_94] : memref<1x16x16x128xf32, #tpu.memory_space<vmem>>, vector<1x16x16x128xf32>
    %55 = vector.shape_cast %54 : vector<1x16x16x128xf32> to vector<16x16x128xf32>
    %56 = vector.shape_cast %53 : vector<16x16x128xf32> to vector<1x16x16x128xf32>
    tpu.vector_store %arg6[%c0_91, %c0_92, %c0_93, %c0_94], %56 {strides = array<i32>} : memref<1x16x16x128xf32, #tpu.memory_space<vmem>>, vector<1x16x16x128xf32>,
    return
  }
  func.func @transform_0(%arg0: i32) -> (i32, i32, i32, i32) {
    %c0_i32 = arith.constant 0 : i32
    %c0_i32_0 = arith.constant 0 : i32
    %c0_i32_1 = arith.constant 0 : i32
    %c0_i32_2 = arith.constant 0 : i32
    return %arg0, %c0_i32, %c0_i32_0, %c0_i32_1 : i32, i32, i32, i32
  }
  func.func @transform_1(%arg0: i32) -> (i32, i32) {
    %c0_i32 = arith.constant 0 : i32
    %c0_i32_0 = arith.constant 0 : i32
    %c0_i32_1 = arith.constant 0 : i32
    return %c0_i32, %c0_i32_0 : i32, i32
  }
  func.func @transform_2(%arg0: i32) -> (i32, i32) {
    %c0_i32 = arith.constant 0 : i32
    %c0_i32_0 = arith.constant 0 : i32
    %c0_i32_1 = arith.constant 0 : i32
    return %c0_i32, %c0_i32_0 : i32, i32
  }
  func.func @transform_3(%arg0: i32) -> (i32, i32) {
    %c0_i32 = arith.constant 0 : i32
    %c0_i32_0 = arith.constant 0 : i32
    %c0_i32_1 = arith.constant 0 : i32
    return %c0_i32, %c0_i32_0 : i32, i32
  }
  func.func @transform_4(%arg0: i32) -> (i32, i32) {
    %c0_i32 = arith.constant 0 : i32
    %c0_i32_0 = arith.constant 0 : i32
    %c0_i32_1 = arith.constant 0 : i32
    return %c0_i32, %c0_i32_0 : i32, i32
  }
  func.func @transform_5(%arg0: i32) -> (i32, i32, i32, i32) {
    %c0_i32 = arith.constant 0 : i32
    %c0_i32_0 = arith.constant 0 : i32
    %c0_i32_1 = arith.constant 0 : i32
    %c0_i32_2 = arith.constant 0 : i32
    return %arg0, %c0_i32, %c0_i32_0, %c0_i32_1 : i32, i32, i32, i32
  }
}

</mosaic_0001>

<llo_original>
// kernel: tpu_custom_call.1
$region0: #{tpu_custom_call.1}
  #allocation0 [shape = 'u32[]', space=smem, size = 0x4, offset = 0x4, fixed_abs, tag = 'smem constant byte address 0x4 - core index']
  #allocation1 [shape = 'u32[72,128]{1,0:T(1,128)}', space=vmem, size = 0x9000, scoped, tag = 'internal scratch']
  #allocation2 [shape = 'f32[18,18,128]{2,1,0:T(8,128)}', space=vmem, size = 0x36000, scoped, tag = 'scratch operand']
  %s0 = inlined_call_operand.hbm [shape: f32[2,16,16,128], index: 0, kind: input, shape index: {}]
  %s1 = inlined_call_operand.hbm [shape: f32[1152,128], index: 1, kind: input, shape index: {}]
  %s2 = inlined_call_operand.vmem [shape: f32[1,128], index: 2, kind: input, shape index: {}]
  %s3 = inlined_call_operand.hbm [shape: f32[1152,128], index: 3, kind: input, shape index: {}]
  %s4 = inlined_call_operand.vmem [shape: f32[1,128], index: 4, kind: input, shape index: {}]
  %s5 = inlined_call_operand.hbm [shape: f32[2,16,16,128], index: 5, kind: output, shape index: {}]
  %s6 = sld [smem:[#allocation0]]
  $region65: #{tpu_custom_call.1} parent=0
    _
  %s8 = ssub.s32 1, %s6
  %s9 = scalar_select 0, %s8, %s6
  $region1: #{tpu_custom_call.1} parent=0
    #allocation3 [shape = 'u8[262144]{0}', space=vmem, size = 0x40000, scoped, tag = 'input window, operand 0']
    #allocation4 [shape = 's32[2]{0}', space=sflag, size = 0x8, scoped, tag = 'scoped memory for tpu_custom_call.1']
    #allocation5 [shape = 's32[2]{0}', space=sflag, size = 0x8, scoped, tag = 'scoped memory for tpu_custom_call.1']
    #allocation6 [shape = 'u8[589824]{0}', space=vmem, size = 0x90000, scoped, tag = 'input window, operand 1, single buffered']
    #allocation7 [shape = 's32[1]{0}', space=sflag, size = 0x4, scoped, tag = 'scoped memory for tpu_custom_call.1']
    #allocation8 [shape = 'u8[589824]{0}', space=vmem, size = 0x90000, scoped, tag = 'input window, operand 3, single buffered']
    #allocation9 [shape = 'u8[262144]{0}', space=vmem, size = 0x40000, scoped, tag = 'output window, operand 0']
    %10 = vsyncpa [#allocation4], 0
    %s11 = scalar_lea.sflag [#allocation4], 1
    %12 = vsyncpa %s11, 0
    %13 = vsyncpa [#allocation7], 0
    %14 = vsyncpa [#allocation5], 0
    %s15 = scalar_lea.sflag [#allocation5], 1
    %16 = vsyncpa %s15, 0
    loop: start=0, step=1, limit=4
    $region2: #{tpu_custom_call.1} parent=1 // loop_pre_header
      _
    $region3: #{tpu_custom_call.1} parent=1 // loop_header
      %s18 = sphi 0, %s22
      %p19 = scmp.ge.s32.totalorder %s18, 4
      %s28 = sphi 0, %s30
      %s31 = sphi 0, %s28
      %s32 = sphi 0, %s31
      %s48 = sphi 0, %s32
      %s52 = sphi 0, %s52
      %s54 = sphi 0, %s52
      %s55 = sphi 0, %s54
      %s69 = sphi 0, %s55
      %s73 = sphi 0, %s73
      %s75 = sphi 0, %s73
      %s76 = sphi 0, %s75
      %s90 = sphi 0, %s76
      %s94 = sphi 0, %s94
      %s96 = sphi 0, %s94
      %s97 = sphi 0, %s96
      %s111 = sphi 0, %s97
      %s115 = sphi 0, %s115
      %s117 = sphi 0, %s115
      %s118 = sphi 0, %s117
      %s132 = sphi 0, %s118
      %s138 = sphi 0, %s140
      %s141 = sphi 0, %s138
      %s142 = sphi 0, %s141
      %s158 = sphi 0, %s142
    $region4: #{tpu_custom_call.1} parent=1 // loop_header_branch
      %21 = sbr.rel (%p19) target = $region8
    $region5: #{tpu_custom_call.1} parent=1 // loop_body
      %s23 = ssub.s32 %s18, 1
      %s24 = ssub.s32 %s18, 2
      %s25 = sadd.s32 %s18, 1
      %s26 = ssub.s32 %s18, %s25
      %p27 = scmp.eq.s32.totalorder %s26, 0
      %s29 = sadd.s32 %s28, 1
      %s30 = scalar_select %p27, %s28, %s29
      %p33 = pneg %p27
      %p34 = scmp.eq.s32.totalorder %s18, 1
      %p35 = por %p33, %p34
      %p36 = scmp.ne.s32.totalorder %s28, %s31
      %p37 = scmp.eq.s32.totalorder %s18, 0
      %p38 = por %p36, %p37
      %p39 = scmp.ne.s32.totalorder %s28, %s31
      %p40 = scmp.eq.s32.totalorder %s23, 1
      %p41 = por %p39, %p40
      %p42 = scmp.ne.s32.totalorder %s31, %s32
      %p43 = scmp.eq.s32.totalorder %s23, 0
      %p44 = por %p42, %p43
      %p45 = scmp.ne.s32.totalorder %s31, %s32
      %p46 = scmp.eq.s32.totalorder %s24, 1
      %p47 = por %p45, %p46
      %p49 = scmp.ne.s32.totalorder %s32, %s48
      %p50 = scmp.eq.s32.totalorder %s24, 0
      %p51 = por %p49, %p50
      %s53 = sadd.s32 %s52, 1
      %p56 = scmp.eq.s32.totalorder %s18, 1
      %p57 = scmp.ne.s32.totalorder %s52, %s54
      %p58 = scmp.eq.s32.totalorder %s18, 0
      %p59 = por %p57, %p58
      %p60 = scmp.ne.s32.totalorder %s52, %s54
      %p61 = scmp.eq.s32.totalorder %s23, 1
      %p62 = por %p60, %p61
      %p63 = scmp.ne.s32.totalorder %s54, %s55
      %p64 = scmp.eq.s32.totalorder %s23, 0
      %p65 = por %p63, %p64
      %p66 = scmp.ne.s32.totalorder %s54, %s55
      %p67 = scmp.eq.s32.totalorder %s24, 1
      %p68 = por %p66, %p67
      %p70 = scmp.ne.s32.totalorder %s55, %s69
      %p71 = scmp.eq.s32.totalorder %s24, 0
      %p72 = por %p70, %p71
      %s74 = sadd.s32 %s73, 1
      %p77 = scmp.eq.s32.totalorder %s18, 1
      %p78 = scmp.ne.s32.totalorder %s73, %s75
      %p79 = scmp.eq.s32.totalorder %s18, 0
      %p80 = por %p78, %p79
      %p81 = scmp.ne.s32.totalorder %s73, %s75
      %p82 = scmp.eq.s32.totalorder %s23, 1
      %p83 = por %p81, %p82
      %p84 = scmp.ne.s32.totalorder %s75, %s76
      %p85 = scmp.eq.s32.totalorder %s23, 0
      %p86 = por %p84, %p85
      %p87 = scmp.ne.s32.totalorder %s75, %s76
      %p88 = scmp.eq.s32.totalorder %s24, 1
      %p89 = por %p87, %p88
      %p91 = scmp.ne.s32.totalorder %s76, %s90
      %p92 = scmp.eq.s32.totalorder %s24, 0
      %p93 = por %p91, %p92
      %s95 = sadd.s32 %s94, 1
      %p98 = scmp.eq.s32.totalorder %s18, 1
      %p99 = scmp.ne.s32.totalorder %s94, %s96
      %p100 = scmp.eq.s32.totalorder %s18, 0
      %p101 = por %p99, %p100
      %p102 = scmp.ne.s32.totalorder %s94, %s96
      %p103 = scmp.eq.s32.totalorder %s23, 1
      %p104 = por %p102, %p103
      %p105 = scmp.ne.s32.totalorder %s96, %s97
      %p106 = scmp.eq.s32.totalorder %s23, 0
      %p107 = por %p105, %p106
      %p108 = scmp.ne.s32.totalorder %s96, %s97
      %p109 = scmp.eq.s32.totalorder %s24, 1
      %p110 = por %p108, %p109
      %p112 = scmp.ne.s32.totalorder %s97, %s111
      %p113 = scmp.eq.s32.totalorder %s24, 0
      %p114 = por %p112, %p113
      %s116 = sadd.s32 %s115, 1
      %p119 = scmp.eq.s32.totalorder %s18, 1
      %p120 = scmp.ne.s32.totalorder %s115, %s117
      %p121 = scmp.eq.s32.totalorder %s18, 0
      %p122 = por %p120, %p121
      %p123 = scmp.ne.s32.totalorder %s115, %s117
      %p124 = scmp.eq.s32.totalorder %s23, 1
      %p125 = por %p123, %p124
      %p126 = scmp.ne.s32.totalorder %s117, %s118
      %p127 = scmp.eq.s32.totalorder %s23, 0
      %p128 = por %p126, %p127
      %p129 = scmp.ne.s32.totalorder %s117, %s118
      %p130 = scmp.eq.s32.totalorder %s24, 1
      %p131 = por %p129, %p130
      %p133 = scmp.ne.s32.totalorder %s118, %s132
      %p134 = scmp.eq.s32.totalorder %s24, 0
      %p135 = por %p133, %p134
      %s136 = ssub.s32 %s18, %s25
      %p137 = scmp.eq.s32.totalorder %s136, 0
      %s139 = sadd.s32 %s138, 1
      %s140 = scalar_select %p137, %s138, %s139
      %p143 = pneg %p137
      %p144 = scmp.eq.s32.totalorder %s18, 1
      %p145 = por %p143, %p144
      %p146 = scmp.ne.s32.totalorder %s138, %s141
      %p147 = scmp.eq.s32.totalorder %s18, 0
      %p148 = por %p146, %p147
      %p149 = scmp.ne.s32.totalorder %s138, %s141
      %p150 = scmp.eq.s32.totalorder %s23, 1
      %p151 = por %p149, %p150
      %p152 = scmp.ne.s32.totalorder %s141, %s142
      %p153 = scmp.eq.s32.totalorder %s23, 0
      %p154 = por %p152, %p153
      %p155 = scmp.ne.s32.totalorder %s141, %s142
      %p156 = scmp.eq.s32.totalorder %s24, 1
      %p157 = por %p155, %p156
      %p159 = scmp.ne.s32.totalorder %s142, %s158
      %p160 = scmp.eq.s32.totalorder %s24, 0
      %p161 = por %p159, %p160
      %p162 = scmp.le.s32.totalorder 1, %s18
      %p163 = scmp.lt.s32.totalorder %s18, 3
      %p164 = pnand %p162, %p163
      %p165 = pneg %p164
      // Predicated region
      $region9: #{tpu_custom_call.1} parent=5 // pred_check
        _
      $region10: #{tpu_custom_call.1} parent=5 // pred_check_branch
        %167 = sbr.rel (%p164) target = $region12
      $region11: #{tpu_custom_call.1} parent=5 // pred_region
        %s168 = ssub.s32 %s18, 1
        // Predicated region
        $region13: #{tpu_custom_call.1} parent=11 // pred_check
          %p169 = pneg %p65
        $region14: #{tpu_custom_call.1} parent=11 // pred_check_branch
          %171 = sbr.rel (%p169) target = $region16
        $region15: #{tpu_custom_call.1} parent=11 // pred_region
          %173 = vsyncadd [#allocation7], 0
          %s174 = sshll.u32 %s1, 4
          %s175 = int_to_ptr.hbm [resolvable:$true] %s174
          %s176 = sshll.u32 [#allocation6], 4
          %s177 = int_to_ptr.vmem [resolvable:$true] %s176
          %182 = dma.hbm_to_vmem [thread:$0]  %s175, 18432, %s177, [#allocation7], 128, 128, 8
        $region16: #{tpu_custom_call.1} parent=11 // pred_fallthru
          _
        // Predicated region
        $region17: #{tpu_custom_call.1} parent=11 // pred_check
          %p183 = pneg %p86
        $region18: #{tpu_custom_call.1} parent=11 // pred_check_branch
          %185 = sbr.rel (%p183) target = $region20
        $region19: #{tpu_custom_call.1} parent=11 // pred_region
          _
        $region20: #{tpu_custom_call.1} parent=11 // pred_fallthru
          _
        // Predicated region
        $region21: #{tpu_custom_call.1} parent=11 // pred_check
          %p186 = pneg %p107
        $region22: #{tpu_custom_call.1} parent=11 // pred_check_branch
          %188 = sbr.rel (%p186) target = $region24
        $region23: #{tpu_custom_call.1} parent=11 // pred_region
          %190 = vsyncadd [#allocation7], 0
          %s191 = sshll.u32 %s3, 4
          %s192 = int_to_ptr.hbm [resolvable:$true] %s191
          %s193 = sshll.u32 [#allocation8], 4
          %s194 = int_to_ptr.vmem [resolvable:$true] %s193
          %199 = dma.hbm_to_vmem [thread:$0]  %s192, 18432, %s194, [#allocation7], 128, 128, 8
        $region24: #{tpu_custom_call.1} parent=11 // pred_fallthru
          _
        // Predicated region
        $region25: #{tpu_custom_call.1} parent=11 // pred_check
          %p200 = pneg %p128
        $region26: #{tpu_custom_call.1} parent=11 // pred_check_branch
          %202 = sbr.rel (%p200) target = $region28
        $region27: #{tpu_custom_call.1} parent=11 // pred_region
          _
        $region28: #{tpu_custom_call.1} parent=11 // pred_fallthru
          _
      $region12: #{tpu_custom_call.1} parent=5 // pred_fallthru
        _
      %p203 = scmp.lt.s32.totalorder %s18, 2
      // Predicated region
      $region29: #{tpu_custom_call.1} parent=5 // pred_check
        %p204 = pneg %p203
      $region30: #{tpu_custom_call.1} parent=5 // pred_check_branch
        %206 = sbr.rel (%p204) target = $region32
      $region31: #{tpu_custom_call.1} parent=5 // pred_region
        // Predicated region
        $region33: #{tpu_custom_call.1} parent=31 // pred_check
          %p207 = pneg %p38
        $region34: #{tpu_custom_call.1} parent=31 // pred_check_branch
          %209 = sbr.rel (%p207) target = $region36
        $region35: #{tpu_custom_call.1} parent=31 // pred_region
          %s210 = sand.u32 %s28, 1
          %s211 = scalar_lea.sflag [#allocation4], %s210
          %s212 = sand.u32 %s28, 1
          %s213 = smul.addr %s212, 256
          %s214 = scalar_lea.vmem [#allocation3], %s213
          %216 = vsyncadd %s211, 0
          %s217 = smul.addr %s18, 32
          %s218 = smul.addr %s217, 8
          %s219 = scalar_lea.hbm %s0, %s218
          %s220 = sshll.u32 %s219, 4
          %s221 = int_to_ptr.hbm [resolvable:$true] %s220
          %s222 = sshll.u32 %s214, 4
          %s223 = int_to_ptr.vmem [resolvable:$true] %s222
          %228 = dma.hbm_to_vmem [thread:$0]  %s221, 4096, %s223, %s211, 128, 128, 8
        $region36: #{tpu_custom_call.1} parent=31 // pred_fallthru
          _
      $region32: #{tpu_custom_call.1} parent=5 // pred_fallthru
        _
      %p229 = scmp.le.s32.totalorder 1, %s18
      %p230 = scmp.lt.s32.totalorder %s18, 3
      %p231 = pnand %p229, %p230
      %p232 = pneg %p231
      // Predicated region
      $region37: #{tpu_custom_call.1} parent=5 // pred_check
        _
      $region38: #{tpu_custom_call.1} parent=5 // pred_check_branch
        %234 = sbr.rel (%p231) target = $region40
      $region39: #{tpu_custom_call.1} parent=5 // pred_region
        %s235 = ssub.s32 %s18, 1
        %s236 = sand.u32 %s31, 1
        %s237 = scalar_lea.sflag [#allocation4], %s236
        %s238 = sand.u32 %s31, 1
        %s239 = smul.addr %s238, 256
        %s240 = scalar_lea.vmem [#allocation3], %s239
        // Predicated region
        $region41: #{tpu_custom_call.1} parent=39 // pred_check
          %p241 = pneg %p44
        $region42: #{tpu_custom_call.1} parent=39 // pred_check_branch
          %243 = sbr.rel (%p241) target = $region44
        $region43: #{tpu_custom_call.1} parent=39 // pred_region
          %245 = dma.done %s237, 4096
        $region44: #{tpu_custom_call.1} parent=39 // pred_fallthru
          _
        // Predicated region
        $region45: #{tpu_custom_call.1} parent=39 // pred_check
          %p246 = pneg %p65
        $region46: #{tpu_custom_call.1} parent=39 // pred_check_branch
          %248 = sbr.rel (%p246) target = $region48
        $region47: #{tpu_custom_call.1} parent=39 // pred_region
          %250 = dma.done [#allocation7], 18432
        $region48: #{tpu_custom_call.1} parent=39 // pred_fallthru
          _
        // Predicated region
        $region49: #{tpu_custom_call.1} parent=39 // pred_check
          %p251 = pneg %p107
        $region50: #{tpu_custom_call.1} parent=39 // pred_check_branch
          %253 = sbr.rel (%p251) target = $region52
        $region51: #{tpu_custom_call.1} parent=39 // pred_region
          %255 = dma.done [#allocation7], 18432
        $region52: #{tpu_custom_call.1} parent=39 // pred_fallthru
          _
        %s256 = sand.u32 %s31, 1
        %s257 = scalar_lea.sflag [#allocation4], %s256
        %s258 = sand.u32 %s31, 1
        %s259 = smul.addr %s258, 256
        %s260 = scalar_lea.vmem [#allocation3], %s259
        %p261 = pneg %p44
        %p262 = pneg %p41
        %p263 = pneg %p65
        %p264 = pneg %p62
        %p265 = pneg %p86
        %p266 = pneg %p83
        %p267 = pneg %p107
        %p268 = pneg %p104
        %p269 = pneg %p128
        %p270 = pneg %p125
        %p271 = pneg %p154
        %p272 = pneg %p151
        %s273 = sand.u32 %s141, 1
        %s274 = scalar_lea.sflag [#allocation5], %s273
        %s275 = sand.u32 %s141, 1
        %s276 = smul.addr %s275, 256
        %s277 = scalar_lea.vmem [#allocation9], %s276
        %278 = vst [vmem:[#allocation2] sm:$0xff] 0.0
        %279 = vst [vmem:[#allocation2 + $0x8] sm:$0xff] 0.0
        %280 = vst [vmem:[#allocation2 + $0x10] sm:$0x3] 0.0
        %s281 = scalar_lea.vmem [#allocation2], 408
        %282 = vst [vmem:[%s281] sm:$0xff] 0.0
        %283 = vst [vmem:[%s281 + $0x8] sm:$0xff] 0.0
        %284 = vst [vmem:[%s281 + $0x10] sm:$0x3] 0.0
        %s285 = scalar_lea.vmem [#allocation2], 24
        %286 = vst [vmem:[%s285] sm:$0x1] 0.0
        %287 = vst [vmem:[%s285 + $0x18] sm:$0x1] 0.0
        %288 = vst [vmem:[%s285 + $0x30] sm:$0x1] 0.0
        %289 = vst [vmem:[%s285 + $0x48] sm:$0x1] 0.0
        %290 = vst [vmem:[%s285 + $0x60] sm:$0x1] 0.0
        %291 = vst [vmem:[%s285 + $0x78] sm:$0x1] 0.0
        %292 = vst [vmem:[%s285 + $0x90] sm:$0x1] 0.0
        %293 = vst [vmem:[%s285 + $0xa8] sm:$0x1] 0.0
        %294 = vst [vmem:[%s285 + $0xc0] sm:$0x1] 0.0
        %295 = vst [vmem:[%s285 + $0xd8] sm:$0x1] 0.0
        %296 = vst [vmem:[%s285 + $0xf0] sm:$0x1] 0.0
        %297 = vst [vmem:[%s285 + $0x108] sm:$0x1] 0.0
        %298 = vst [vmem:[%s285 + $0x120] sm:$0x1] 0.0
        %299 = vst [vmem:[%s285 + $0x138] sm:$0x1] 0.0
        %300 = vst [vmem:[%s285 + $0x150] sm:$0x1] 0.0
        %301 = vst [vmem:[%s285 + $0x168] sm:$0x1] 0.0
        %302 = vst [vmem:[%s285 + $0x11] sm:$0x1] 0.0
        %303 = vst [vmem:[%s285 + $0x29] sm:$0x1] 0.0
        %304 = vst [vmem:[%s285 + $0x41] sm:$0x1] 0.0
        %305 = vst [vmem:[%s285 + $0x59] sm:$0x1] 0.0
        %306 = vst [vmem:[%s285 + $0x71] sm:$0x1] 0.0
        %307 = vst [vmem:[%s285 + $0x89] sm:$0x1] 0.0
        %308 = vst [vmem:[%s285 + $0xa1] sm:$0x1] 0.0
        %309 = vst [vmem:[%s285 + $0xb9] sm:$0x1] 0.0
        %310 = vst [vmem:[%s285 + $0xd1] sm:$0x1] 0.0
        %311 = vst [vmem:[%s285 + $0xe9] sm:$0x1] 0.0
        %312 = vst [vmem:[%s285 + $0x101] sm:$0x1] 0.0
        %313 = vst [vmem:[%s285 + $0x119] sm:$0x1] 0.0
        %314 = vst [vmem:[%s285 + $0x131] sm:$0x1] 0.0
        %315 = vst [vmem:[%s285 + $0x149] sm:$0x1] 0.0
        %316 = vst [vmem:[%s285 + $0x161] sm:$0x1] 0.0
        %317 = vst [vmem:[%s285 + $0x179] sm:$0x1] 0.0
        %v318 = vld [vmem:[%s240] sm:$0xff]
        %v319 = vld [vmem:[%s240 + $0x8] sm:$0xff]
        %v320 = vld [vmem:[%s240 + $0x10] sm:$0xff]
        %v321 = vld [vmem:[%s240 + $0x18] sm:$0xff]
        %v322 = vld [vmem:[%s240 + $0x20] sm:$0xff]
        %v323 = vld [vmem:[%s240 + $0x28] sm:$0xff]
        %v324 = vld [vmem:[%s240 + $0x30] sm:$0xff]
        %v325 = vld [vmem:[%s240 + $0x38] sm:$0xff]
        %v326 = vld [vmem:[%s240 + $0x40] sm:$0xff]
        %v327 = vld [vmem:[%s240 + $0x48] sm:$0xff]
        %v328 = vld [vmem:[%s240 + $0x50] sm:$0xff]
        %v329 = vld [vmem:[%s240 + $0x58] sm:$0xff]
        %v330 = vld [vmem:[%s240 + $0x60] sm:$0xff]
        %v331 = vld [vmem:[%s240 + $0x68] sm:$0xff]
        %v332 = vld [vmem:[%s240 + $0x70] sm:$0xff]
        %v333 = vld [vmem:[%s240 + $0x78] sm:$0xff]
        %v334 = vld [vmem:[%s240 + $0x80] sm:$0xff]
        %v335 = vld [vmem:[%s240 + $0x88] sm:$0xff]
        %v336 = vld [vmem:[%s240 + $0x90] sm:$0xff]
        %v337 = vld [vmem:[%s240 + $0x98] sm:$0xff]
        %v338 = vld [vmem:[%s240 + $0xa0] sm:$0xff]
        %v339 = vld [vmem:[%s240 + $0xa8] sm:$0xff]
        %v340 = vld [vmem:[%s240 + $0xb0] sm:$0xff]
        %v341 = vld [vmem:[%s240 + $0xb8] sm:$0xff]
        %v342 = vld [vmem:[%s240 + $0xc0] sm:$0xff]
        %v343 = vld [vmem:[%s240 + $0xc8] sm:$0xff]
        %v344 = vld [vmem:[%s240 + $0xd0] sm:$0xff]
        %v345 = vld [vmem:[%s240 + $0xd8] sm:$0xff]
        %v346 = vld [vmem:[%s240 + $0xe0] sm:$0xff]
        %v347 = vld [vmem:[%s240 + $0xe8] sm:$0xff]
        %v348 = vld [vmem:[%s240 + $0xf0] sm:$0xff]
        %v349 = vld [vmem:[%s240 + $0xf8] sm:$0xff]
        %350 = vst [vmem:[%s285 + $0x1] sm:$0xff] %v318
        %351 = vst [vmem:[%s285 + $0x9] sm:$0xff] %v319
        %352 = vst [vmem:[%s285 + $0x19] sm:$0xff] %v320
        %353 = vst [vmem:[%s285 + $0x21] sm:$0xff] %v321
        %354 = vst [vmem:[%s285 + $0x31] sm:$0xff] %v322
        %355 = vst [vmem:[%s285 + $0x39] sm:$0xff] %v323
        %356 = vst [vmem:[%s285 + $0x49] sm:$0xff] %v324
        %357 = vst [vmem:[%s285 + $0x51] sm:$0xff] %v325
        %358 = vst [vmem:[%s285 + $0x61] sm:$0xff] %v326
        %359 = vst [vmem:[%s285 + $0x69] sm:$0xff] %v327
        %360 = vst [vmem:[%s285 + $0x79] sm:$0xff] %v328
        %361 = vst [vmem:[%s285 + $0x81] sm:$0xff] %v329
        %362 = vst [vmem:[%s285 + $0x91] sm:$0xff] %v330
        %363 = vst [vmem:[%s285 + $0x99] sm:$0xff] %v331
        %364 = vst [vmem:[%s285 + $0xa9] sm:$0xff] %v332
        %365 = vst [vmem:[%s285 + $0xb1] sm:$0xff] %v333
        %366 = vst [vmem:[%s285 + $0xc1] sm:$0xff] %v334
        %367 = vst [vmem:[%s285 + $0xc9] sm:$0xff] %v335
        %368 = vst [vmem:[%s285 + $0xd9] sm:$0xff] %v336
        %369 = vst [vmem:[%s285 + $0xe1] sm:$0xff] %v337
        %370 = vst [vmem:[%s285 + $0xf1] sm:$0xff] %v338
        %371 = vst [vmem:[%s285 + $0xf9] sm:$0xff] %v339
        %372 = vst [vmem:[%s285 + $0x109] sm:$0xff] %v340
        %373 = vst [vmem:[%s285 + $0x111] sm:$0xff] %v341
        %374 = vst [vmem:[%s285 + $0x121] sm:$0xff] %v342
        %375 = vst [vmem:[%s285 + $0x129] sm:$0xff] %v343
        %376 = vst [vmem:[%s285 + $0x139] sm:$0xff] %v344
        %377 = vst [vmem:[%s285 + $0x141] sm:$0xff] %v345
        %378 = vst [vmem:[%s285 + $0x151] sm:$0xff] %v346
        %379 = vst [vmem:[%s285 + $0x159] sm:$0xff] %v347
        %380 = vst [vmem:[%s285 + $0x169] sm:$0xff] %v348
        %381 = vst [vmem:[%s285 + $0x171] sm:$0xff] %v349
        %v382 = vld [vmem:[#allocation2] sm:$0xff]
        %v383 = vld [vmem:[#allocation2 + $0x8] sm:$0xff]
        %v384 = vld [vmem:[#allocation2 + $0x18] sm:$0xff]
        %v385 = vld [vmem:[#allocation2 + $0x20] sm:$0xff]
        %v386 = vld [vmem:[#allocation2 + $0x30] sm:$0xff]
        %v387 = vld [vmem:[#allocation2 + $0x38] sm:$0xff]
        %v388 = vld [vmem:[#allocation2 + $0x48] sm:$0xff]
        %v389 = vld [vmem:[#allocation2 + $0x50] sm:$0xff]
        %v390 = vld [vmem:[#allocation2 + $0x60] sm:$0xff]
        %v391 = vld [vmem:[#allocation2 + $0x68] sm:$0xff]
        %v392 = vld [vmem:[#allocation2 + $0x78] sm:$0xff]
        %v393 = vld [vmem:[#allocation2 + $0x80] sm:$0xff]
        %v394 = vld [vmem:[#allocation2 + $0x90] sm:$0xff]
        %v395 = vld [vmem:[#allocation2 + $0x98] sm:$0xff]
        %v396 = vld [vmem:[#allocation2 + $0xa8] sm:$0xff]
        %v397 = vld [vmem:[#allocation2 + $0xb0] sm:$0xff]
        %v398 = vld [vmem:[#allocation2 + $0xc0] sm:$0xff]
        %v399 = vld [vmem:[#allocation2 + $0xc8] sm:$0xff]
        %v400 = vld [vmem:[#allocation2 + $0xd8] sm:$0xff]
        %v401 = vld [vmem:[#allocation2 + $0xe0] sm:$0xff]
        %v402 = vld [vmem:[#allocation2 + $0xf0] sm:$0xff]
        %v403 = vld [vmem:[#allocation2 + $0xf8] sm:$0xff]
        %v404 = vld [vmem:[#allocation2 + $0x108] sm:$0xff]
        %v405 = vld [vmem:[#allocation2 + $0x110] sm:$0xff]
        %v406 = vld [vmem:[#allocation2 + $0x120] sm:$0xff]
        %v407 = vld [vmem:[#allocation2 + $0x128] sm:$0xff]
        %v408 = vld [vmem:[#allocation2 + $0x138] sm:$0xff]
        %v409 = vld [vmem:[#allocation2 + $0x140] sm:$0xff]
        %v410 = vld [vmem:[#allocation2 + $0x150] sm:$0xff]
        %v411 = vld [vmem:[#allocation2 + $0x158] sm:$0xff]
        %v412 = vld [vmem:[#allocation2 + $0x168] sm:$0xff]
        %v413 = vld [vmem:[#allocation2 + $0x170] sm:$0xff]
        %v414 = vld [vmem:[#allocation2 + $0x1] sm:$0xff]
        %v415 = vld [vmem:[#allocation2 + $0x9] sm:$0xff]
        %v416 = vld [vmem:[#allocation2 + $0x19] sm:$0xff]
        %v417 = vld [vmem:[#allocation2 + $0x21] sm:$0xff]
        %v418 = vld [vmem:[#allocation2 + $0x31] sm:$0xff]
        %v419 = vld [vmem:[#allocation2 + $0x39] sm:$0xff]
        %v420 = vld [vmem:[#allocation2 + $0x49] sm:$0xff]
        %v421 = vld [vmem:[#allocation2 + $0x51] sm:$0xff]
        %v422 = vld [vmem:[#allocation2 + $0x61] sm:$0xff]
        %v423 = vld [vmem:[#allocation2 + $0x69] sm:$0xff]
        %v424 = vld [vmem:[#allocation2 + $0x79] sm:$0xff]
        %v425 = vld [vmem:[#allocation2 + $0x81] sm:$0xff]
        %v426 = vld [vmem:[#allocation2 + $0x91] sm:$0xff]
        %v427 = vld [vmem:[#allocation2 + $0x99] sm:$0xff]
        %v428 = vld [vmem:[#allocation2 + $0xa9] sm:$0xff]
        %v429 = vld [vmem:[#allocation2 + $0xb1] sm:$0xff]
        %v430 = vld [vmem:[#allocation2 + $0xc1] sm:$0xff]
        %v431 = vld [vmem:[#allocation2 + $0xc9] sm:$0xff]
        %v432 = vld [vmem:[#allocation2 + $0xd9] sm:$0xff]
        %v433 = vld [vmem:[#allocation2 + $0xe1] sm:$0xff]
        %v434 = vld [vmem:[#allocation2 + $0xf1] sm:$0xff]
        %v435 = vld [vmem:[#allocation2 + $0xf9] sm:$0xff]
        %v436 = vld [vmem:[#allocation2 + $0x109] sm:$0xff]
        %v437 = vld [vmem:[#allocation2 + $0x111] sm:$0xff]
        %v438 = vld [vmem:[#allocation2 + $0x121] sm:$0xff]
        %v439 = vld [vmem:[#allocation2 + $0x129] sm:$0xff]
        %v440 = vld [vmem:[#allocation2 + $0x139] sm:$0xff]
        %v441 = vld [vmem:[#allocation2 + $0x141] sm:$0xff]
        %v442 = vld [vmem:[#allocation2 + $0x151] sm:$0xff]
        %v443 = vld [vmem:[#allocation2 + $0x159] sm:$0xff]
        %v444 = vld [vmem:[#allocation2 + $0x169] sm:$0xff]
        %v445 = vld [vmem:[#allocation2 + $0x171] sm:$0xff]
        %v446 = vld [vmem:[#allocation2 + $0x2] sm:$0xff]
        %v447 = vld [vmem:[#allocation2 + $0xa] sm:$0xff]
        %v448 = vld [vmem:[#allocation2 + $0x1a] sm:$0xff]
        %v449 = vld [vmem:[#allocation2 + $0x22] sm:$0xff]
        %v450 = vld [vmem:[#allocation2 + $0x32] sm:$0xff]
        %v451 = vld [vmem:[#allocation2 + $0x3a] sm:$0xff]
        %v452 = vld [vmem:[#allocation2 + $0x4a] sm:$0xff]
        %v453 = vld [vmem:[#allocation2 + $0x52] sm:$0xff]
        %v454 = vld [vmem:[#allocation2 + $0x62] sm:$0xff]
        %v455 = vld [vmem:[#allocation2 + $0x6a] sm:$0xff]
        %v456 = vld [vmem:[#allocation2 + $0x7a] sm:$0xff]
        %v457 = vld [vmem:[#allocation2 + $0x82] sm:$0xff]
        %v458 = vld [vmem:[#allocation2 + $0x92] sm:$0xff]
        %v459 = vld [vmem:[#allocation2 + $0x9a] sm:$0xff]
        %v460 = vld [vmem:[#allocation2 + $0xaa] sm:$0xff]
        %v461 = vld [vmem:[#allocation2 + $0xb2] sm:$0xff]
        %v462 = vld [vmem:[#allocation2 + $0xc2] sm:$0xff]
        %v463 = vld [vmem:[#allocation2 + $0xca] sm:$0xff]
        %v464 = vld [vmem:[#allocation2 + $0xda] sm:$0xff]
        %v465 = vld [vmem:[#allocation2 + $0xe2] sm:$0xff]
        %v466 = vld [vmem:[#allocation2 + $0xf2] sm:$0xff]
        %v467 = vld [vmem:[#allocation2 + $0xfa] sm:$0xff]
        %v468 = vld [vmem:[#allocation2 + $0x10a] sm:$0xff]
        %v469 = vld [vmem:[#allocation2 + $0x112] sm:$0xff]
        %v470 = vld [vmem:[#allocation2 + $0x122] sm:$0xff]
        %v471 = vld [vmem:[#allocation2 + $0x12a] sm:$0xff]
        %v472 = vld [vmem:[#allocation2 + $0x13a] sm:$0xff]
        %v473 = vld [vmem:[#allocation2 + $0x142] sm:$0xff]
        %v474 = vld [vmem:[#allocation2 + $0x152] sm:$0xff]
        %v475 = vld [vmem:[#allocation2 + $0x15a] sm:$0xff]
        %v476 = vld [vmem:[#allocation2 + $0x16a] sm:$0xff]
        %v477 = vld [vmem:[#allocation2 + $0x172] sm:$0xff]
        %v478 = vld [vmem:[%s285] sm:$0xff]
        %v479 = vld [vmem:[%s285 + $0x8] sm:$0xff]
        %v480 = vld [vmem:[%s285 + $0x18] sm:$0xff]
        %v481 = vld [vmem:[%s285 + $0x20] sm:$0xff]
        %v482 = vld [vmem:[%s285 + $0x30] sm:$0xff]
        %v483 = vld [vmem:[%s285 + $0x38] sm:$0xff]
        %v484 = vld [vmem:[%s285 + $0x48] sm:$0xff]
        %v485 = vld [vmem:[%s285 + $0x50] sm:$0xff]
        %v486 = vld [vmem:[%s285 + $0x60] sm:$0xff]
        %v487 = vld [vmem:[%s285 + $0x68] sm:$0xff]
        %v488 = vld [vmem:[%s285 + $0x78] sm:$0xff]
        %v489 = vld [vmem:[%s285 + $0x80] sm:$0xff]
        %v490 = vld [vmem:[%s285 + $0x90] sm:$0xff]
        %v491 = vld [vmem:[%s285 + $0x98] sm:$0xff]
        %v492 = vld [vmem:[%s285 + $0xa8] sm:$0xff]
        %v493 = vld [vmem:[%s285 + $0xb0] sm:$0xff]
        %v494 = vld [vmem:[%s285 + $0xc0] sm:$0xff]
        %v495 = vld [vmem:[%s285 + $0xc8] sm:$0xff]
        %v496 = vld [vmem:[%s285 + $0xd8] sm:$0xff]
        %v497 = vld [vmem:[%s285 + $0xe0] sm:$0xff]
        %v498 = vld [vmem:[%s285 + $0xf0] sm:$0xff]
        %v499 = vld [vmem:[%s285 + $0xf8] sm:$0xff]
        %v500 = vld [vmem:[%s285 + $0x108] sm:$0xff]
        %v501 = vld [vmem:[%s285 + $0x110] sm:$0xff]
        %v502 = vld [vmem:[%s285 + $0x120] sm:$0xff]
        %v503 = vld [vmem:[%s285 + $0x128] sm:$0xff]
        %v504 = vld [vmem:[%s285 + $0x138] sm:$0xff]
        %v505 = vld [vmem:[%s285 + $0x140] sm:$0xff]
        %v506 = vld [vmem:[%s285 + $0x150] sm:$0xff]
        %v507 = vld [vmem:[%s285 + $0x158] sm:$0xff]
        %v508 = vld [vmem:[%s285 + $0x168] sm:$0xff]
        %v509 = vld [vmem:[%s285 + $0x170] sm:$0xff]
        %v510 = vld [vmem:[%s285 + $0x1] sm:$0xff]
        %v511 = vld [vmem:[%s285 + $0x9] sm:$0xff]
        %v512 = vld [vmem:[%s285 + $0x19] sm:$0xff]
        %v513 = vld [vmem:[%s285 + $0x21] sm:$0xff]
        %v514 = vld [vmem:[%s285 + $0x31] sm:$0xff]
        %v515 = vld [vmem:[%s285 + $0x39] sm:$0xff]
        %v516 = vld [vmem:[%s285 + $0x49] sm:$0xff]
        %v517 = vld [vmem:[%s285 + $0x51] sm:$0xff]
        %v518 = vld [vmem:[%s285 + $0x61] sm:$0xff]
        %v519 = vld [vmem:[%s285 + $0x69] sm:$0xff]
        %v520 = vld [vmem:[%s285 + $0x79] sm:$0xff]
        %v521 = vld [vmem:[%s285 + $0x81] sm:$0xff]
        %v522 = vld [vmem:[%s285 + $0x91] sm:$0xff]
        %v523 = vld [vmem:[%s285 + $0x99] sm:$0xff]
        %v524 = vld [vmem:[%s285 + $0xa9] sm:$0xff]
        %v525 = vld [vmem:[%s285 + $0xb1] sm:$0xff]
        %v526 = vld [vmem:[%s285 + $0xc1] sm:$0xff]
        %v527 = vld [vmem:[%s285 + $0xc9] sm:$0xff]
        %v528 = vld [vmem:[%s285 + $0xd9] sm:$0xff]
        %v529 = vld [vmem:[%s285 + $0xe1] sm:$0xff]
        %v530 = vld [vmem:[%s285 + $0xf1] sm:$0xff]
        %v531 = vld [vmem:[%s285 + $0xf9] sm:$0xff]
        %v532 = vld [vmem:[%s285 + $0x109] sm:$0xff]
        %v533 = vld [vmem:[%s285 + $0x111] sm:$0xff]
        %v534 = vld [vmem:[%s285 + $0x121] sm:$0xff]
        %v535 = vld [vmem:[%s285 + $0x129] sm:$0xff]
        %v536 = vld [vmem:[%s285 + $0x139] sm:$0xff]
        %v537 = vld [vmem:[%s285 + $0x141] sm:$0xff]
        %v538 = vld [vmem:[%s285 + $0x151] sm:$0xff]
        %v539 = vld [vmem:[%s285 + $0x159] sm:$0xff]
        %v540 = vld [vmem:[%s285 + $0x169] sm:$0xff]
        %v541 = vld [vmem:[%s285 + $0x171] sm:$0xff]
        %v542 = vld [vmem:[%s285 + $0x2] sm:$0xff]
        %v543 = vld [vmem:[%s285 + $0xa] sm:$0xff]
        %v544 = vld [vmem:[%s285 + $0x1a] sm:$0xff]
        %v545 = vld [vmem:[%s285 + $0x22] sm:$0xff]
        %v546 = vld [vmem:[%s285 + $0x32] sm:$0xff]
        %v547 = vld [vmem:[%s285 + $0x3a] sm:$0xff]
        %v548 = vld [vmem:[%s285 + $0x4a] sm:$0xff]
        %v549 = vld [vmem:[%s285 + $0x52] sm:$0xff]
        %v550 = vld [vmem:[%s285 + $0x62] sm:$0xff]
        %v551 = vld [vmem:[%s285 + $0x6a] sm:$0xff]
        %v552 = vld [vmem:[%s285 + $0x7a] sm:$0xff]
        %v553 = vld [vmem:[%s285 + $0x82] sm:$0xff]
        %v554 = vld [vmem:[%s285 + $0x92] sm:$0xff]
        %v555 = vld [vmem:[%s285 + $0x9a] sm:$0xff]
        %v556 = vld [vmem:[%s285 + $0xaa] sm:$0xff]
        %v557 = vld [vmem:[%s285 + $0xb2] sm:$0xff]
        %v558 = vld [vmem:[%s285 + $0xc2] sm:$0xff]
        %v559 = vld [vmem:[%s285 + $0xca] sm:$0xff]
        %v560 = vld [vmem:[%s285 + $0xda] sm:$0xff]
        %v561 = vld [vmem:[%s285 + $0xe2] sm:$0xff]
        %v562 = vld [vmem:[%s285 + $0xf2] sm:$0xff]
        %v563 = vld [vmem:[%s285 + $0xfa] sm:$0xff]
        %v564 = vld [vmem:[%s285 + $0x10a] sm:$0xff]
        %v565 = vld [vmem:[%s285 + $0x112] sm:$0xff]
        %v566 = vld [vmem:[%s285 + $0x122] sm:$0xff]
        %v567 = vld [vmem:[%s285 + $0x12a] sm:$0xff]
        %v568 = vld [vmem:[%s285 + $0x13a] sm:$0xff]
        %v569 = vld [vmem:[%s285 + $0x142] sm:$0xff]
        %v570 = vld [vmem:[%s285 + $0x152] sm:$0xff]
        %v571 = vld [vmem:[%s285 + $0x15a] sm:$0xff]
        %v572 = vld [vmem:[%s285 + $0x16a] sm:$0xff]
        %v573 = vld [vmem:[%s285 + $0x172] sm:$0xff]
        %s574 = scalar_lea.vmem [#allocation2], 48
        %v575 = vld [vmem:[%s574] sm:$0xff]
        %v576 = vld [vmem:[%s574 + $0x8] sm:$0xff]
        %v577 = vld [vmem:[%s574 + $0x18] sm:$0xff]
        %v578 = vld [vmem:[%s574 + $0x20] sm:$0xff]
        %v579 = vld [vmem:[%s574 + $0x30] sm:$0xff]
        %v580 = vld [vmem:[%s574 + $0x38] sm:$0xff]
        %v581 = vld [vmem:[%s574 + $0x48] sm:$0xff]
        %v582 = vld [vmem:[%s574 + $0x50] sm:$0xff]
        %v583 = vld [vmem:[%s574 + $0x60] sm:$0xff]
        %v584 = vld [vmem:[%s574 + $0x68] sm:$0xff]
        %v585 = vld [vmem:[%s574 + $0x78] sm:$0xff]
        %v586 = vld [vmem:[%s574 + $0x80] sm:$0xff]
        %v587 = vld [vmem:[%s574 + $0x90] sm:$0xff]
        %v588 = vld [vmem:[%s574 + $0x98] sm:$0xff]
        %v589 = vld [vmem:[%s574 + $0xa8] sm:$0xff]
        %v590 = vld [vmem:[%s574 + $0xb0] sm:$0xff]
        %v591 = vld [vmem:[%s574 + $0xc0] sm:$0xff]
        %v592 = vld [vmem:[%s574 + $0xc8] sm:$0xff]
        %v593 = vld [vmem:[%s574 + $0xd8] sm:$0xff]
        %v594 = vld [vmem:[%s574 + $0xe0] sm:$0xff]
        %v595 = vld [vmem:[%s574 + $0xf0] sm:$0xff]
        %v596 = vld [vmem:[%s574 + $0xf8] sm:$0xff]
        %v597 = vld [vmem:[%s574 + $0x108] sm:$0xff]
        %v598 = vld [vmem:[%s574 + $0x110] sm:$0xff]
        %v599 = vld [vmem:[%s574 + $0x120] sm:$0xff]
        %v600 = vld [vmem:[%s574 + $0x128] sm:$0xff]
        %v601 = vld [vmem:[%s574 + $0x138] sm:$0xff]
        %v602 = vld [vmem:[%s574 + $0x140] sm:$0xff]
        %v603 = vld [vmem:[%s574 + $0x150] sm:$0xff]
        %v604 = vld [vmem:[%s574 + $0x158] sm:$0xff]
        %v605 = vld [vmem:[%s574 + $0x168] sm:$0xff]
        %v606 = vld [vmem:[%s574 + $0x170] sm:$0xff]
        %v607 = vld [vmem:[%s574 + $0x1] sm:$0xff]
        %v608 = vld [vmem:[%s574 + $0x9] sm:$0xff]
        %v609 = vld [vmem:[%s574 + $0x19] sm:$0xff]
        %v610 = vld [vmem:[%s574 + $0x21] sm:$0xff]
        %v611 = vld [vmem:[%s574 + $0x31] sm:$0xff]
        %v612 = vld [vmem:[%s574 + $0x39] sm:$0xff]
        %v613 = vld [vmem:[%s574 + $0x49] sm:$0xff]
        %v614 = vld [vmem:[%s574 + $0x51] sm:$0xff]
        %v615 = vld [vmem:[%s574 + $0x61] sm:$0xff]
        %v616 = vld [vmem:[%s574 + $0x69] sm:$0xff]
        %v617 = vld [vmem:[%s574 + $0x79] sm:$0xff]
        %v618 = vld [vmem:[%s574 + $0x81] sm:$0xff]
        %v619 = vld [vmem:[%s574 + $0x91] sm:$0xff]
        %v620 = vld [vmem:[%s574 + $0x99] sm:$0xff]
        %v621 = vld [vmem:[%s574 + $0xa9] sm:$0xff]
        %v622 = vld [vmem:[%s574 + $0xb1] sm:$0xff]
        %v623 = vld [vmem:[%s574 + $0xc1] sm:$0xff]
        %v624 = vld [vmem:[%s574 + $0xc9] sm:$0xff]
        %v625 = vld [vmem:[%s574 + $0xd9] sm:$0xff]
        %v626 = vld [vmem:[%s574 + $0xe1] sm:$0xff]
        %v627 = vld [vmem:[%s574 + $0xf1] sm:$0xff]
        %v628 = vld [vmem:[%s574 + $0xf9] sm:$0xff]
        %v629 = vld [vmem:[%s574 + $0x109] sm:$0xff]
        %v630 = vld [vmem:[%s574 + $0x111] sm:$0xff]
        %v631 = vld [vmem:[%s574 + $0x121] sm:$0xff]
        %v632 = vld [vmem:[%s574 + $0x129] sm:$0xff]
        %v633 = vld [vmem:[%s574 + $0x139] sm:$0xff]
        %v634 = vld [vmem:[%s574 + $0x141] sm:$0xff]
        %v635 = vld [vmem:[%s574 + $0x151] sm:$0xff]
        %v636 = vld [vmem:[%s574 + $0x159] sm:$0xff]
        %v637 = vld [vmem:[%s574 + $0x169] sm:$0xff]
        %v638 = vld [vmem:[%s574 + $0x171] sm:$0xff]
        %v639 = vld [vmem:[%s574 + $0x2] sm:$0xff]
        %v640 = vld [vmem:[%s574 + $0xa] sm:$0xff]
        %v641 = vld [vmem:[%s574 + $0x1a] sm:$0xff]
        %v642 = vld [vmem:[%s574 + $0x22] sm:$0xff]
        %v643 = vld [vmem:[%s574 + $0x32] sm:$0xff]
        %v644 = vld [vmem:[%s574 + $0x3a] sm:$0xff]
        %v645 = vld [vmem:[%s574 + $0x4a] sm:$0xff]
        %v646 = vld [vmem:[%s574 + $0x52] sm:$0xff]
        %v647 = vld [vmem:[%s574 + $0x62] sm:$0xff]
        %v648 = vld [vmem:[%s574 + $0x6a] sm:$0xff]
        %v649 = vld [vmem:[%s574 + $0x7a] sm:$0xff]
        %v650 = vld [vmem:[%s574 + $0x82] sm:$0xff]
        %v651 = vld [vmem:[%s574 + $0x92] sm:$0xff]
        %v652 = vld [vmem:[%s574 + $0x9a] sm:$0xff]
        %v653 = vld [vmem:[%s574 + $0xaa] sm:$0xff]
        %v654 = vld [vmem:[%s574 + $0xb2] sm:$0xff]
        %v655 = vld [vmem:[%s574 + $0xc2] sm:$0xff]
        %v656 = vld [vmem:[%s574 + $0xca] sm:$0xff]
        %v657 = vld [vmem:[%s574 + $0xda] sm:$0xff]
        %v658 = vld [vmem:[%s574 + $0xe2] sm:$0xff]
        %v659 = vld [vmem:[%s574 + $0xf2] sm:$0xff]
        %v660 = vld [vmem:[%s574 + $0xfa] sm:$0xff]
        %v661 = vld [vmem:[%s574 + $0x10a] sm:$0xff]
        %v662 = vld [vmem:[%s574 + $0x112] sm:$0xff]
        %v663 = vld [vmem:[%s574 + $0x122] sm:$0xff]
        %v664 = vld [vmem:[%s574 + $0x12a] sm:$0xff]
        %v665 = vld [vmem:[%s574 + $0x13a] sm:$0xff]
        %v666 = vld [vmem:[%s574 + $0x142] sm:$0xff]
        %v667 = vld [vmem:[%s574 + $0x152] sm:$0xff]
        %v668 = vld [vmem:[%s574 + $0x15a] sm:$0xff]
        %v669 = vld [vmem:[%s574 + $0x16a] sm:$0xff]
        %v670 = vld [vmem:[%s574 + $0x172] sm:$0xff]
        %v671 = vld [vmem:[#allocation6] sm:$0xff]
        %v672 = vld [vmem:[#allocation6 + $0x8] sm:$0xff]
        %v673 = vld [vmem:[#allocation6 + $0x10] sm:$0xff]
        %v674 = vld [vmem:[#allocation6 + $0x18] sm:$0xff]
        %v675 = vld [vmem:[#allocation6 + $0x20] sm:$0xff]
        %v676 = vld [vmem:[#allocation6 + $0x28] sm:$0xff]
        %v677 = vld [vmem:[#allocation6 + $0x30] sm:$0xff]
        %v678 = vld [vmem:[#allocation6 + $0x38] sm:$0xff]
        %v679 = vld [vmem:[#allocation6 + $0x40] sm:$0xff]
        %v680 = vld [vmem:[#allocation6 + $0x48] sm:$0xff]
        %v681 = vld [vmem:[#allocation6 + $0x50] sm:$0xff]
        %v682 = vld [vmem:[#allocation6 + $0x58] sm:$0xff]
        %v683 = vld [vmem:[#allocation6 + $0x60] sm:$0xff]
        %v684 = vld [vmem:[#allocation6 + $0x68] sm:$0xff]
        %v685 = vld [vmem:[#allocation6 + $0x70] sm:$0xff]
        %v686 = vld [vmem:[#allocation6 + $0x78] sm:$0xff]
        %v687 = vld [vmem:[#allocation6 + $0x80] sm:$0xff]
        %v688 = vld [vmem:[#allocation6 + $0x88] sm:$0xff]
        %v689 = vld [vmem:[#allocation6 + $0x90] sm:$0xff]
        %v690 = vld [vmem:[#allocation6 + $0x98] sm:$0xff]
        %v691 = vld [vmem:[#allocation6 + $0xa0] sm:$0xff]
        %v692 = vld [vmem:[#allocation6 + $0xa8] sm:$0xff]
        %v693 = vld [vmem:[#allocation6 + $0xb0] sm:$0xff]
        %v694 = vld [vmem:[#allocation6 + $0xb8] sm:$0xff]
        %v695 = vld [vmem:[#allocation6 + $0xc0] sm:$0xff]
        %v696 = vld [vmem:[#allocation6 + $0xc8] sm:$0xff]
        %v697 = vld [vmem:[#allocation6 + $0xd0] sm:$0xff]
        %v698 = vld [vmem:[#allocation6 + $0xd8] sm:$0xff]
        %v699 = vld [vmem:[#allocation6 + $0xe0] sm:$0xff]
        %v700 = vld [vmem:[#allocation6 + $0xe8] sm:$0xff]
        %v701 = vld [vmem:[#allocation6 + $0xf0] sm:$0xff]
        %v702 = vld [vmem:[#allocation6 + $0xf8] sm:$0xff]
        %v703 = vld [vmem:[#allocation6 + $0x100] sm:$0xff]
        %v704 = vld [vmem:[#allocation6 + $0x108] sm:$0xff]
        %v705 = vld [vmem:[#allocation6 + $0x110] sm:$0xff]
        %v706 = vld [vmem:[#allocation6 + $0x118] sm:$0xff]
        %v707 = vld [vmem:[#allocation6 + $0x120] sm:$0xff]
        %v708 = vld [vmem:[#allocation6 + $0x128] sm:$0xff]
        %v709 = vld [vmem:[#allocation6 + $0x130] sm:$0xff]
        %v710 = vld [vmem:[#allocation6 + $0x138] sm:$0xff]
        %v711 = vld [vmem:[#allocation6 + $0x140] sm:$0xff]
        %v712 = vld [vmem:[#allocation6 + $0x148] sm:$0xff]
        %v713 = vld [vmem:[#allocation6 + $0x150] sm:$0xff]
        %v714 = vld [vmem:[#allocation6 + $0x158] sm:$0xff]
        %v715 = vld [vmem:[#allocation6 + $0x160] sm:$0xff]
        %v716 = vld [vmem:[#allocation6 + $0x168] sm:$0xff]
        %v717 = vld [vmem:[#allocation6 + $0x170] sm:$0xff]
        %v718 = vld [vmem:[#allocation6 + $0x178] sm:$0xff]
        %v719 = vld [vmem:[#allocation6 + $0x180] sm:$0xff]
        %v720 = vld [vmem:[#allocation6 + $0x188] sm:$0xff]
        %v721 = vld [vmem:[#allocation6 + $0x190] sm:$0xff]
        %v722 = vld [vmem:[#allocation6 + $0x198] sm:$0xff]
        %v723 = vld [vmem:[#allocation6 + $0x1a0] sm:$0xff]
        %v724 = vld [vmem:[#allocation6 + $0x1a8] sm:$0xff]
        %v725 = vld [vmem:[#allocation6 + $0x1b0] sm:$0xff]
        %v726 = vld [vmem:[#allocation6 + $0x1b8] sm:$0xff]
        %v727 = vld [vmem:[#allocation6 + $0x1c0] sm:$0xff]
        %v728 = vld [vmem:[#allocation6 + $0x1c8] sm:$0xff]
        %v729 = vld [vmem:[#allocation6 + $0x1d0] sm:$0xff]
        %v730 = vld [vmem:[#allocation6 + $0x1d8] sm:$0xff]
        %v731 = vld [vmem:[#allocation6 + $0x1e0] sm:$0xff]
        %v732 = vld [vmem:[#allocation6 + $0x1e8] sm:$0xff]
        %v733 = vld [vmem:[#allocation6 + $0x1f0] sm:$0xff]
        %v734 = vld [vmem:[#allocation6 + $0x1f8] sm:$0xff]
        %v735 = vld [vmem:[#allocation6 + $0x200] sm:$0xff]
        %v736 = vld [vmem:[#allocation6 + $0x208] sm:$0xff]
        %v737 = vld [vmem:[#allocation6 + $0x210] sm:$0xff]
        %v738 = vld [vmem:[#allocation6 + $0x218] sm:$0xff]
        %v739 = vld [vmem:[#allocation6 + $0x220] sm:$0xff]
        %v740 = vld [vmem:[#allocation6 + $0x228] sm:$0xff]
        %v741 = vld [vmem:[#allocation6 + $0x230] sm:$0xff]
        %v742 = vld [vmem:[#allocation6 + $0x238] sm:$0xff]
        %v743 = vld [vmem:[#allocation6 + $0x240] sm:$0xff]
        %v744 = vld [vmem:[#allocation6 + $0x248] sm:$0xff]
        %v745 = vld [vmem:[#allocation6 + $0x250] sm:$0xff]
        %v746 = vld [vmem:[#allocation6 + $0x258] sm:$0xff]
        %v747 = vld [vmem:[#allocation6 + $0x260] sm:$0xff]
        %v748 = vld [vmem:[#allocation6 + $0x268] sm:$0xff]
        %v749 = vld [vmem:[#allocation6 + $0x270] sm:$0xff]
        %v750 = vld [vmem:[#allocation6 + $0x278] sm:$0xff]
        %v751 = vld [vmem:[#allocation6 + $0x280] sm:$0xff]
        %v752 = vld [vmem:[#allocation6 + $0x288] sm:$0xff]
        %v753 = vld [vmem:[#allocation6 + $0x290] sm:$0xff]
        %v754 = vld [vmem:[#allocation6 + $0x298] sm:$0xff]
        %v755 = vld [vmem:[#allocation6 + $0x2a0] sm:$0xff]
        %v756 = vld [vmem:[#allocation6 + $0x2a8] sm:$0xff]
        %v757 = vld [vmem:[#allocation6 + $0x2b0] sm:$0xff]
        %v758 = vld [vmem:[#allocation6 + $0x2b8] sm:$0xff]
        %v759 = vld [vmem:[#allocation6 + $0x2c0] sm:$0xff]
        %v760 = vld [vmem:[#allocation6 + $0x2c8] sm:$0xff]
        %v761 = vld [vmem:[#allocation6 + $0x2d0] sm:$0xff]
        %v762 = vld [vmem:[#allocation6 + $0x2d8] sm:$0xff]
        %v763 = vld [vmem:[#allocation6 + $0x2e0] sm:$0xff]
        %v764 = vld [vmem:[#allocation6 + $0x2e8] sm:$0xff]
        %v765 = vld [vmem:[#allocation6 + $0x2f0] sm:$0xff]
        %v766 = vld [vmem:[#allocation6 + $0x2f8] sm:$0xff]
        %v767 = vld [vmem:[#allocation6 + $0x300] sm:$0xff]
        %v768 = vld [vmem:[#allocation6 + $0x308] sm:$0xff]
        %v769 = vld [vmem:[#allocation6 + $0x310] sm:$0xff]
        %v770 = vld [vmem:[#allocation6 + $0x318] sm:$0xff]
        %v771 = vld [vmem:[#allocation6 + $0x320] sm:$0xff]
        %v772 = vld [vmem:[#allocation6 + $0x328] sm:$0xff]
        %v773 = vld [vmem:[#allocation6 + $0x330] sm:$0xff]
        %v774 = vld [vmem:[#allocation6 + $0x338] sm:$0xff]
        %v775 = vld [vmem:[#allocation6 + $0x340] sm:$0xff]
        %v776 = vld [vmem:[#allocation6 + $0x348] sm:$0xff]
        %v777 = vld [vmem:[#allocation6 + $0x350] sm:$0xff]
        %v778 = vld [vmem:[#allocation6 + $0x358] sm:$0xff]
        %v779 = vld [vmem:[#allocation6 + $0x360] sm:$0xff]
        %v780 = vld [vmem:[#allocation6 + $0x368] sm:$0xff]
        %v781 = vld [vmem:[#allocation6 + $0x370] sm:$0xff]
        %v782 = vld [vmem:[#allocation6 + $0x378] sm:$0xff]
        %v783 = vld [vmem:[#allocation6 + $0x380] sm:$0xff]
        %v784 = vld [vmem:[#allocation6 + $0x388] sm:$0xff]
        %v785 = vld [vmem:[#allocation6 + $0x390] sm:$0xff]
        %v786 = vld [vmem:[#allocation6 + $0x398] sm:$0xff]
        %v787 = vld [vmem:[#allocation6 + $0x3a0] sm:$0xff]
        %v788 = vld [vmem:[#allocation6 + $0x3a8] sm:$0xff]
        %v789 = vld [vmem:[#allocation6 + $0x3b0] sm:$0xff]
        %v790 = vld [vmem:[#allocation6 + $0x3b8] sm:$0xff]
        %v791 = vld [vmem:[#allocation6 + $0x3c0] sm:$0xff]
        %v792 = vld [vmem:[#allocation6 + $0x3c8] sm:$0xff]
        %v793 = vld [vmem:[#allocation6 + $0x3d0] sm:$0xff]
        %v794 = vld [vmem:[#allocation6 + $0x3d8] sm:$0xff]
        %v795 = vld [vmem:[#allocation6 + $0x3e0] sm:$0xff]
        %v796 = vld [vmem:[#allocation6 + $0x3e8] sm:$0xff]
        %v797 = vld [vmem:[#allocation6 + $0x3f0] sm:$0xff]
        %v798 = vld [vmem:[#allocation6 + $0x3f8] sm:$0xff]
        %v799 = vld [vmem:[#allocation6 + $0x400] sm:$0xff]
        %v800 = vld [vmem:[#allocation6 + $0x408] sm:$0xff]
        %v801 = vld [vmem:[#allocation6 + $0x410] sm:$0xff]
        %v802 = vld [vmem:[#allocation6 + $0x418] sm:$0xff]
        %v803 = vld [vmem:[#allocation6 + $0x420] sm:$0xff]
        %v804 = vld [vmem:[#allocation6 + $0x428] sm:$0xff]
        %v805 = vld [vmem:[#allocation6 + $0x430] sm:$0xff]
        %v806 = vld [vmem:[#allocation6 + $0x438] sm:$0xff]
        %v807 = vld [vmem:[#allocation6 + $0x440] sm:$0xff]
        %v808 = vld [vmem:[#allocation6 + $0x448] sm:$0xff]
        %v809 = vld [vmem:[#allocation6 + $0x450] sm:$0xff]
        %v810 = vld [vmem:[#allocation6 + $0x458] sm:$0xff]
        %v811 = vld [vmem:[#allocation6 + $0x460] sm:$0xff]
        %v812 = vld [vmem:[#allocation6 + $0x468] sm:$0xff]
        %v813 = vld [vmem:[#allocation6 + $0x470] sm:$0xff]
        %v814 = vld [vmem:[#allocation6 + $0x478] sm:$0xff]
        %v815 = vld [vmem:[%s2] sm:$0x1]
        %v817 = vperm.slane %v815, 0
        %819 = vmatpush.msra.mxu0 %v686
        %820 = vmatpush.msra.mxu0 %v685
        %821 = vmatpush.msra.mxu0 %v684
        %822 = vmatpush.msra.mxu0 %v683
        %823 = vmatpush.msra.mxu0 %v682
        %824 = vmatpush.msra.mxu0 %v681
        %825 = vmatpush.msra.mxu0 %v680
        %826 = vmatpush.msra.mxu0 %v679
        %827 = vmatpush.msra.mxu0 %v678
        %828 = vmatpush.msra.mxu0 %v677
        %829 = vmatpush.msra.mxu0 %v676
        %830 = vmatpush.msra.mxu0 %v675
        %831 = vmatpush.msra.mxu0 %v674
        %832 = vmatpush.msra.mxu0 %v673
        %833 = vmatpush.msra.mxu0 %v672
        %834 = vmatpush.msra.mxu0 %v671
        %835 = vmatmul.f32.gmra.mxu0 %v382
        %v836 = vpop.f32.mrf.mxu0
        %v837 = vadd.f32 %v817, %v836
        %838 = vmatmul.f32.gmra.mxu0 %v383
        %v839 = vpop.f32.mrf.mxu0
        %v840 = vadd.f32 %v817, %v839
        %841 = vmatmul.f32.gmra.mxu0 %v384
        %v842 = vpop.f32.mrf.mxu0
        %v843 = vadd.f32 %v817, %v842
        %844 = vmatmul.f32.gmra.mxu0 %v385
        %v845 = vpop.f32.mrf.mxu0
        %v846 = vadd.f32 %v817, %v845
        %847 = vmatmul.f32.gmra.mxu0 %v386
        %v848 = vpop.f32.mrf.mxu0
        %v849 = vadd.f32 %v817, %v848
        %850 = vmatmul.f32.gmra.mxu0 %v387
        %v851 = vpop.f32.mrf.mxu0
        %v852 = vadd.f32 %v817, %v851
        %853 = vmatmul.f32.gmra.mxu0 %v388
        %v854 = vpop.f32.mrf.mxu0
        %v855 = vadd.f32 %v817, %v854
        %856 = vmatmul.f32.gmra.mxu0 %v389
        %v857 = vpop.f32.mrf.mxu0
        %v858 = vadd.f32 %v817, %v857
        %859 = vmatmul.f32.gmra.mxu0 %v390
        %v860 = vpop.f32.mrf.mxu0
        %v861 = vadd.f32 %v817, %v860
        %862 = vmatmul.f32.gmra.mxu0 %v391
        %v863 = vpop.f32.mrf.mxu0
        %v864 = vadd.f32 %v817, %v863
        %865 = vmatmul.f32.gmra.mxu0 %v392
        %v866 = vpop.f32.mrf.mxu0
        %v867 = vadd.f32 %v817, %v866
        %868 = vmatmul.f32.gmra.mxu0 %v393
        %v869 = vpop.f32.mrf.mxu0
        %v870 = vadd.f32 %v817, %v869
        %871 = vmatmul.f32.gmra.mxu0 %v394
        %v872 = vpop.f32.mrf.mxu0
        %v873 = vadd.f32 %v817, %v872
        %874 = vmatmul.f32.gmra.mxu0 %v395
        %v875 = vpop.f32.mrf.mxu0
        %v876 = vadd.f32 %v817, %v875
        %877 = vmatmul.f32.gmra.mxu0 %v396
        %v878 = vpop.f32.mrf.mxu0
        %v879 = vadd.f32 %v817, %v878
        %880 = vmatmul.f32.gmra.mxu0 %v397
        %v881 = vpop.f32.mrf.mxu0
        %v882 = vadd.f32 %v817, %v881
        %883 = vmatmul.f32.gmra.mxu0 %v398
        %v884 = vpop.f32.mrf.mxu0
        %v885 = vadd.f32 %v817, %v884
        %886 = vmatmul.f32.gmra.mxu0 %v399
        %v887 = vpop.f32.mrf.mxu0
        %v888 = vadd.f32 %v817, %v887
        %889 = vmatmul.f32.gmra.mxu0 %v400
        %v890 = vpop.f32.mrf.mxu0
        %v891 = vadd.f32 %v817, %v890
        %892 = vmatmul.f32.gmra.mxu0 %v401
        %v893 = vpop.f32.mrf.mxu0
        %v894 = vadd.f32 %v817, %v893
        %895 = vmatmul.f32.gmra.mxu0 %v402
        %v896 = vpop.f32.mrf.mxu0
        %v897 = vadd.f32 %v817, %v896
        %898 = vmatmul.f32.gmra.mxu0 %v403
        %v899 = vpop.f32.mrf.mxu0
        %v900 = vadd.f32 %v817, %v899
        %901 = vmatmul.f32.gmra.mxu0 %v404
        %v902 = vpop.f32.mrf.mxu0
        %v903 = vadd.f32 %v817, %v902
        %904 = vmatmul.f32.gmra.mxu0 %v405
        %v905 = vpop.f32.mrf.mxu0
        %v906 = vadd.f32 %v817, %v905
        %907 = vmatmul.f32.gmra.mxu0 %v406
        %v908 = vpop.f32.mrf.mxu0
        %v909 = vadd.f32 %v817, %v908
        %910 = vmatmul.f32.gmra.mxu0 %v407
        %v911 = vpop.f32.mrf.mxu0
        %v912 = vadd.f32 %v817, %v911
        %913 = vmatmul.f32.gmra.mxu0 %v408
        %v914 = vpop.f32.mrf.mxu0
        %v915 = vadd.f32 %v817, %v914
        %916 = vmatmul.f32.gmra.mxu0 %v409
        %v917 = vpop.f32.mrf.mxu0
        %v918 = vadd.f32 %v817, %v917
        %919 = vmatmul.f32.gmra.mxu0 %v410
        %v920 = vpop.f32.mrf.mxu0
        %v921 = vadd.f32 %v817, %v920
        %922 = vmatmul.f32.gmra.mxu0 %v411
        %v923 = vpop.f32.mrf.mxu0
        %v924 = vadd.f32 %v817, %v923
        %925 = vmatmul.f32.gmra.mxu0 %v412
        %v926 = vpop.f32.mrf.mxu0
        %v927 = vadd.f32 %v817, %v926
        %928 = vmatmul.f32.gmra.mxu0 %v413
        %v929 = vpop.f32.mrf.mxu0
        %v930 = vadd.f32 %v817, %v929
        %931 = vdwg.mxu0
        %932 = vmatpush.msra.mxu0 %v702
        %933 = vmatpush.msra.mxu0 %v701
        %934 = vmatpush.msra.mxu0 %v700
        %935 = vmatpush.msra.mxu0 %v699
        %936 = vmatpush.msra.mxu0 %v698
        %937 = vmatpush.msra.mxu0 %v697
        %938 = vmatpush.msra.mxu0 %v696
        %939 = vmatpush.msra.mxu0 %v695
        %940 = vmatpush.msra.mxu0 %v694
        %941 = vmatpush.msra.mxu0 %v693
        %942 = vmatpush.msra.mxu0 %v692
        %943 = vmatpush.msra.mxu0 %v691
        %944 = vmatpush.msra.mxu0 %v690
        %945 = vmatpush.msra.mxu0 %v689
        %946 = vmatpush.msra.mxu0 %v688
        %947 = vmatpush.msra.mxu0 %v687
        %948 = vmatmul.f32.gmra.mxu0 %v414
        %v949 = vpop.f32.mrf.mxu0
        %v950 = vadd.f32 %v837, %v949
        %951 = vmatmul.f32.gmra.mxu0 %v415
        %v952 = vpop.f32.mrf.mxu0
        %v953 = vadd.f32 %v840, %v952
        %954 = vmatmul.f32.gmra.mxu0 %v416
        %v955 = vpop.f32.mrf.mxu0
        %v956 = vadd.f32 %v843, %v955
        %957 = vmatmul.f32.gmra.mxu0 %v417
        %v958 = vpop.f32.mrf.mxu0
        %v959 = vadd.f32 %v846, %v958
        %960 = vmatmul.f32.gmra.mxu0 %v418
        %v961 = vpop.f32.mrf.mxu0
        %v962 = vadd.f32 %v849, %v961
        %963 = vmatmul.f32.gmra.mxu0 %v419
        %v964 = vpop.f32.mrf.mxu0
        %v965 = vadd.f32 %v852, %v964
        %966 = vmatmul.f32.gmra.mxu0 %v420
        %v967 = vpop.f32.mrf.mxu0
        %v968 = vadd.f32 %v855, %v967
        %969 = vmatmul.f32.gmra.mxu0 %v421
        %v970 = vpop.f32.mrf.mxu0
        %v971 = vadd.f32 %v858, %v970
        %972 = vmatmul.f32.gmra.mxu0 %v422
        %v973 = vpop.f32.mrf.mxu0
        %v974 = vadd.f32 %v861, %v973
        %975 = vmatmul.f32.gmra.mxu0 %v423
        %v976 = vpop.f32.mrf.mxu0
        %v977 = vadd.f32 %v864, %v976
        %978 = vmatmul.f32.gmra.mxu0 %v424
        %v979 = vpop.f32.mrf.mxu0
        %v980 = vadd.f32 %v867, %v979
        %981 = vmatmul.f32.gmra.mxu0 %v425
        %v982 = vpop.f32.mrf.mxu0
        %v983 = vadd.f32 %v870, %v982
        %984 = vmatmul.f32.gmra.mxu0 %v426
        %v985 = vpop.f32.mrf.mxu0
        %v986 = vadd.f32 %v873, %v985
        %987 = vmatmul.f32.gmra.mxu0 %v427
        %v988 = vpop.f32.mrf.mxu0
        %v989 = vadd.f32 %v876, %v988
        %990 = vmatmul.f32.gmra.mxu0 %v428
        %v991 = vpop.f32.mrf.mxu0
        %v992 = vadd.f32 %v879, %v991
        %993 = vmatmul.f32.gmra.mxu0 %v429
        %v994 = vpop.f32.mrf.mxu0
        %v995 = vadd.f32 %v882, %v994
        %996 = vmatmul.f32.gmra.mxu0 %v430
        %v997 = vpop.f32.mrf.mxu0
        %v998 = vadd.f32 %v885, %v997
        %999 = vmatmul.f32.gmra.mxu0 %v431
        %v1000 = vpop.f32.mrf.mxu0
        %v1001 = vadd.f32 %v888, %v1000
        %1002 = vmatmul.f32.gmra.mxu0 %v432
        %v1003 = vpop.f32.mrf.mxu0
        %v1004 = vadd.f32 %v891, %v1003
        %1005 = vmatmul.f32.gmra.mxu0 %v433
        %v1006 = vpop.f32.mrf.mxu0
        %v1007 = vadd.f32 %v894, %v1006
        %1008 = vmatmul.f32.gmra.mxu0 %v434
        %v1009 = vpop.f32.mrf.mxu0
        %v1010 = vadd.f32 %v897, %v1009
        %1011 = vmatmul.f32.gmra.mxu0 %v435
        %v1012 = vpop.f32.mrf.mxu0
        %v1013 = vadd.f32 %v900, %v1012
        %1014 = vmatmul.f32.gmra.mxu0 %v436
        %v1015 = vpop.f32.mrf.mxu0
        %v1016 = vadd.f32 %v903, %v1015
        %1017 = vmatmul.f32.gmra.mxu0 %v437
        %v1018 = vpop.f32.mrf.mxu0
        %v1019 = vadd.f32 %v906, %v1018
        %1020 = vmatmul.f32.gmra.mxu0 %v438
        %v1021 = vpop.f32.mrf.mxu0
        %v1022 = vadd.f32 %v909, %v1021
        %1023 = vmatmul.f32.gmra.mxu0 %v439
        %v1024 = vpop.f32.mrf.mxu0
        %v1025 = vadd.f32 %v912, %v1024
        %1026 = vmatmul.f32.gmra.mxu0 %v440
        %v1027 = vpop.f32.mrf.mxu0
        %v1028 = vadd.f32 %v915, %v1027
        %1029 = vmatmul.f32.gmra.mxu0 %v441
        %v1030 = vpop.f32.mrf.mxu0
        %v1031 = vadd.f32 %v918, %v1030
        %1032 = vmatmul.f32.gmra.mxu0 %v442
        %v1033 = vpop.f32.mrf.mxu0
        %v1034 = vadd.f32 %v921, %v1033
        %1035 = vmatmul.f32.gmra.mxu0 %v443
        %v1036 = vpop.f32.mrf.mxu0
        %v1037 = vadd.f32 %v924, %v1036
        %1038 = vmatmul.f32.gmra.mxu0 %v444
        %v1039 = vpop.f32.mrf.mxu0
        %v1040 = vadd.f32 %v927, %v1039
        %1041 = vmatmul.f32.gmra.mxu0 %v445
        %v1042 = vpop.f32.mrf.mxu0
        %v1043 = vadd.f32 %v930, %v1042
        %1044 = vdwg.mxu0
        %1045 = vmatpush.msra.mxu0 %v718
        %1046 = vmatpush.msra.mxu0 %v717
        %1047 = vmatpush.msra.mxu0 %v716
        %1048 = vmatpush.msra.mxu0 %v715
        %1049 = vmatpush.msra.mxu0 %v714
        %1050 = vmatpush.msra.mxu0 %v713
        %1051 = vmatpush.msra.mxu0 %v712
        %1052 = vmatpush.msra.mxu0 %v711
        %1053 = vmatpush.msra.mxu0 %v710
        %1054 = vmatpush.msra.mxu0 %v709
        %1055 = vmatpush.msra.mxu0 %v708
        %1056 = vmatpush.msra.mxu0 %v707
        %1057 = vmatpush.msra.mxu0 %v706
        %1058 = vmatpush.msra.mxu0 %v705
        %1059 = vmatpush.msra.mxu0 %v704
        %1060 = vmatpush.msra.mxu0 %v703
        %1061 = vmatmul.f32.gmra.mxu0 %v446
        %v1062 = vpop.f32.mrf.mxu0
        %v1063 = vadd.f32 %v950, %v1062
        %1064 = vmatmul.f32.gmra.mxu0 %v447
        %v1065 = vpop.f32.mrf.mxu0
        %v1066 = vadd.f32 %v953, %v1065
        %1067 = vmatmul.f32.gmra.mxu0 %v448
        %v1068 = vpop.f32.mrf.mxu0
        %v1069 = vadd.f32 %v956, %v1068
        %1070 = vmatmul.f32.gmra.mxu0 %v449
        %v1071 = vpop.f32.mrf.mxu0
        %v1072 = vadd.f32 %v959, %v1071
        %1073 = vmatmul.f32.gmra.mxu0 %v450
        %v1074 = vpop.f32.mrf.mxu0
        %v1075 = vadd.f32 %v962, %v1074
        %1076 = vmatmul.f32.gmra.mxu0 %v451
        %v1077 = vpop.f32.mrf.mxu0
        %v1078 = vadd.f32 %v965, %v1077
        %1079 = vmatmul.f32.gmra.mxu0 %v452
        %v1080 = vpop.f32.mrf.mxu0
        %v1081 = vadd.f32 %v968, %v1080
        %1082 = vmatmul.f32.gmra.mxu0 %v453
        %v1083 = vpop.f32.mrf.mxu0
        %v1084 = vadd.f32 %v971, %v1083
        %1085 = vmatmul.f32.gmra.mxu0 %v454
        %v1086 = vpop.f32.mrf.mxu0
        %v1087 = vadd.f32 %v974, %v1086
        %1088 = vmatmul.f32.gmra.mxu0 %v455
        %v1089 = vpop.f32.mrf.mxu0
        %v1090 = vadd.f32 %v977, %v1089
        %1091 = vmatmul.f32.gmra.mxu0 %v456
        %v1092 = vpop.f32.mrf.mxu0
        %v1093 = vadd.f32 %v980, %v1092
        %1094 = vmatmul.f32.gmra.mxu0 %v457
        %v1095 = vpop.f32.mrf.mxu0
        %v1096 = vadd.f32 %v983, %v1095
        %1097 = vmatmul.f32.gmra.mxu0 %v458
        %v1098 = vpop.f32.mrf.mxu0
        %v1099 = vadd.f32 %v986, %v1098
        %1100 = vmatmul.f32.gmra.mxu0 %v459
        %v1101 = vpop.f32.mrf.mxu0
        %v1102 = vadd.f32 %v989, %v1101
        %1103 = vmatmul.f32.gmra.mxu0 %v460
        %v1104 = vpop.f32.mrf.mxu0
        %v1105 = vadd.f32 %v992, %v1104
        %1106 = vmatmul.f32.gmra.mxu0 %v461
        %v1107 = vpop.f32.mrf.mxu0
        %v1108 = vadd.f32 %v995, %v1107
        %1109 = vmatmul.f32.gmra.mxu0 %v462
        %v1110 = vpop.f32.mrf.mxu0
        %v1111 = vadd.f32 %v998, %v1110
        %1112 = vmatmul.f32.gmra.mxu0 %v463
        %v1113 = vpop.f32.mrf.mxu0
        %v1114 = vadd.f32 %v1001, %v1113
        %1115 = vmatmul.f32.gmra.mxu0 %v464
        %v1116 = vpop.f32.mrf.mxu0
        %v1117 = vadd.f32 %v1004, %v1116
        %1118 = vmatmul.f32.gmra.mxu0 %v465
        %v1119 = vpop.f32.mrf.mxu0
        %v1120 = vadd.f32 %v1007, %v1119
        %1121 = vmatmul.f32.gmra.mxu0 %v466
        %v1122 = vpop.f32.mrf.mxu0
        %v1123 = vadd.f32 %v1010, %v1122
        %1124 = vmatmul.f32.gmra.mxu0 %v467
        %v1125 = vpop.f32.mrf.mxu0
        %v1126 = vadd.f32 %v1013, %v1125
        %1127 = vmatmul.f32.gmra.mxu0 %v468
        %v1128 = vpop.f32.mrf.mxu0
        %v1129 = vadd.f32 %v1016, %v1128
        %1130 = vmatmul.f32.gmra.mxu0 %v469
        %v1131 = vpop.f32.mrf.mxu0
        %v1132 = vadd.f32 %v1019, %v1131
        %1133 = vmatmul.f32.gmra.mxu0 %v470
        %v1134 = vpop.f32.mrf.mxu0
        %v1135 = vadd.f32 %v1022, %v1134
        %1136 = vmatmul.f32.gmra.mxu0 %v471
        %v1137 = vpop.f32.mrf.mxu0
        %v1138 = vadd.f32 %v1025, %v1137
        %1139 = vmatmul.f32.gmra.mxu0 %v472
        %v1140 = vpop.f32.mrf.mxu0
        %v1141 = vadd.f32 %v1028, %v1140
        %1142 = vmatmul.f32.gmra.mxu0 %v473
        %v1143 = vpop.f32.mrf.mxu0
        %v1144 = vadd.f32 %v1031, %v1143
        %1145 = vmatmul.f32.gmra.mxu0 %v474
        %v1146 = vpop.f32.mrf.mxu0
        %v1147 = vadd.f32 %v1034, %v1146
        %1148 = vmatmul.f32.gmra.mxu0 %v475
        %v1149 = vpop.f32.mrf.mxu0
        %v1150 = vadd.f32 %v1037, %v1149
        %1151 = vmatmul.f32.gmra.mxu0 %v476
        %v1152 = vpop.f32.mrf.mxu0
        %v1153 = vadd.f32 %v1040, %v1152
        %1154 = vmatmul.f32.gmra.mxu0 %v477
        %v1155 = vpop.f32.mrf.mxu0
        %v1156 = vadd.f32 %v1043, %v1155
        %1157 = vdwg.mxu0
        %1158 = vmatpush.msra.mxu0 %v734
        %1159 = vmatpush.msra.mxu0 %v733
        %1160 = vmatpush.msra.mxu0 %v732
        %1161 = vmatpush.msra.mxu0 %v731
        %1162 = vmatpush.msra.mxu0 %v730
        %1163 = vmatpush.msra.mxu0 %v729
        %1164 = vmatpush.msra.mxu0 %v728
        %1165 = vmatpush.msra.mxu0 %v727
        %1166 = vmatpush.msra.mxu0 %v726
        %1167 = vmatpush.msra.mxu0 %v725
        %1168 = vmatpush.msra.mxu0 %v724
        %1169 = vmatpush.msra.mxu0 %v723
        %1170 = vmatpush.msra.mxu0 %v722
        %1171 = vmatpush.msra.mxu0 %v721
        %1172 = vmatpush.msra.mxu0 %v720
        %1173 = vmatpush.msra.mxu0 %v719
        %1174 = vmatmul.f32.gmra.mxu0 %v478
        %v1175 = vpop.f32.mrf.mxu0
        %v1176 = vadd.f32 %v1063, %v1175
        %1177 = vmatmul.f32.gmra.mxu0 %v479
        %v1178 = vpop.f32.mrf.mxu0
        %v1179 = vadd.f32 %v1066, %v1178
        %1180 = vmatmul.f32.gmra.mxu0 %v480
        %v1181 = vpop.f32.mrf.mxu0
        %v1182 = vadd.f32 %v1069, %v1181
        %1183 = vmatmul.f32.gmra.mxu0 %v481
        %v1184 = vpop.f32.mrf.mxu0
        %v1185 = vadd.f32 %v1072, %v1184
        %1186 = vmatmul.f32.gmra.mxu0 %v482
        %v1187 = vpop.f32.mrf.mxu0
        %v1188 = vadd.f32 %v1075, %v1187
        %1189 = vmatmul.f32.gmra.mxu0 %v483
        %v1190 = vpop.f32.mrf.mxu0
        %v1191 = vadd.f32 %v1078, %v1190
        %1192 = vmatmul.f32.gmra.mxu0 %v484
        %v1193 = vpop.f32.mrf.mxu0
        %v1194 = vadd.f32 %v1081, %v1193
        %1195 = vmatmul.f32.gmra.mxu0 %v485
        %v1196 = vpop.f32.mrf.mxu0
        %v1197 = vadd.f32 %v1084, %v1196
        %1198 = vmatmul.f32.gmra.mxu0 %v486
        %v1199 = vpop.f32.mrf.mxu0
        %v1200 = vadd.f32 %v1087, %v1199
        %1201 = vmatmul.f32.gmra.mxu0 %v487
        %v1202 = vpop.f32.mrf.mxu0
        %v1203 = vadd.f32 %v1090, %v1202
        %1204 = vmatmul.f32.gmra.mxu0 %v488
        %v1205 = vpop.f32.mrf.mxu0
        %v1206 = vadd.f32 %v1093, %v1205
        %1207 = vmatmul.f32.gmra.mxu0 %v489
        %v1208 = vpop.f32.mrf.mxu0
        %v1209 = vadd.f32 %v1096, %v1208
        %1210 = vmatmul.f32.gmra.mxu0 %v490
        %v1211 = vpop.f32.mrf.mxu0
        %v1212 = vadd.f32 %v1099, %v1211
        %1213 = vmatmul.f32.gmra.mxu0 %v491
        %v1214 = vpop.f32.mrf.mxu0
        %v1215 = vadd.f32 %v1102, %v1214
        %1216 = vmatmul.f32.gmra.mxu0 %v492
        %v1217 = vpop.f32.mrf.mxu0
        %v1218 = vadd.f32 %v1105, %v1217
        %1219 = vmatmul.f32.gmra.mxu0 %v493
        %v1220 = vpop.f32.mrf.mxu0
        %v1221 = vadd.f32 %v1108, %v1220
        %1222 = vmatmul.f32.gmra.mxu0 %v494
        %v1223 = vpop.f32.mrf.mxu0
        %v1224 = vadd.f32 %v1111, %v1223
        %1225 = vmatmul.f32.gmra.mxu0 %v495
        %v1226 = vpop.f32.mrf.mxu0
        %v1227 = vadd.f32 %v1114, %v1226
        %1228 = vmatmul.f32.gmra.mxu0 %v496
        %v1229 = vpop.f32.mrf.mxu0
        %v1230 = vadd.f32 %v1117, %v1229
        %1231 = vmatmul.f32.gmra.mxu0 %v497
        %v1232 = vpop.f32.mrf.mxu0
        %v1233 = vadd.f32 %v1120, %v1232
        %1234 = vmatmul.f32.gmra.mxu0 %v498
        %v1235 = vpop.f32.mrf.mxu0
        %v1236 = vadd.f32 %v1123, %v1235
        %1237 = vmatmul.f32.gmra.mxu0 %v499
        %v1238 = vpop.f32.mrf.mxu0
        %v1239 = vadd.f32 %v1126, %v1238
        %1240 = vmatmul.f32.gmra.mxu0 %v500
        %v1241 = vpop.f32.mrf.mxu0
        %v1242 = vadd.f32 %v1129, %v1241
        %1243 = vmatmul.f32.gmra.mxu0 %v501
        %v1244 = vpop.f32.mrf.mxu0
        %v1245 = vadd.f32 %v1132, %v1244
        %1246 = vmatmul.f32.gmra.mxu0 %v502
        %v1247 = vpop.f32.mrf.mxu0
        %v1248 = vadd.f32 %v1135, %v1247
        %1249 = vmatmul.f32.gmra.mxu0 %v503
        %v1250 = vpop.f32.mrf.mxu0
        %v1251 = vadd.f32 %v1138, %v1250
        %1252 = vmatmul.f32.gmra.mxu0 %v504
        %v1253 = vpop.f32.mrf.mxu0
        %v1254 = vadd.f32 %v1141, %v1253
        %1255 = vmatmul.f32.gmra.mxu0 %v505
        %v1256 = vpop.f32.mrf.mxu0
        %v1257 = vadd.f32 %v1144, %v1256
        %1258 = vmatmul.f32.gmra.mxu0 %v506
        %v1259 = vpop.f32.mrf.mxu0
        %v1260 = vadd.f32 %v1147, %v1259
        %1261 = vmatmul.f32.gmra.mxu0 %v507
        %v1262 = vpop.f32.mrf.mxu0
        %v1263 = vadd.f32 %v1150, %v1262
        %1264 = vmatmul.f32.gmra.mxu0 %v508
        %v1265 = vpop.f32.mrf.mxu0
        %v1266 = vadd.f32 %v1153, %v1265
        %1267 = vmatmul.f32.gmra.mxu0 %v509
        %v1268 = vpop.f32.mrf.mxu0
        %v1269 = vadd.f32 %v1156, %v1268
        %1270 = vdwg.mxu0
        %1271 = vmatpush.msra.mxu0 %v750
        %1272 = vmatpush.msra.mxu0 %v749
        %1273 = vmatpush.msra.mxu0 %v748
        %1274 = vmatpush.msra.mxu0 %v747
        %1275 = vmatpush.msra.mxu0 %v746
        %1276 = vmatpush.msra.mxu0 %v745
        %1277 = vmatpush.msra.mxu0 %v744
        %1278 = vmatpush.msra.mxu0 %v743
        %1279 = vmatpush.msra.mxu0 %v742
        %1280 = vmatpush.msra.mxu0 %v741
        %1281 = vmatpush.msra.mxu0 %v740
        %1282 = vmatpush.msra.mxu0 %v739
        %1283 = vmatpush.msra.mxu0 %v738
        %1284 = vmatpush.msra.mxu0 %v737
        %1285 = vmatpush.msra.mxu0 %v736
        %1286 = vmatpush.msra.mxu0 %v735
        %1287 = vmatmul.f32.gmra.mxu0 %v510
        %v1288 = vpop.f32.mrf.mxu0
        %v1289 = vadd.f32 %v1176, %v1288
        %1290 = vmatmul.f32.gmra.mxu0 %v511
        %v1291 = vpop.f32.mrf.mxu0
        %v1292 = vadd.f32 %v1179, %v1291
        %1293 = vmatmul.f32.gmra.mxu0 %v512
        %v1294 = vpop.f32.mrf.mxu0
        %v1295 = vadd.f32 %v1182, %v1294
        %1296 = vmatmul.f32.gmra.mxu0 %v513
        %v1297 = vpop.f32.mrf.mxu0
        %v1298 = vadd.f32 %v1185, %v1297
        %1299 = vmatmul.f32.gmra.mxu0 %v514
        %v1300 = vpop.f32.mrf.mxu0
        %v1301 = vadd.f32 %v1188, %v1300
        %1302 = vmatmul.f32.gmra.mxu0 %v515
        %v1303 = vpop.f32.mrf.mxu0
        %v1304 = vadd.f32 %v1191, %v1303
        %1305 = vmatmul.f32.gmra.mxu0 %v516
        %v1306 = vpop.f32.mrf.mxu0
        %v1307 = vadd.f32 %v1194, %v1306
        %1308 = vmatmul.f32.gmra.mxu0 %v517
        %v1309 = vpop.f32.mrf.mxu0
        %v1310 = vadd.f32 %v1197, %v1309
        %1311 = vmatmul.f32.gmra.mxu0 %v518
        %v1312 = vpop.f32.mrf.mxu0
        %v1313 = vadd.f32 %v1200, %v1312
        %1314 = vmatmul.f32.gmra.mxu0 %v519
        %v1315 = vpop.f32.mrf.mxu0
        %v1316 = vadd.f32 %v1203, %v1315
        %1317 = vmatmul.f32.gmra.mxu0 %v520
        %v1318 = vpop.f32.mrf.mxu0
        %v1319 = vadd.f32 %v1206, %v1318
        %1320 = vmatmul.f32.gmra.mxu0 %v521
        %v1321 = vpop.f32.mrf.mxu0
        %v1322 = vadd.f32 %v1209, %v1321
        %1323 = vmatmul.f32.gmra.mxu0 %v522
        %v1324 = vpop.f32.mrf.mxu0
        %v1325 = vadd.f32 %v1212, %v1324
        %1326 = vmatmul.f32.gmra.mxu0 %v523
        %v1327 = vpop.f32.mrf.mxu0
        %v1328 = vadd.f32 %v1215, %v1327
        %1329 = vmatmul.f32.gmra.mxu0 %v524
        %v1330 = vpop.f32.mrf.mxu0
        %v1331 = vadd.f32 %v1218, %v1330
        %1332 = vmatmul.f32.gmra.mxu0 %v525
        %v1333 = vpop.f32.mrf.mxu0
        %v1334 = vadd.f32 %v1221, %v1333
        %1335 = vmatmul.f32.gmra.mxu0 %v526
        %v1336 = vpop.f32.mrf.mxu0
        %v1337 = vadd.f32 %v1224, %v1336
        %1338 = vmatmul.f32.gmra.mxu0 %v527
        %v1339 = vpop.f32.mrf.mxu0
        %v1340 = vadd.f32 %v1227, %v1339
        %1341 = vmatmul.f32.gmra.mxu0 %v528
        %v1342 = vpop.f32.mrf.mxu0
        %v1343 = vadd.f32 %v1230, %v1342
        %1344 = vmatmul.f32.gmra.mxu0 %v529
        %v1345 = vpop.f32.mrf.mxu0
        %v1346 = vadd.f32 %v1233, %v1345
        %1347 = vmatmul.f32.gmra.mxu0 %v530
        %v1348 = vpop.f32.mrf.mxu0
        %v1349 = vadd.f32 %v1236, %v1348
        %1350 = vmatmul.f32.gmra.mxu0 %v531
        %v1351 = vpop.f32.mrf.mxu0
        %v1352 = vadd.f32 %v1239, %v1351
        %1353 = vmatmul.f32.gmra.mxu0 %v532
        %v1354 = vpop.f32.mrf.mxu0
        %v1355 = vadd.f32 %v1242, %v1354
        %1356 = vmatmul.f32.gmra.mxu0 %v533
        %v1357 = vpop.f32.mrf.mxu0
        %v1358 = vadd.f32 %v1245, %v1357
        %1359 = vmatmul.f32.gmra.mxu0 %v534
        %v1360 = vpop.f32.mrf.mxu0
        %v1361 = vadd.f32 %v1248, %v1360
        %1362 = vmatmul.f32.gmra.mxu0 %v535
        %v1363 = vpop.f32.mrf.mxu0
        %v1364 = vadd.f32 %v1251, %v1363
        %1365 = vmatmul.f32.gmra.mxu0 %v536
        %v1366 = vpop.f32.mrf.mxu0
        %v1367 = vadd.f32 %v1254, %v1366
        %1368 = vmatmul.f32.gmra.mxu0 %v537
        %v1369 = vpop.f32.mrf.mxu0
        %v1370 = vadd.f32 %v1257, %v1369
        %1371 = vmatmul.f32.gmra.mxu0 %v538
        %v1372 = vpop.f32.mrf.mxu0
        %v1373 = vadd.f32 %v1260, %v1372
        %1374 = vmatmul.f32.gmra.mxu0 %v539
        %v1375 = vpop.f32.mrf.mxu0
        %v1376 = vadd.f32 %v1263, %v1375
        %1377 = vmatmul.f32.gmra.mxu0 %v540
        %v1378 = vpop.f32.mrf.mxu0
        %v1379 = vadd.f32 %v1266, %v1378
        %1380 = vmatmul.f32.gmra.mxu0 %v541
        %v1381 = vpop.f32.mrf.mxu0
        %v1382 = vadd.f32 %v1269, %v1381
        %1383 = vdwg.mxu0
        %1384 = vmatpush.msra.mxu0 %v766
        %1385 = vmatpush.msra.mxu0 %v765
        %1386 = vmatpush.msra.mxu0 %v764
        %1387 = vmatpush.msra.mxu0 %v763
        %1388 = vmatpush.msra.mxu0 %v762
        %1389 = vmatpush.msra.mxu0 %v761
        %1390 = vmatpush.msra.mxu0 %v760
        %1391 = vmatpush.msra.mxu0 %v759
        %1392 = vmatpush.msra.mxu0 %v758
        %1393 = vmatpush.msra.mxu0 %v757
        %1394 = vmatpush.msra.mxu0 %v756
        %1395 = vmatpush.msra.mxu0 %v755
        %1396 = vmatpush.msra.mxu0 %v754
        %1397 = vmatpush.msra.mxu0 %v753
        %1398 = vmatpush.msra.mxu0 %v752
        %1399 = vmatpush.msra.mxu0 %v751
        %1400 = vmatmul.f32.gmra.mxu0 %v542
        %v1401 = vpop.f32.mrf.mxu0
        %v1402 = vadd.f32 %v1289, %v1401
        %1403 = vmatmul.f32.gmra.mxu0 %v543
        %v1404 = vpop.f32.mrf.mxu0
        %v1405 = vadd.f32 %v1292, %v1404
        %1406 = vmatmul.f32.gmra.mxu0 %v544
        %v1407 = vpop.f32.mrf.mxu0
        %v1408 = vadd.f32 %v1295, %v1407
        %1409 = vmatmul.f32.gmra.mxu0 %v545
        %v1410 = vpop.f32.mrf.mxu0
        %v1411 = vadd.f32 %v1298, %v1410
        %1412 = vmatmul.f32.gmra.mxu0 %v546
        %v1413 = vpop.f32.mrf.mxu0
        %v1414 = vadd.f32 %v1301, %v1413
        %1415 = vmatmul.f32.gmra.mxu0 %v547
        %v1416 = vpop.f32.mrf.mxu0
        %v1417 = vadd.f32 %v1304, %v1416
        %1418 = vmatmul.f32.gmra.mxu0 %v548
        %v1419 = vpop.f32.mrf.mxu0
        %v1420 = vadd.f32 %v1307, %v1419
        %1421 = vmatmul.f32.gmra.mxu0 %v549
        %v1422 = vpop.f32.mrf.mxu0
        %v1423 = vadd.f32 %v1310, %v1422
        %1424 = vmatmul.f32.gmra.mxu0 %v550
        %v1425 = vpop.f32.mrf.mxu0
        %v1426 = vadd.f32 %v1313, %v1425
        %1427 = vmatmul.f32.gmra.mxu0 %v551
        %v1428 = vpop.f32.mrf.mxu0
        %v1429 = vadd.f32 %v1316, %v1428
        %1430 = vmatmul.f32.gmra.mxu0 %v552
        %v1431 = vpop.f32.mrf.mxu0
        %v1432 = vadd.f32 %v1319, %v1431
        %1433 = vmatmul.f32.gmra.mxu0 %v553
        %v1434 = vpop.f32.mrf.mxu0
        %v1435 = vadd.f32 %v1322, %v1434
        %1436 = vmatmul.f32.gmra.mxu0 %v554
        %v1437 = vpop.f32.mrf.mxu0
        %v1438 = vadd.f32 %v1325, %v1437
        %1439 = vmatmul.f32.gmra.mxu0 %v555
        %v1440 = vpop.f32.mrf.mxu0
        %v1441 = vadd.f32 %v1328, %v1440
        %1442 = vmatmul.f32.gmra.mxu0 %v556
        %v1443 = vpop.f32.mrf.mxu0
        %v1444 = vadd.f32 %v1331, %v1443
        %1445 = vmatmul.f32.gmra.mxu0 %v557
        %v1446 = vpop.f32.mrf.mxu0
        %v1447 = vadd.f32 %v1334, %v1446
        %1448 = vmatmul.f32.gmra.mxu0 %v558
        %v1449 = vpop.f32.mrf.mxu0
        %v1450 = vadd.f32 %v1337, %v1449
        %1451 = vmatmul.f32.gmra.mxu0 %v559
        %v1452 = vpop.f32.mrf.mxu0
        %v1453 = vadd.f32 %v1340, %v1452
        %1454 = vmatmul.f32.gmra.mxu0 %v560
        %v1455 = vpop.f32.mrf.mxu0
        %v1456 = vadd.f32 %v1343, %v1455
        %1457 = vmatmul.f32.gmra.mxu0 %v561
        %v1458 = vpop.f32.mrf.mxu0
        %v1459 = vadd.f32 %v1346, %v1458
        %1460 = vmatmul.f32.gmra.mxu0 %v562
        %v1461 = vpop.f32.mrf.mxu0
        %v1462 = vadd.f32 %v1349, %v1461
        %1463 = vmatmul.f32.gmra.mxu0 %v563
        %v1464 = vpop.f32.mrf.mxu0
        %v1465 = vadd.f32 %v1352, %v1464
        %1466 = vmatmul.f32.gmra.mxu0 %v564
        %v1467 = vpop.f32.mrf.mxu0
        %v1468 = vadd.f32 %v1355, %v1467
        %1469 = vmatmul.f32.gmra.mxu0 %v565
        %v1470 = vpop.f32.mrf.mxu0
        %v1471 = vadd.f32 %v1358, %v1470
        %1472 = vmatmul.f32.gmra.mxu0 %v566
        %v1473 = vpop.f32.mrf.mxu0
        %v1474 = vadd.f32 %v1361, %v1473
        %1475 = vmatmul.f32.gmra.mxu0 %v567
        %v1476 = vpop.f32.mrf.mxu0
        %v1477 = vadd.f32 %v1364, %v1476
        %1478 = vmatmul.f32.gmra.mxu0 %v568
        %v1479 = vpop.f32.mrf.mxu0
        %v1480 = vadd.f32 %v1367, %v1479
        %1481 = vmatmul.f32.gmra.mxu0 %v569
        %v1482 = vpop.f32.mrf.mxu0
        %v1483 = vadd.f32 %v1370, %v1482
        %1484 = vmatmul.f32.gmra.mxu0 %v570
        %v1485 = vpop.f32.mrf.mxu0
        %v1486 = vadd.f32 %v1373, %v1485
        %1487 = vmatmul.f32.gmra.mxu0 %v571
        %v1488 = vpop.f32.mrf.mxu0
        %v1489 = vadd.f32 %v1376, %v1488
        %1490 = vmatmul.f32.gmra.mxu0 %v572
        %v1491 = vpop.f32.mrf.mxu0
        %v1492 = vadd.f32 %v1379, %v1491
        %1493 = vmatmul.f32.gmra.mxu0 %v573
        %v1494 = vpop.f32.mrf.mxu0
        %v1495 = vadd.f32 %v1382, %v1494
        %1496 = vdwg.mxu0
        %1497 = vmatpush.msra.mxu0 %v782
        %1498 = vmatpush.msra.mxu0 %v781
        %1499 = vmatpush.msra.mxu0 %v780
        %1500 = vmatpush.msra.mxu0 %v779
        %1501 = vmatpush.msra.mxu0 %v778
        %1502 = vmatpush.msra.mxu0 %v777
        %1503 = vmatpush.msra.mxu0 %v776
        %1504 = vmatpush.msra.mxu0 %v775
        %1505 = vmatpush.msra.mxu0 %v774
        %1506 = vmatpush.msra.mxu0 %v773
        %1507 = vmatpush.msra.mxu0 %v772
        %1508 = vmatpush.msra.mxu0 %v771
        %1509 = vmatpush.msra.mxu0 %v770
        %1510 = vmatpush.msra.mxu0 %v769
        %1511 = vmatpush.msra.mxu0 %v768
        %1512 = vmatpush.msra.mxu0 %v767
        %1513 = vmatmul.f32.gmra.mxu0 %v575
        %v1514 = vpop.f32.mrf.mxu0
        %v1515 = vadd.f32 %v1402, %v1514
        %1516 = vmatmul.f32.gmra.mxu0 %v576
        %v1517 = vpop.f32.mrf.mxu0
        %v1518 = vadd.f32 %v1405, %v1517
        %1519 = vmatmul.f32.gmra.mxu0 %v577
        %v1520 = vpop.f32.mrf.mxu0
        %v1521 = vadd.f32 %v1408, %v1520
        %1522 = vmatmul.f32.gmra.mxu0 %v578
        %v1523 = vpop.f32.mrf.mxu0
        %v1524 = vadd.f32 %v1411, %v1523
        %1525 = vmatmul.f32.gmra.mxu0 %v579
        %v1526 = vpop.f32.mrf.mxu0
        %v1527 = vadd.f32 %v1414, %v1526
        %1528 = vmatmul.f32.gmra.mxu0 %v580
        %v1529 = vpop.f32.mrf.mxu0
        %v1530 = vadd.f32 %v1417, %v1529
        %1531 = vmatmul.f32.gmra.mxu0 %v581
        %v1532 = vpop.f32.mrf.mxu0
        %v1533 = vadd.f32 %v1420, %v1532
        %1534 = vmatmul.f32.gmra.mxu0 %v582
        %v1535 = vpop.f32.mrf.mxu0
        %v1536 = vadd.f32 %v1423, %v1535
        %1537 = vmatmul.f32.gmra.mxu0 %v583
        %v1538 = vpop.f32.mrf.mxu0
        %v1539 = vadd.f32 %v1426, %v1538
        %1540 = vmatmul.f32.gmra.mxu0 %v584
        %v1541 = vpop.f32.mrf.mxu0
        %v1542 = vadd.f32 %v1429, %v1541
        %1543 = vmatmul.f32.gmra.mxu0 %v585
        %v1544 = vpop.f32.mrf.mxu0
        %v1545 = vadd.f32 %v1432, %v1544
        %1546 = vmatmul.f32.gmra.mxu0 %v586
        %v1547 = vpop.f32.mrf.mxu0
        %v1548 = vadd.f32 %v1435, %v1547
        %1549 = vmatmul.f32.gmra.mxu0 %v587
        %v1550 = vpop.f32.mrf.mxu0
        %v1551 = vadd.f32 %v1438, %v1550
        %1552 = vmatmul.f32.gmra.mxu0 %v588
        %v1553 = vpop.f32.mrf.mxu0
        %v1554 = vadd.f32 %v1441, %v1553
        %1555 = vmatmul.f32.gmra.mxu0 %v589
        %v1556 = vpop.f32.mrf.mxu0
        %v1557 = vadd.f32 %v1444, %v1556
        %1558 = vmatmul.f32.gmra.mxu0 %v590
        %v1559 = vpop.f32.mrf.mxu0
        %v1560 = vadd.f32 %v1447, %v1559
        %1561 = vmatmul.f32.gmra.mxu0 %v591
        %v1562 = vpop.f32.mrf.mxu0
        %v1563 = vadd.f32 %v1450, %v1562
        %1564 = vmatmul.f32.gmra.mxu0 %v592
        %v1565 = vpop.f32.mrf.mxu0
        %v1566 = vadd.f32 %v1453, %v1565
        %1567 = vmatmul.f32.gmra.mxu0 %v593
        %v1568 = vpop.f32.mrf.mxu0
        %v1569 = vadd.f32 %v1456, %v1568
        %1570 = vmatmul.f32.gmra.mxu0 %v594
        %v1571 = vpop.f32.mrf.mxu0
        %v1572 = vadd.f32 %v1459, %v1571
        %1573 = vmatmul.f32.gmra.mxu0 %v595
        %v1574 = vpop.f32.mrf.mxu0
        %v1575 = vadd.f32 %v1462, %v1574
        %1576 = vmatmul.f32.gmra.mxu0 %v596
        %v1577 = vpop.f32.mrf.mxu0
        %v1578 = vadd.f32 %v1465, %v1577
        %1579 = vmatmul.f32.gmra.mxu0 %v597
        %v1580 = vpop.f32.mrf.mxu0
        %v1581 = vadd.f32 %v1468, %v1580
        %1582 = vmatmul.f32.gmra.mxu0 %v598
        %v1583 = vpop.f32.mrf.mxu0
        %v1584 = vadd.f32 %v1471, %v1583
        %1585 = vmatmul.f32.gmra.mxu0 %v599
        %v1586 = vpop.f32.mrf.mxu0
        %v1587 = vadd.f32 %v1474, %v1586
        %1588 = vmatmul.f32.gmra.mxu0 %v600
        %v1589 = vpop.f32.mrf.mxu0
        %v1590 = vadd.f32 %v1477, %v1589
        %1591 = vmatmul.f32.gmra.mxu0 %v601
        %v1592 = vpop.f32.mrf.mxu0
        %v1593 = vadd.f32 %v1480, %v1592
        %1594 = vmatmul.f32.gmra.mxu0 %v602
        %v1595 = vpop.f32.mrf.mxu0
        %v1596 = vadd.f32 %v1483, %v1595
        %1597 = vmatmul.f32.gmra.mxu0 %v603
        %v1598 = vpop.f32.mrf.mxu0
        %v1599 = vadd.f32 %v1486, %v1598
        %1600 = vmatmul.f32.gmra.mxu0 %v604
        %v1601 = vpop.f32.mrf.mxu0
        %v1602 = vadd.f32 %v1489, %v1601
        %1603 = vmatmul.f32.gmra.mxu0 %v605
        %v1604 = vpop.f32.mrf.mxu0
        %v1605 = vadd.f32 %v1492, %v1604
        %1606 = vmatmul.f32.gmra.mxu0 %v606
        %v1607 = vpop.f32.mrf.mxu0
        %v1608 = vadd.f32 %v1495, %v1607
        %1609 = vdwg.mxu0
        %1610 = vmatpush.msra.mxu0 %v798
        %1611 = vmatpush.msra.mxu0 %v797
        %1612 = vmatpush.msra.mxu0 %v796
        %1613 = vmatpush.msra.mxu0 %v795
        %1614 = vmatpush.msra.mxu0 %v794
        %1615 = vmatpush.msra.mxu0 %v793
        %1616 = vmatpush.msra.mxu0 %v792
        %1617 = vmatpush.msra.mxu0 %v791
        %1618 = vmatpush.msra.mxu0 %v790
        %1619 = vmatpush.msra.mxu0 %v789
        %1620 = vmatpush.msra.mxu0 %v788
        %1621 = vmatpush.msra.mxu0 %v787
        %1622 = vmatpush.msra.mxu0 %v786
        %1623 = vmatpush.msra.mxu0 %v785
        %1624 = vmatpush.msra.mxu0 %v784
        %1625 = vmatpush.msra.mxu0 %v783
        %1626 = vmatmul.f32.gmra.mxu0 %v607
        %v1627 = vpop.f32.mrf.mxu0
        %v1628 = vadd.f32 %v1515, %v1627
        %1629 = vmatmul.f32.gmra.mxu0 %v608
        %v1630 = vpop.f32.mrf.mxu0
        %v1631 = vadd.f32 %v1518, %v1630
        %1632 = vmatmul.f32.gmra.mxu0 %v609
        %v1633 = vpop.f32.mrf.mxu0
        %v1634 = vadd.f32 %v1521, %v1633
        %1635 = vmatmul.f32.gmra.mxu0 %v610
        %v1636 = vpop.f32.mrf.mxu0
        %v1637 = vadd.f32 %v1524, %v1636
        %1638 = vmatmul.f32.gmra.mxu0 %v611
        %v1639 = vpop.f32.mrf.mxu0
        %v1640 = vadd.f32 %v1527, %v1639
        %1641 = vmatmul.f32.gmra.mxu0 %v612
        %v1642 = vpop.f32.mrf.mxu0
        %v1643 = vadd.f32 %v1530, %v1642
        %1644 = vmatmul.f32.gmra.mxu0 %v613
        %v1645 = vpop.f32.mrf.mxu0
        %v1646 = vadd.f32 %v1533, %v1645
        %1647 = vmatmul.f32.gmra.mxu0 %v614
        %v1648 = vpop.f32.mrf.mxu0
        %v1649 = vadd.f32 %v1536, %v1648
        %1650 = vmatmul.f32.gmra.mxu0 %v615
        %v1651 = vpop.f32.mrf.mxu0
        %v1652 = vadd.f32 %v1539, %v1651
        %1653 = vmatmul.f32.gmra.mxu0 %v616
        %v1654 = vpop.f32.mrf.mxu0
        %v1655 = vadd.f32 %v1542, %v1654
        %1656 = vmatmul.f32.gmra.mxu0 %v617
        %v1657 = vpop.f32.mrf.mxu0
        %v1658 = vadd.f32 %v1545, %v1657
        %1659 = vmatmul.f32.gmra.mxu0 %v618
        %v1660 = vpop.f32.mrf.mxu0
        %v1661 = vadd.f32 %v1548, %v1660
        %1662 = vmatmul.f32.gmra.mxu0 %v619
        %v1663 = vpop.f32.mrf.mxu0
        %v1664 = vadd.f32 %v1551, %v1663
        %1665 = vmatmul.f32.gmra.mxu0 %v620
        %v1666 = vpop.f32.mrf.mxu0
        %v1667 = vadd.f32 %v1554, %v1666
        %1668 = vmatmul.f32.gmra.mxu0 %v621
        %v1669 = vpop.f32.mrf.mxu0
        %v1670 = vadd.f32 %v1557, %v1669
        %1671 = vmatmul.f32.gmra.mxu0 %v622
        %v1672 = vpop.f32.mrf.mxu0
        %v1673 = vadd.f32 %v1560, %v1672
        %1674 = vmatmul.f32.gmra.mxu0 %v623
        %v1675 = vpop.f32.mrf.mxu0
        %v1676 = vadd.f32 %v1563, %v1675
        %1677 = vmatmul.f32.gmra.mxu0 %v624
        %v1678 = vpop.f32.mrf.mxu0
        %v1679 = vadd.f32 %v1566, %v1678
        %1680 = vmatmul.f32.gmra.mxu0 %v625
        %v1681 = vpop.f32.mrf.mxu0
        %v1682 = vadd.f32 %v1569, %v1681
        %1683 = vmatmul.f32.gmra.mxu0 %v626
        %v1684 = vpop.f32.mrf.mxu0
        %v1685 = vadd.f32 %v1572, %v1684
        %1686 = vmatmul.f32.gmra.mxu0 %v627
        %v1687 = vpop.f32.mrf.mxu0
        %v1688 = vadd.f32 %v1575, %v1687
        %1689 = vmatmul.f32.gmra.mxu0 %v628
        %v1690 = vpop.f32.mrf.mxu0
        %v1691 = vadd.f32 %v1578, %v1690
        %1692 = vmatmul.f32.gmra.mxu0 %v629
        %v1693 = vpop.f32.mrf.mxu0
        %v1694 = vadd.f32 %v1581, %v1693
        %1695 = vmatmul.f32.gmra.mxu0 %v630
        %v1696 = vpop.f32.mrf.mxu0
        %v1697 = vadd.f32 %v1584, %v1696
        %1698 = vmatmul.f32.gmra.mxu0 %v631
        %v1699 = vpop.f32.mrf.mxu0
        %v1700 = vadd.f32 %v1587, %v1699
        %1701 = vmatmul.f32.gmra.mxu0 %v632
        %v1702 = vpop.f32.mrf.mxu0
        %v1703 = vadd.f32 %v1590, %v1702
        %1704 = vmatmul.f32.gmra.mxu0 %v633
        %v1705 = vpop.f32.mrf.mxu0
        %v1706 = vadd.f32 %v1593, %v1705
        %1707 = vmatmul.f32.gmra.mxu0 %v634
        %v1708 = vpop.f32.mrf.mxu0
        %v1709 = vadd.f32 %v1596, %v1708
        %1710 = vmatmul.f32.gmra.mxu0 %v635
        %v1711 = vpop.f32.mrf.mxu0
        %v1712 = vadd.f32 %v1599, %v1711
        %1713 = vmatmul.f32.gmra.mxu0 %v636
        %v1714 = vpop.f32.mrf.mxu0
        %v1715 = vadd.f32 %v1602, %v1714
        %1716 = vmatmul.f32.gmra.mxu0 %v637
        %v1717 = vpop.f32.mrf.mxu0
        %v1718 = vadd.f32 %v1605, %v1717
        %1719 = vmatmul.f32.gmra.mxu0 %v638
        %v1720 = vpop.f32.mrf.mxu0
        %v1721 = vadd.f32 %v1608, %v1720
        %1722 = vdwg.mxu0
        %1723 = vmatpush.msra.mxu0 %v814
        %1724 = vmatpush.msra.mxu0 %v813
        %1725 = vmatpush.msra.mxu0 %v812
        %1726 = vmatpush.msra.mxu0 %v811
        %1727 = vmatpush.msra.mxu0 %v810
        %1728 = vmatpush.msra.mxu0 %v809
        %1729 = vmatpush.msra.mxu0 %v808
        %1730 = vmatpush.msra.mxu0 %v807
        %1731 = vmatpush.msra.mxu0 %v806
        %1732 = vmatpush.msra.mxu0 %v805
        %1733 = vmatpush.msra.mxu0 %v804
        %1734 = vmatpush.msra.mxu0 %v803
        %1735 = vmatpush.msra.mxu0 %v802
        %1736 = vmatpush.msra.mxu0 %v801
        %1737 = vmatpush.msra.mxu0 %v800
        %1738 = vmatpush.msra.mxu0 %v799
        %1739 = vmatmul.f32.gmra.mxu0 %v639
        %v1740 = vpop.f32.mrf.mxu0
        %v1741 = vadd.f32 %v1628, %v1740
        %1742 = vmatmul.f32.gmra.mxu0 %v640
        %v1743 = vpop.f32.mrf.mxu0
        %v1744 = vadd.f32 %v1631, %v1743
        %1745 = vmatmul.f32.gmra.mxu0 %v641
        %v1746 = vpop.f32.mrf.mxu0
        %v1747 = vadd.f32 %v1634, %v1746
        %1748 = vmatmul.f32.gmra.mxu0 %v642
        %v1749 = vpop.f32.mrf.mxu0
        %v1750 = vadd.f32 %v1637, %v1749
        %1751 = vmatmul.f32.gmra.mxu0 %v643
        %v1752 = vpop.f32.mrf.mxu0
        %v1753 = vadd.f32 %v1640, %v1752
        %1754 = vmatmul.f32.gmra.mxu0 %v644
        %v1755 = vpop.f32.mrf.mxu0
        %v1756 = vadd.f32 %v1643, %v1755
        %1757 = vmatmul.f32.gmra.mxu0 %v645
        %v1758 = vpop.f32.mrf.mxu0
        %v1759 = vadd.f32 %v1646, %v1758
        %1760 = vmatmul.f32.gmra.mxu0 %v646
        %v1761 = vpop.f32.mrf.mxu0
        %v1762 = vadd.f32 %v1649, %v1761
        %1763 = vmatmul.f32.gmra.mxu0 %v647
        %v1764 = vpop.f32.mrf.mxu0
        %v1765 = vadd.f32 %v1652, %v1764
        %1766 = vmatmul.f32.gmra.mxu0 %v648
        %v1767 = vpop.f32.mrf.mxu0
        %v1768 = vadd.f32 %v1655, %v1767
        %1769 = vmatmul.f32.gmra.mxu0 %v649
        %v1770 = vpop.f32.mrf.mxu0
        %v1771 = vadd.f32 %v1658, %v1770
        %1772 = vmatmul.f32.gmra.mxu0 %v650
        %v1773 = vpop.f32.mrf.mxu0
        %v1774 = vadd.f32 %v1661, %v1773
        %1775 = vmatmul.f32.gmra.mxu0 %v651
        %v1776 = vpop.f32.mrf.mxu0
        %v1777 = vadd.f32 %v1664, %v1776
        %1778 = vmatmul.f32.gmra.mxu0 %v652
        %v1779 = vpop.f32.mrf.mxu0
        %v1780 = vadd.f32 %v1667, %v1779
        %1781 = vmatmul.f32.gmra.mxu0 %v653
        %v1782 = vpop.f32.mrf.mxu0
        %v1783 = vadd.f32 %v1670, %v1782
        %1784 = vmatmul.f32.gmra.mxu0 %v654
        %v1785 = vpop.f32.mrf.mxu0
        %v1786 = vadd.f32 %v1673, %v1785
        %1787 = vmatmul.f32.gmra.mxu0 %v655
        %v1788 = vpop.f32.mrf.mxu0
        %v1789 = vadd.f32 %v1676, %v1788
        %1790 = vmatmul.f32.gmra.mxu0 %v656
        %v1791 = vpop.f32.mrf.mxu0
        %v1792 = vadd.f32 %v1679, %v1791
        %1793 = vmatmul.f32.gmra.mxu0 %v657
        %v1794 = vpop.f32.mrf.mxu0
        %v1795 = vadd.f32 %v1682, %v1794
        %1796 = vmatmul.f32.gmra.mxu0 %v658
        %v1797 = vpop.f32.mrf.mxu0
        %v1798 = vadd.f32 %v1685, %v1797
        %1799 = vmatmul.f32.gmra.mxu0 %v659
        %v1800 = vpop.f32.mrf.mxu0
        %v1801 = vadd.f32 %v1688, %v1800
        %1802 = vmatmul.f32.gmra.mxu0 %v660
        %v1803 = vpop.f32.mrf.mxu0
        %v1804 = vadd.f32 %v1691, %v1803
        %1805 = vmatmul.f32.gmra.mxu0 %v661
        %v1806 = vpop.f32.mrf.mxu0
        %v1807 = vadd.f32 %v1694, %v1806
        %1808 = vmatmul.f32.gmra.mxu0 %v662
        %v1809 = vpop.f32.mrf.mxu0
        %v1810 = vadd.f32 %v1697, %v1809
        %1811 = vmatmul.f32.gmra.mxu0 %v663
        %v1812 = vpop.f32.mrf.mxu0
        %v1813 = vadd.f32 %v1700, %v1812
        %1814 = vmatmul.f32.gmra.mxu0 %v664
        %v1815 = vpop.f32.mrf.mxu0
        %v1816 = vadd.f32 %v1703, %v1815
        %1817 = vmatmul.f32.gmra.mxu0 %v665
        %v1818 = vpop.f32.mrf.mxu0
        %v1819 = vadd.f32 %v1706, %v1818
        %1820 = vmatmul.f32.gmra.mxu0 %v666
        %v1821 = vpop.f32.mrf.mxu0
        %v1822 = vadd.f32 %v1709, %v1821
        %1823 = vmatmul.f32.gmra.mxu0 %v667
        %v1824 = vpop.f32.mrf.mxu0
        %v1825 = vadd.f32 %v1712, %v1824
        %1826 = vmatmul.f32.gmra.mxu0 %v668
        %v1827 = vpop.f32.mrf.mxu0
        %v1828 = vadd.f32 %v1715, %v1827
        %1829 = vmatmul.f32.gmra.mxu0 %v669
        %v1830 = vpop.f32.mrf.mxu0
        %v1831 = vadd.f32 %v1718, %v1830
        %1832 = vmatmul.f32.gmra.mxu0 %v670
        %v1833 = vpop.f32.mrf.mxu0
        %v1834 = vadd.f32 %v1721, %v1833
        %1835 = vdwg.mxu0
        %v1836 = vmax.f32 %v1741, 0.0
        %v1837 = vmax.f32 %v1744, 0.0
        %v1838 = vmax.f32 %v1747, 0.0
        %v1839 = vmax.f32 %v1750, 0.0
        %v1840 = vmax.f32 %v1753, 0.0
        %v1841 = vmax.f32 %v1756, 0.0
        %v1842 = vmax.f32 %v1759, 0.0
        %v1843 = vmax.f32 %v1762, 0.0
        %v1844 = vmax.f32 %v1765, 0.0
        %v1845 = vmax.f32 %v1768, 0.0
        %v1846 = vmax.f32 %v1771, 0.0
        %v1847 = vmax.f32 %v1774, 0.0
        %v1848 = vmax.f32 %v1777, 0.0
        %v1849 = vmax.f32 %v1780, 0.0
        %v1850 = vmax.f32 %v1783, 0.0
        %v1851 = vmax.f32 %v1786, 0.0
        %v1852 = vmax.f32 %v1789, 0.0
        %v1853 = vmax.f32 %v1792, 0.0
        %v1854 = vmax.f32 %v1795, 0.0
        %v1855 = vmax.f32 %v1798, 0.0
        %v1856 = vmax.f32 %v1801, 0.0
        %v1857 = vmax.f32 %v1804, 0.0
        %v1858 = vmax.f32 %v1807, 0.0
        %v1859 = vmax.f32 %v1810, 0.0
        %v1860 = vmax.f32 %v1813, 0.0
        %v1861 = vmax.f32 %v1816, 0.0
        %v1862 = vmax.f32 %v1819, 0.0
        %v1863 = vmax.f32 %v1822, 0.0
        %v1864 = vmax.f32 %v1825, 0.0
        %v1865 = vmax.f32 %v1828, 0.0
        %v1866 = vmax.f32 %v1831, 0.0
        %v1867 = vmax.f32 %v1834, 0.0
        %1868 = vst [vmem:[%s285 + $0x1] sm:$0xff] %v1836
        %1869 = vst [vmem:[%s285 + $0x9] sm:$0xff] %v1837
        %1870 = vst [vmem:[%s285 + $0x19] sm:$0xff] %v1838
        %1871 = vst [vmem:[%s285 + $0x21] sm:$0xff] %v1839
        %1872 = vst [vmem:[%s285 + $0x31] sm:$0xff] %v1840
        %1873 = vst [vmem:[%s285 + $0x39] sm:$0xff] %v1841
        %1874 = vst [vmem:[%s285 + $0x49] sm:$0xff] %v1842
        %1875 = vst [vmem:[%s285 + $0x51] sm:$0xff] %v1843
        %1876 = vst [vmem:[%s285 + $0x61] sm:$0xff] %v1844
        %1877 = vst [vmem:[%s285 + $0x69] sm:$0xff] %v1845
        %1878 = vst [vmem:[%s285 + $0x79] sm:$0xff] %v1846
        %1879 = vst [vmem:[%s285 + $0x81] sm:$0xff] %v1847
        %1880 = vst [vmem:[%s285 + $0x91] sm:$0xff] %v1848
        %1881 = vst [vmem:[%s285 + $0x99] sm:$0xff] %v1849
        %1882 = vst [vmem:[%s285 + $0xa9] sm:$0xff] %v1850
        %1883 = vst [vmem:[%s285 + $0xb1] sm:$0xff] %v1851
        %1884 = vst [vmem:[%s285 + $0xc1] sm:$0xff] %v1852
        %1885 = vst [vmem:[%s285 + $0xc9] sm:$0xff] %v1853
        %1886 = vst [vmem:[%s285 + $0xd9] sm:$0xff] %v1854
        %1887 = vst [vmem:[%s285 + $0xe1] sm:$0xff] %v1855
        %1888 = vst [vmem:[%s285 + $0xf1] sm:$0xff] %v1856
        %1889 = vst [vmem:[%s285 + $0xf9] sm:$0xff] %v1857
        %1890 = vst [vmem:[%s285 + $0x109] sm:$0xff] %v1858
        %1891 = vst [vmem:[%s285 + $0x111] sm:$0xff] %v1859
        %1892 = vst [vmem:[%s285 + $0x121] sm:$0xff] %v1860
        %1893 = vst [vmem:[%s285 + $0x129] sm:$0xff] %v1861
        %1894 = vst [vmem:[%s285 + $0x139] sm:$0xff] %v1862
        %1895 = vst [vmem:[%s285 + $0x141] sm:$0xff] %v1863
        %1896 = vst [vmem:[%s285 + $0x151] sm:$0xff] %v1864
        %1897 = vst [vmem:[%s285 + $0x159] sm:$0xff] %v1865
        %1898 = vst [vmem:[%s285 + $0x169] sm:$0xff] %v1866
        %1899 = vst [vmem:[%s285 + $0x171] sm:$0xff] %v1867
        %v1900 = vld [vmem:[#allocation2] sm:$0xff]
        %v1901 = vld [vmem:[#allocation2 + $0x8] sm:$0xff]
        %v1902 = vld [vmem:[#allocation2 + $0x18] sm:$0xff]
        %v1903 = vld [vmem:[#allocation2 + $0x20] sm:$0xff]
        %v1904 = vld [vmem:[#allocation2 + $0x30] sm:$0xff]
        %v1905 = vld [vmem:[#allocation2 + $0x38] sm:$0xff]
        %v1906 = vld [vmem:[#allocation2 + $0x48] sm:$0xff]
        %v1907 = vld [vmem:[#allocation2 + $0x50] sm:$0xff]
        %v1908 = vld [vmem:[#allocation2 + $0x60] sm:$0xff]
        %v1909 = vld [vmem:[#allocation2 + $0x68] sm:$0xff]
        %v1910 = vld [vmem:[#allocation2 + $0x78] sm:$0xff]
        %v1911 = vld [vmem:[#allocation2 + $0x80] sm:$0xff]
        %v1912 = vld [vmem:[#allocation2 + $0x90] sm:$0xff]
        %v1913 = vld [vmem:[#allocation2 + $0x98] sm:$0xff]
        %v1914 = vld [vmem:[#allocation2 + $0xa8] sm:$0xff]
        %v1915 = vld [vmem:[#allocation2 + $0xb0] sm:$0xff]
        %v1916 = vld [vmem:[#allocation2 + $0xc0] sm:$0xff]
        %v1917 = vld [vmem:[#allocation2 + $0xc8] sm:$0xff]
        %v1918 = vld [vmem:[#allocation2 + $0xd8] sm:$0xff]
        %v1919 = vld [vmem:[#allocation2 + $0xe0] sm:$0xff]
        %v1920 = vld [vmem:[#allocation2 + $0xf0] sm:$0xff]
        %v1921 = vld [vmem:[#allocation2 + $0xf8] sm:$0xff]
        %v1922 = vld [vmem:[#allocation2 + $0x108] sm:$0xff]
        %v1923 = vld [vmem:[#allocation2 + $0x110] sm:$0xff]
        %v1924 = vld [vmem:[#allocation2 + $0x120] sm:$0xff]
        %v1925 = vld [vmem:[#allocation2 + $0x128] sm:$0xff]
        %v1926 = vld [vmem:[#allocation2 + $0x138] sm:$0xff]
        %v1927 = vld [vmem:[#allocation2 + $0x140] sm:$0xff]
        %v1928 = vld [vmem:[#allocation2 + $0x150] sm:$0xff]
        %v1929 = vld [vmem:[#allocation2 + $0x158] sm:$0xff]
        %v1930 = vld [vmem:[#allocation2 + $0x168] sm:$0xff]
        %v1931 = vld [vmem:[#allocation2 + $0x170] sm:$0xff]
        %v1932 = vld [vmem:[#allocation2 + $0x1] sm:$0xff]
        %v1933 = vld [vmem:[#allocation2 + $0x9] sm:$0xff]
        %v1934 = vld [vmem:[#allocation2 + $0x19] sm:$0xff]
        %v1935 = vld [vmem:[#allocation2 + $0x21] sm:$0xff]
        %v1936 = vld [vmem:[#allocation2 + $0x31] sm:$0xff]
        %v1937 = vld [vmem:[#allocation2 + $0x39] sm:$0xff]
        %v1938 = vld [vmem:[#allocation2 + $0x49] sm:$0xff]
        %v1939 = vld [vmem:[#allocation2 + $0x51] sm:$0xff]
        %v1940 = vld [vmem:[#allocation2 + $0x61] sm:$0xff]
        %v1941 = vld [vmem:[#allocation2 + $0x69] sm:$0xff]
        %v1942 = vld [vmem:[#allocation2 + $0x79] sm:$0xff]
        %v1943 = vld [vmem:[#allocation2 + $0x81] sm:$0xff]
        %v1944 = vld [vmem:[#allocation2 + $0x91] sm:$0xff]
        %v1945 = vld [vmem:[#allocation2 + $0x99] sm:$0xff]
        %v1946 = vld [vmem:[#allocation2 + $0xa9] sm:$0xff]
        %v1947 = vld [vmem:[#allocation2 + $0xb1] sm:$0xff]
        %v1948 = vld [vmem:[#allocation2 + $0xc1] sm:$0xff]
        %v1949 = vld [vmem:[#allocation2 + $0xc9] sm:$0xff]
        %v1950 = vld [vmem:[#allocation2 + $0xd9] sm:$0xff]
        %v1951 = vld [vmem:[#allocation2 + $0xe1] sm:$0xff]
        %v1952 = vld [vmem:[#allocation2 + $0xf1] sm:$0xff]
        %v1953 = vld [vmem:[#allocation2 + $0xf9] sm:$0xff]
        %v1954 = vld [vmem:[#allocation2 + $0x109] sm:$0xff]
        %v1955 = vld [vmem:[#allocation2 + $0x111] sm:$0xff]
        %v1956 = vld [vmem:[#allocation2 + $0x121] sm:$0xff]
        %v1957 = vld [vmem:[#allocation2 + $0x129] sm:$0xff]
        %v1958 = vld [vmem:[#allocation2 + $0x139] sm:$0xff]
        %v1959 = vld [vmem:[#allocation2 + $0x141] sm:$0xff]
        %v1960 = vld [vmem:[#allocation2 + $0x151] sm:$0xff]
        %v1961 = vld [vmem:[#allocation2 + $0x159] sm:$0xff]
        %v1962 = vld [vmem:[#allocation2 + $0x169] sm:$0xff]
        %v1963 = vld [vmem:[#allocation2 + $0x171] sm:$0xff]
        %v1964 = vld [vmem:[#allocation2 + $0x2] sm:$0xff]
        %v1965 = vld [vmem:[#allocation2 + $0xa] sm:$0xff]
        %v1966 = vld [vmem:[#allocation2 + $0x1a] sm:$0xff]
        %v1967 = vld [vmem:[#allocation2 + $0x22] sm:$0xff]
        %v1968 = vld [vmem:[#allocation2 + $0x32] sm:$0xff]
        %v1969 = vld [vmem:[#allocation2 + $0x3a] sm:$0xff]
        %v1970 = vld [vmem:[#allocation2 + $0x4a] sm:$0xff]
        %v1971 = vld [vmem:[#allocation2 + $0x52] sm:$0xff]
        %v1972 = vld [vmem:[#allocation2 + $0x62] sm:$0xff]
        %v1973 = vld [vmem:[#allocation2 + $0x6a] sm:$0xff]
        %v1974 = vld [vmem:[#allocation2 + $0x7a] sm:$0xff]
        %v1975 = vld [vmem:[#allocation2 + $0x82] sm:$0xff]
        %v1976 = vld [vmem:[#allocation2 + $0x92] sm:$0xff]
        %v1977 = vld [vmem:[#allocation2 + $0x9a] sm:$0xff]
        %v1978 = vld [vmem:[#allocation2 + $0xaa] sm:$0xff]
        %v1979 = vld [vmem:[#allocation2 + $0xb2] sm:$0xff]
        %v1980 = vld [vmem:[#allocation2 + $0xc2] sm:$0xff]
        %v1981 = vld [vmem:[#allocation2 + $0xca] sm:$0xff]
        %v1982 = vld [vmem:[#allocation2 + $0xda] sm:$0xff]
        %v1983 = vld [vmem:[#allocation2 + $0xe2] sm:$0xff]
        %v1984 = vld [vmem:[#allocation2 + $0xf2] sm:$0xff]
        %v1985 = vld [vmem:[#allocation2 + $0xfa] sm:$0xff]
        %v1986 = vld [vmem:[#allocation2 + $0x10a] sm:$0xff]
        %v1987 = vld [vmem:[#allocation2 + $0x112] sm:$0xff]
        %v1988 = vld [vmem:[#allocation2 + $0x122] sm:$0xff]
        %v1989 = vld [vmem:[#allocation2 + $0x12a] sm:$0xff]
        %v1990 = vld [vmem:[#allocation2 + $0x13a] sm:$0xff]
        %v1991 = vld [vmem:[#allocation2 + $0x142] sm:$0xff]
        %v1992 = vld [vmem:[#allocation2 + $0x152] sm:$0xff]
        %v1993 = vld [vmem:[#allocation2 + $0x15a] sm:$0xff]
        %v1994 = vld [vmem:[#allocation2 + $0x16a] sm:$0xff]
        %v1995 = vld [vmem:[#allocation2 + $0x172] sm:$0xff]
        %v1996 = vld [vmem:[%s285] sm:$0xff]
        %v1997 = vld [vmem:[%s285 + $0x8] sm:$0xff]
        %v1998 = vld [vmem:[%s285 + $0x18] sm:$0xff]
        %v1999 = vld [vmem:[%s285 + $0x20] sm:$0xff]
        %v2000 = vld [vmem:[%s285 + $0x30] sm:$0xff]
        %v2001 = vld [vmem:[%s285 + $0x38] sm:$0xff]
        %v2002 = vld [vmem:[%s285 + $0x48] sm:$0xff]
        %v2003 = vld [vmem:[%s285 + $0x50] sm:$0xff]
        %v2004 = vld [vmem:[%s285 + $0x60] sm:$0xff]
        %v2005 = vld [vmem:[%s285 + $0x68] sm:$0xff]
        %v2006 = vld [vmem:[%s285 + $0x78] sm:$0xff]
        %v2007 = vld [vmem:[%s285 + $0x80] sm:$0xff]
        %v2008 = vld [vmem:[%s285 + $0x90] sm:$0xff]
        %v2009 = vld [vmem:[%s285 + $0x98] sm:$0xff]
        %v2010 = vld [vmem:[%s285 + $0xa8] sm:$0xff]
        %v2011 = vld [vmem:[%s285 + $0xb0] sm:$0xff]
        %v2012 = vld [vmem:[%s285 + $0xc0] sm:$0xff]
        %v2013 = vld [vmem:[%s285 + $0xc8] sm:$0xff]
        %v2014 = vld [vmem:[%s285 + $0xd8] sm:$0xff]
        %v2015 = vld [vmem:[%s285 + $0xe0] sm:$0xff]
        %v2016 = vld [vmem:[%s285 + $0xf0] sm:$0xff]
        %v2017 = vld [vmem:[%s285 + $0xf8] sm:$0xff]
        %v2018 = vld [vmem:[%s285 + $0x108] sm:$0xff]
        %v2019 = vld [vmem:[%s285 + $0x110] sm:$0xff]
        %v2020 = vld [vmem:[%s285 + $0x120] sm:$0xff]
        %v2021 = vld [vmem:[%s285 + $0x128] sm:$0xff]
        %v2022 = vld [vmem:[%s285 + $0x138] sm:$0xff]
        %v2023 = vld [vmem:[%s285 + $0x140] sm:$0xff]
        %v2024 = vld [vmem:[%s285 + $0x150] sm:$0xff]
        %v2025 = vld [vmem:[%s285 + $0x158] sm:$0xff]
        %v2026 = vld [vmem:[%s285 + $0x168] sm:$0xff]
        %v2027 = vld [vmem:[%s285 + $0x170] sm:$0xff]
        %v2028 = vld [vmem:[%s285 + $0x1] sm:$0xff]
        %v2029 = vld [vmem:[%s285 + $0x9] sm:$0xff]
        %v2030 = vld [vmem:[%s285 + $0x19] sm:$0xff]
        %v2031 = vld [vmem:[%s285 + $0x21] sm:$0xff]
        %v2032 = vld [vmem:[%s285 + $0x31] sm:$0xff]
        %v2033 = vld [vmem:[%s285 + $0x39] sm:$0xff]
        %v2034 = vld [vmem:[%s285 + $0x49] sm:$0xff]
        %v2035 = vld [vmem:[%s285 + $0x51] sm:$0xff]
        %v2036 = vld [vmem:[%s285 + $0x61] sm:$0xff]
        %v2037 = vld [vmem:[%s285 + $0x69] sm:$0xff]
        %v2038 = vld [vmem:[%s285 + $0x79] sm:$0xff]
        %v2039 = vld [vmem:[%s285 + $0x81] sm:$0xff]
        %v2040 = vld [vmem:[%s285 + $0x91] sm:$0xff]
        %v2041 = vld [vmem:[%s285 + $0x99] sm:$0xff]
        %v2042 = vld [vmem:[%s285 + $0xa9] sm:$0xff]
        %v2043 = vld [vmem:[%s285 + $0xb1] sm:$0xff]
        %v2044 = vld [vmem:[%s285 + $0xc1] sm:$0xff]
        %v2045 = vld [vmem:[%s285 + $0xc9] sm:$0xff]
        %v2046 = vld [vmem:[%s285 + $0xd9] sm:$0xff]
        %v2047 = vld [vmem:[%s285 + $0xe1] sm:$0xff]
        %v2048 = vld [vmem:[%s285 + $0xf1] sm:$0xff]
        %v2049 = vld [vmem:[%s285 + $0xf9] sm:$0xff]
        %v2050 = vld [vmem:[%s285 + $0x109] sm:$0xff]
        %v2051 = vld [vmem:[%s285 + $0x111] sm:$0xff]
        %v2052 = vld [vmem:[%s285 + $0x121] sm:$0xff]
        %v2053 = vld [vmem:[%s285 + $0x129] sm:$0xff]
        %v2054 = vld [vmem:[%s285 + $0x139] sm:$0xff]
        %v2055 = vld [vmem:[%s285 + $0x141] sm:$0xff]
        %v2056 = vld [vmem:[%s285 + $0x151] sm:$0xff]
        %v2057 = vld [vmem:[%s285 + $0x159] sm:$0xff]
        %v2058 = vld [vmem:[%s285 + $0x169] sm:$0xff]
        %v2059 = vld [vmem:[%s285 + $0x171] sm:$0xff]
        %v2060 = vld [vmem:[%s285 + $0x2] sm:$0xff]
        %v2061 = vld [vmem:[%s285 + $0xa] sm:$0xff]
        %v2062 = vld [vmem:[%s285 + $0x1a] sm:$0xff]
        %v2063 = vld [vmem:[%s285 + $0x22] sm:$0xff]
        %v2064 = vld [vmem:[%s285 + $0x32] sm:$0xff]
        %v2065 = vld [vmem:[%s285 + $0x3a] sm:$0xff]
        %v2066 = vld [vmem:[%s285 + $0x4a] sm:$0xff]
        %v2067 = vld [vmem:[%s285 + $0x52] sm:$0xff]
        %v2068 = vld [vmem:[%s285 + $0x62] sm:$0xff]
        %v2069 = vld [vmem:[%s285 + $0x6a] sm:$0xff]
        %v2070 = vld [vmem:[%s285 + $0x7a] sm:$0xff]
        %v2071 = vld [vmem:[%s285 + $0x82] sm:$0xff]
        %v2072 = vld [vmem:[%s285 + $0x92] sm:$0xff]
        %v2073 = vld [vmem:[%s285 + $0x9a] sm:$0xff]
        %v2074 = vld [vmem:[%s285 + $0xaa] sm:$0xff]
        %v2075 = vld [vmem:[%s285 + $0xb2] sm:$0xff]
        %v2076 = vld [vmem:[%s285 + $0xc2] sm:$0xff]
        %v2077 = vld [vmem:[%s285 + $0xca] sm:$0xff]
        %v2078 = vld [vmem:[%s285 + $0xda] sm:$0xff]
        %v2079 = vld [vmem:[%s285 + $0xe2] sm:$0xff]
        %v2080 = vld [vmem:[%s285 + $0xf2] sm:$0xff]
        %v2081 = vld [vmem:[%s285 + $0xfa] sm:$0xff]
        %v2082 = vld [vmem:[%s285 + $0x10a] sm:$0xff]
        %v2083 = vld [vmem:[%s285 + $0x112] sm:$0xff]
        %v2084 = vld [vmem:[%s285 + $0x122] sm:$0xff]
        %v2085 = vld [vmem:[%s285 + $0x12a] sm:$0xff]
        %v2086 = vld [vmem:[%s285 + $0x13a] sm:$0xff]
        %v2087 = vld [vmem:[%s285 + $0x142] sm:$0xff]
        %v2088 = vld [vmem:[%s285 + $0x152] sm:$0xff]
        %v2089 = vld [vmem:[%s285 + $0x15a] sm:$0xff]
        %v2090 = vld [vmem:[%s285 + $0x16a] sm:$0xff]
        %v2091 = vld [vmem:[%s285 + $0x172] sm:$0xff]
        %v2092 = vld [vmem:[%s574] sm:$0xff]
        %v2093 = vld [vmem:[%s574 + $0x8] sm:$0xff]
        %v2094 = vld [vmem:[%s574 + $0x18] sm:$0xff]
        %v2095 = vld [vmem:[%s574 + $0x20] sm:$0xff]
        %v2096 = vld [vmem:[%s574 + $0x30] sm:$0xff]
        %v2097 = vld [vmem:[%s574 + $0x38] sm:$0xff]
        %v2098 = vld [vmem:[%s574 + $0x48] sm:$0xff]
        %v2099 = vld [vmem:[%s574 + $0x50] sm:$0xff]
        %v2100 = vld [vmem:[%s574 + $0x60] sm:$0xff]
        %v2101 = vld [vmem:[%s574 + $0x68] sm:$0xff]
        %v2102 = vld [vmem:[%s574 + $0x78] sm:$0xff]
        %v2103 = vld [vmem:[%s574 + $0x80] sm:$0xff]
        %v2104 = vld [vmem:[%s574 + $0x90] sm:$0xff]
        %v2105 = vld [vmem:[%s574 + $0x98] sm:$0xff]
        %v2106 = vld [vmem:[%s574 + $0xa8] sm:$0xff]
        %v2107 = vld [vmem:[%s574 + $0xb0] sm:$0xff]
        %v2108 = vld [vmem:[%s574 + $0xc0] sm:$0xff]
        %v2109 = vld [vmem:[%s574 + $0xc8] sm:$0xff]
        %v2110 = vld [vmem:[%s574 + $0xd8] sm:$0xff]
        %v2111 = vld [vmem:[%s574 + $0xe0] sm:$0xff]
        %v2112 = vld [vmem:[%s574 + $0xf0] sm:$0xff]
        %v2113 = vld [vmem:[%s574 + $0xf8] sm:$0xff]
        %v2114 = vld [vmem:[%s574 + $0x108] sm:$0xff]
        %v2115 = vld [vmem:[%s574 + $0x110] sm:$0xff]
        %v2116 = vld [vmem:[%s574 + $0x120] sm:$0xff]
        %v2117 = vld [vmem:[%s574 + $0x128] sm:$0xff]
        %v2118 = vld [vmem:[%s574 + $0x138] sm:$0xff]
        %v2119 = vld [vmem:[%s574 + $0x140] sm:$0xff]
        %v2120 = vld [vmem:[%s574 + $0x150] sm:$0xff]
        %v2121 = vld [vmem:[%s574 + $0x158] sm:$0xff]
        %v2122 = vld [vmem:[%s574 + $0x168] sm:$0xff]
        %v2123 = vld [vmem:[%s574 + $0x170] sm:$0xff]
        %v2124 = vld [vmem:[%s574 + $0x1] sm:$0xff]
        %v2125 = vld [vmem:[%s574 + $0x9] sm:$0xff]
        %v2126 = vld [vmem:[%s574 + $0x19] sm:$0xff]
        %v2127 = vld [vmem:[%s574 + $0x21] sm:$0xff]
        %v2128 = vld [vmem:[%s574 + $0x31] sm:$0xff]
        %v2129 = vld [vmem:[%s574 + $0x39] sm:$0xff]
        %v2130 = vld [vmem:[%s574 + $0x49] sm:$0xff]
        %v2131 = vld [vmem:[%s574 + $0x51] sm:$0xff]
        %v2132 = vld [vmem:[%s574 + $0x61] sm:$0xff]
        %v2133 = vld [vmem:[%s574 + $0x69] sm:$0xff]
        %v2134 = vld [vmem:[%s574 + $0x79] sm:$0xff]
        %v2135 = vld [vmem:[%s574 + $0x81] sm:$0xff]
        %v2136 = vld [vmem:[%s574 + $0x91] sm:$0xff]
        %v2137 = vld [vmem:[%s574 + $0x99] sm:$0xff]
        %v2138 = vld [vmem:[%s574 + $0xa9] sm:$0xff]
        %v2139 = vld [vmem:[%s574 + $0xb1] sm:$0xff]
        %v2140 = vld [vmem:[%s574 + $0xc1] sm:$0xff]
        %v2141 = vld [vmem:[%s574 + $0xc9] sm:$0xff]
        %v2142 = vld [vmem:[%s574 + $0xd9] sm:$0xff]
        %v2143 = vld [vmem:[%s574 + $0xe1] sm:$0xff]
        %v2144 = vld [vmem:[%s574 + $0xf1] sm:$0xff]
        %v2145 = vld [vmem:[%s574 + $0xf9] sm:$0xff]
        %v2146 = vld [vmem:[%s574 + $0x109] sm:$0xff]
        %v2147 = vld [vmem:[%s574 + $0x111] sm:$0xff]
        %v2148 = vld [vmem:[%s574 + $0x121] sm:$0xff]
        %v2149 = vld [vmem:[%s574 + $0x129] sm:$0xff]
        %v2150 = vld [vmem:[%s574 + $0x139] sm:$0xff]
        %v2151 = vld [vmem:[%s574 + $0x141] sm:$0xff]
        %v2152 = vld [vmem:[%s574 + $0x151] sm:$0xff]
        %v2153 = vld [vmem:[%s574 + $0x159] sm:$0xff]
        %v2154 = vld [vmem:[%s574 + $0x169] sm:$0xff]
        %v2155 = vld [vmem:[%s574 + $0x171] sm:$0xff]
        %v2156 = vld [vmem:[%s574 + $0x2] sm:$0xff]
        %v2157 = vld [vmem:[%s574 + $0xa] sm:$0xff]
        %v2158 = vld [vmem:[%s574 + $0x1a] sm:$0xff]
        %v2159 = vld [vmem:[%s574 + $0x22] sm:$0xff]
        %v2160 = vld [vmem:[%s574 + $0x32] sm:$0xff]
        %v2161 = vld [vmem:[%s574 + $0x3a] sm:$0xff]
        %v2162 = vld [vmem:[%s574 + $0x4a] sm:$0xff]
        %v2163 = vld [vmem:[%s574 + $0x52] sm:$0xff]
        %v2164 = vld [vmem:[%s574 + $0x62] sm:$0xff]
        %v2165 = vld [vmem:[%s574 + $0x6a] sm:$0xff]
        %v2166 = vld [vmem:[%s574 + $0x7a] sm:$0xff]
        %v2167 = vld [vmem:[%s574 + $0x82] sm:$0xff]
        %v2168 = vld [vmem:[%s574 + $0x92] sm:$0xff]
        %v2169 = vld [vmem:[%s574 + $0x9a] sm:$0xff]
        %v2170 = vld [vmem:[%s574 + $0xaa] sm:$0xff]
        %v2171 = vld [vmem:[%s574 + $0xb2] sm:$0xff]
        %v2172 = vld [vmem:[%s574 + $0xc2] sm:$0xff]
        %v2173 = vld [vmem:[%s574 + $0xca] sm:$0xff]
        %v2174 = vld [vmem:[%s574 + $0xda] sm:$0xff]
        %v2175 = vld [vmem:[%s574 + $0xe2] sm:$0xff]
        %v2176 = vld [vmem:[%s574 + $0xf2] sm:$0xff]
        %v2177 = vld [vmem:[%s574 + $0xfa] sm:$0xff]
        %v2178 = vld [vmem:[%s574 + $0x10a] sm:$0xff]
        %v2179 = vld [vmem:[%s574 + $0x112] sm:$0xff]
        %v2180 = vld [vmem:[%s574 + $0x122] sm:$0xff]
        %v2181 = vld [vmem:[%s574 + $0x12a] sm:$0xff]
        %v2182 = vld [vmem:[%s574 + $0x13a] sm:$0xff]
        %v2183 = vld [vmem:[%s574 + $0x142] sm:$0xff]
        %v2184 = vld [vmem:[%s574 + $0x152] sm:$0xff]
        %v2185 = vld [vmem:[%s574 + $0x15a] sm:$0xff]
        %v2186 = vld [vmem:[%s574 + $0x16a] sm:$0xff]
        %v2187 = vld [vmem:[%s574 + $0x172] sm:$0xff]
        %v2188 = vld [vmem:[#allocation8] sm:$0xff]
        %v2189 = vld [vmem:[#allocation8 + $0x8] sm:$0xff]
        %v2190 = vld [vmem:[#allocation8 + $0x10] sm:$0xff]
        %v2191 = vld [vmem:[#allocation8 + $0x18] sm:$0xff]
        %v2192 = vld [vmem:[#allocation8 + $0x20] sm:$0xff]
        %v2193 = vld [vmem:[#allocation8 + $0x28] sm:$0xff]
        %v2194 = vld [vmem:[#allocation8 + $0x30] sm:$0xff]
        %v2195 = vld [vmem:[#allocation8 + $0x38] sm:$0xff]
        %v2196 = vld [vmem:[#allocation8 + $0x40] sm:$0xff]
        %v2197 = vld [vmem:[#allocation8 + $0x48] sm:$0xff]
        %v2198 = vld [vmem:[#allocation8 + $0x50] sm:$0xff]
        %v2199 = vld [vmem:[#allocation8 + $0x58] sm:$0xff]
        %v2200 = vld [vmem:[#allocation8 + $0x60] sm:$0xff]
        %v2201 = vld [vmem:[#allocation8 + $0x68] sm:$0xff]
        %v2202 = vld [vmem:[#allocation8 + $0x70] sm:$0xff]
        %v2203 = vld [vmem:[#allocation8 + $0x78] sm:$0xff]
        %v2204 = vld [vmem:[#allocation8 + $0x80] sm:$0xff]
        %v2205 = vld [vmem:[#allocation8 + $0x88] sm:$0xff]
        %v2206 = vld [vmem:[#allocation8 + $0x90] sm:$0xff]
        %v2207 = vld [vmem:[#allocation8 + $0x98] sm:$0xff]
        %v2208 = vld [vmem:[#allocation8 + $0xa0] sm:$0xff]
        %v2209 = vld [vmem:[#allocation8 + $0xa8] sm:$0xff]
        %v2210 = vld [vmem:[#allocation8 + $0xb0] sm:$0xff]
        %v2211 = vld [vmem:[#allocation8 + $0xb8] sm:$0xff]
        %v2212 = vld [vmem:[#allocation8 + $0xc0] sm:$0xff]
        %v2213 = vld [vmem:[#allocation8 + $0xc8] sm:$0xff]
        %v2214 = vld [vmem:[#allocation8 + $0xd0] sm:$0xff]
        %v2215 = vld [vmem:[#allocation8 + $0xd8] sm:$0xff]
        %v2216 = vld [vmem:[#allocation8 + $0xe0] sm:$0xff]
        %v2217 = vld [vmem:[#allocation8 + $0xe8] sm:$0xff]
        %v2218 = vld [vmem:[#allocation8 + $0xf0] sm:$0xff]
        %v2219 = vld [vmem:[#allocation8 + $0xf8] sm:$0xff]
        %v2220 = vld [vmem:[#allocation8 + $0x100] sm:$0xff]
        %v2221 = vld [vmem:[#allocation8 + $0x108] sm:$0xff]
        %v2222 = vld [vmem:[#allocation8 + $0x110] sm:$0xff]
        %v2223 = vld [vmem:[#allocation8 + $0x118] sm:$0xff]
        %v2224 = vld [vmem:[#allocation8 + $0x120] sm:$0xff]
        %v2225 = vld [vmem:[#allocation8 + $0x128] sm:$0xff]
        %v2226 = vld [vmem:[#allocation8 + $0x130] sm:$0xff]
        %v2227 = vld [vmem:[#allocation8 + $0x138] sm:$0xff]
        %v2228 = vld [vmem:[#allocation8 + $0x140] sm:$0xff]
        %v2229 = vld [vmem:[#allocation8 + $0x148] sm:$0xff]
        %v2230 = vld [vmem:[#allocation8 + $0x150] sm:$0xff]
        %v2231 = vld [vmem:[#allocation8 + $0x158] sm:$0xff]
        %v2232 = vld [vmem:[#allocation8 + $0x160] sm:$0xff]
        %v2233 = vld [vmem:[#allocation8 + $0x168] sm:$0xff]
        %v2234 = vld [vmem:[#allocation8 + $0x170] sm:$0xff]
        %v2235 = vld [vmem:[#allocation8 + $0x178] sm:$0xff]
        %v2236 = vld [vmem:[#allocation8 + $0x180] sm:$0xff]
        %v2237 = vld [vmem:[#allocation8 + $0x188] sm:$0xff]
        %v2238 = vld [vmem:[#allocation8 + $0x190] sm:$0xff]
        %v2239 = vld [vmem:[#allocation8 + $0x198] sm:$0xff]
        %v2240 = vld [vmem:[#allocation8 + $0x1a0] sm:$0xff]
        %v2241 = vld [vmem:[#allocation8 + $0x1a8] sm:$0xff]
        %v2242 = vld [vmem:[#allocation8 + $0x1b0] sm:$0xff]
        %v2243 = vld [vmem:[#allocation8 + $0x1b8] sm:$0xff]
        %v2244 = vld [vmem:[#allocation8 + $0x1c0] sm:$0xff]
        %v2245 = vld [vmem:[#allocation8 + $0x1c8] sm:$0xff]
        %v2246 = vld [vmem:[#allocation8 + $0x1d0] sm:$0xff]
        %v2247 = vld [vmem:[#allocation8 + $0x1d8] sm:$0xff]
        %v2248 = vld [vmem:[#allocation8 + $0x1e0] sm:$0xff]
        %v2249 = vld [vmem:[#allocation8 + $0x1e8] sm:$0xff]
        %v2250 = vld [vmem:[#allocation8 + $0x1f0] sm:$0xff]
        %v2251 = vld [vmem:[#allocation8 + $0x1f8] sm:$0xff]
        %v2252 = vld [vmem:[#allocation8 + $0x200] sm:$0xff]
        %v2253 = vld [vmem:[#allocation8 + $0x208] sm:$0xff]
        %v2254 = vld [vmem:[#allocation8 + $0x210] sm:$0xff]
        %v2255 = vld [vmem:[#allocation8 + $0x218] sm:$0xff]
        %v2256 = vld [vmem:[#allocation8 + $0x220] sm:$0xff]
        %v2257 = vld [vmem:[#allocation8 + $0x228] sm:$0xff]
        %v2258 = vld [vmem:[#allocation8 + $0x230] sm:$0xff]
        %v2259 = vld [vmem:[#allocation8 + $0x238] sm:$0xff]
        %v2260 = vld [vmem:[#allocation8 + $0x240] sm:$0xff]
        %v2261 = vld [vmem:[#allocation8 + $0x248] sm:$0xff]
        %v2262 = vld [vmem:[#allocation8 + $0x250] sm:$0xff]
        %v2263 = vld [vmem:[#allocation8 + $0x258] sm:$0xff]
        %v2264 = vld [vmem:[#allocation8 + $0x260] sm:$0xff]
        %v2265 = vld [vmem:[#allocation8 + $0x268] sm:$0xff]
        %v2266 = vld [vmem:[#allocation8 + $0x270] sm:$0xff]
        %v2267 = vld [vmem:[#allocation8 + $0x278] sm:$0xff]
        %v2268 = vld [vmem:[#allocation8 + $0x280] sm:$0xff]
        %v2269 = vld [vmem:[#allocation8 + $0x288] sm:$0xff]
        %v2270 = vld [vmem:[#allocation8 + $0x290] sm:$0xff]
        %v2271 = vld [vmem:[#allocation8 + $0x298] sm:$0xff]
        %v2272 = vld [vmem:[#allocation8 + $0x2a0] sm:$0xff]
        %v2273 = vld [vmem:[#allocation8 + $0x2a8] sm:$0xff]
        %v2274 = vld [vmem:[#allocation8 + $0x2b0] sm:$0xff]
        %v2275 = vld [vmem:[#allocation8 + $0x2b8] sm:$0xff]
        %v2276 = vld [vmem:[#allocation8 + $0x2c0] sm:$0xff]
        %v2277 = vld [vmem:[#allocation8 + $0x2c8] sm:$0xff]
        %v2278 = vld [vmem:[#allocation8 + $0x2d0] sm:$0xff]
        %v2279 = vld [vmem:[#allocation8 + $0x2d8] sm:$0xff]
        %v2280 = vld [vmem:[#allocation8 + $0x2e0] sm:$0xff]
        %v2281 = vld [vmem:[#allocation8 + $0x2e8] sm:$0xff]
        %v2282 = vld [vmem:[#allocation8 + $0x2f0] sm:$0xff]
        %v2283 = vld [vmem:[#allocation8 + $0x2f8] sm:$0xff]
        %v2284 = vld [vmem:[#allocation8 + $0x300] sm:$0xff]
        %v2285 = vld [vmem:[#allocation8 + $0x308] sm:$0xff]
        %v2286 = vld [vmem:[#allocation8 + $0x310] sm:$0xff]
        %v2287 = vld [vmem:[#allocation8 + $0x318] sm:$0xff]
        %v2288 = vld [vmem:[#allocation8 + $0x320] sm:$0xff]
        %v2289 = vld [vmem:[#allocation8 + $0x328] sm:$0xff]
        %v2290 = vld [vmem:[#allocation8 + $0x330] sm:$0xff]
        %v2291 = vld [vmem:[#allocation8 + $0x338] sm:$0xff]
        %v2292 = vld [vmem:[#allocation8 + $0x340] sm:$0xff]
        %v2293 = vld [vmem:[#allocation8 + $0x348] sm:$0xff]
        %v2294 = vld [vmem:[#allocation8 + $0x350] sm:$0xff]
        %v2295 = vld [vmem:[#allocation8 + $0x358] sm:$0xff]
        %v2296 = vld [vmem:[#allocation8 + $0x360] sm:$0xff]
        %v2297 = vld [vmem:[#allocation8 + $0x368] sm:$0xff]
        %v2298 = vld [vmem:[#allocation8 + $0x370] sm:$0xff]
        %v2299 = vld [vmem:[#allocation8 + $0x378] sm:$0xff]
        %v2300 = vld [vmem:[#allocation8 + $0x380] sm:$0xff]
        %v2301 = vld [vmem:[#allocation8 + $0x388] sm:$0xff]
        %v2302 = vld [vmem:[#allocation8 + $0x390] sm:$0xff]
        %v2303 = vld [vmem:[#allocation8 + $0x398] sm:$0xff]
        %v2304 = vld [vmem:[#allocation8 + $0x3a0] sm:$0xff]
        %v2305 = vld [vmem:[#allocation8 + $0x3a8] sm:$0xff]
        %v2306 = vld [vmem:[#allocation8 + $0x3b0] sm:$0xff]
        %v2307 = vld [vmem:[#allocation8 + $0x3b8] sm:$0xff]
        %v2308 = vld [vmem:[#allocation8 + $0x3c0] sm:$0xff]
        %v2309 = vld [vmem:[#allocation8 + $0x3c8] sm:$0xff]
        %v2310 = vld [vmem:[#allocation8 + $0x3d0] sm:$0xff]
        %v2311 = vld [vmem:[#allocation8 + $0x3d8] sm:$0xff]
        %v2312 = vld [vmem:[#allocation8 + $0x3e0] sm:$0xff]
        %v2313 = vld [vmem:[#allocation8 + $0x3e8] sm:$0xff]
        %v2314 = vld [vmem:[#allocation8 + $0x3f0] sm:$0xff]
        %v2315 = vld [vmem:[#allocation8 + $0x3f8] sm:$0xff]
        %v2316 = vld [vmem:[#allocation8 + $0x400] sm:$0xff]
        %v2317 = vld [vmem:[#allocation8 + $0x408] sm:$0xff]
        %v2318 = vld [vmem:[#allocation8 + $0x410] sm:$0xff]
        %v2319 = vld [vmem:[#allocation8 + $0x418] sm:$0xff]
        %v2320 = vld [vmem:[#allocation8 + $0x420] sm:$0xff]
        %v2321 = vld [vmem:[#allocation8 + $0x428] sm:$0xff]
        %v2322 = vld [vmem:[#allocation8 + $0x430] sm:$0xff]
        %v2323 = vld [vmem:[#allocation8 + $0x438] sm:$0xff]
        %v2324 = vld [vmem:[#allocation8 + $0x440] sm:$0xff]
        %v2325 = vld [vmem:[#allocation8 + $0x448] sm:$0xff]
        %v2326 = vld [vmem:[#allocation8 + $0x450] sm:$0xff]
        %v2327 = vld [vmem:[#allocation8 + $0x458] sm:$0xff]
        %v2328 = vld [vmem:[#allocation8 + $0x460] sm:$0xff]
        %v2329 = vld [vmem:[#allocation8 + $0x468] sm:$0xff]
        %v2330 = vld [vmem:[#allocation8 + $0x470] sm:$0xff]
        %v2331 = vld [vmem:[#allocation8 + $0x478] sm:$0xff]
        %v2332 = vld [vmem:[%s4] sm:$0x1]
        %v2334 = vperm.slane %v2332, 0
        %2336 = vmatpush.msra.mxu0 %v2203
        %2337 = vmatpush.msra.mxu0 %v2202
        %2338 = vmatpush.msra.mxu0 %v2201
        %2339 = vmatpush.msra.mxu0 %v2200
        %2340 = vmatpush.msra.mxu0 %v2199
        %2341 = vmatpush.msra.mxu0 %v2198
        %2342 = vmatpush.msra.mxu0 %v2197
        %2343 = vmatpush.msra.mxu0 %v2196
        %2344 = vmatpush.msra.mxu0 %v2195
        %2345 = vmatpush.msra.mxu0 %v2194
        %2346 = vmatpush.msra.mxu0 %v2193
        %2347 = vmatpush.msra.mxu0 %v2192
        %2348 = vmatpush.msra.mxu0 %v2191
        %2349 = vmatpush.msra.mxu0 %v2190
        %2350 = vmatpush.msra.mxu0 %v2189
        %2351 = vmatpush.msra.mxu0 %v2188
        %2352 = vmatmul.f32.gmra.mxu0 %v1900
        %v2353 = vpop.f32.mrf.mxu0
        %v2354 = vadd.f32 %v2334, %v2353
        %2355 = vmatmul.f32.gmra.mxu0 %v1901
        %v2356 = vpop.f32.mrf.mxu0
        %v2357 = vadd.f32 %v2334, %v2356
        %2358 = vmatmul.f32.gmra.mxu0 %v1902
        %v2359 = vpop.f32.mrf.mxu0
        %v2360 = vadd.f32 %v2334, %v2359
        %2361 = vmatmul.f32.gmra.mxu0 %v1903
        %v2362 = vpop.f32.mrf.mxu0
        %v2363 = vadd.f32 %v2334, %v2362
        %2364 = vmatmul.f32.gmra.mxu0 %v1904
        %v2365 = vpop.f32.mrf.mxu0
        %v2366 = vadd.f32 %v2334, %v2365
        %2367 = vmatmul.f32.gmra.mxu0 %v1905
        %v2368 = vpop.f32.mrf.mxu0
        %v2369 = vadd.f32 %v2334, %v2368
        %2370 = vmatmul.f32.gmra.mxu0 %v1906
        %v2371 = vpop.f32.mrf.mxu0
        %v2372 = vadd.f32 %v2334, %v2371
        %2373 = vmatmul.f32.gmra.mxu0 %v1907
        %v2374 = vpop.f32.mrf.mxu0
        %v2375 = vadd.f32 %v2334, %v2374
        %2376 = vmatmul.f32.gmra.mxu0 %v1908
        %v2377 = vpop.f32.mrf.mxu0
        %v2378 = vadd.f32 %v2334, %v2377
        %2379 = vmatmul.f32.gmra.mxu0 %v1909
        %v2380 = vpop.f32.mrf.mxu0
        %v2381 = vadd.f32 %v2334, %v2380
        %2382 = vmatmul.f32.gmra.mxu0 %v1910
        %v2383 = vpop.f32.mrf.mxu0
        %v2384 = vadd.f32 %v2334, %v2383
        %2385 = vmatmul.f32.gmra.mxu0 %v1911
        %v2386 = vpop.f32.mrf.mxu0
        %v2387 = vadd.f32 %v2334, %v2386
        %2388 = vmatmul.f32.gmra.mxu0 %v1912
        %v2389 = vpop.f32.mrf.mxu0
        %v2390 = vadd.f32 %v2334, %v2389
        %2391 = vmatmul.f32.gmra.mxu0 %v1913
        %v2392 = vpop.f32.mrf.mxu0
        %v2393 = vadd.f32 %v2334, %v2392
        %2394 = vmatmul.f32.gmra.mxu0 %v1914
        %v2395 = vpop.f32.mrf.mxu0
        %v2396 = vadd.f32 %v2334, %v2395
        %2397 = vmatmul.f32.gmra.mxu0 %v1915
        %v2398 = vpop.f32.mrf.mxu0
        %v2399 = vadd.f32 %v2334, %v2398
        %2400 = vmatmul.f32.gmra.mxu0 %v1916
        %v2401 = vpop.f32.mrf.mxu0
        %v2402 = vadd.f32 %v2334, %v2401
        %2403 = vmatmul.f32.gmra.mxu0 %v1917
        %v2404 = vpop.f32.mrf.mxu0
        %v2405 = vadd.f32 %v2334, %v2404
        %2406 = vmatmul.f32.gmra.mxu0 %v1918
        %v2407 = vpop.f32.mrf.mxu0
        %v2408 = vadd.f32 %v2334, %v2407
        %2409 = vmatmul.f32.gmra.mxu0 %v1919
        %v2410 = vpop.f32.mrf.mxu0
        %v2411 = vadd.f32 %v2334, %v2410
        %2412 = vmatmul.f32.gmra.mxu0 %v1920
        %v2413 = vpop.f32.mrf.mxu0
        %v2414 = vadd.f32 %v2334, %v2413
        %2415 = vmatmul.f32.gmra.mxu0 %v1921
        %v2416 = vpop.f32.mrf.mxu0
        %v2417 = vadd.f32 %v2334, %v2416
        %2418 = vmatmul.f32.gmra.mxu0 %v1922
        %v2419 = vpop.f32.mrf.mxu0
        %v2420 = vadd.f32 %v2334, %v2419
        %2421 = vmatmul.f32.gmra.mxu0 %v1923
        %v2422 = vpop.f32.mrf.mxu0
        %v2423 = vadd.f32 %v2334, %v2422
        %2424 = vmatmul.f32.gmra.mxu0 %v1924
        %v2425 = vpop.f32.mrf.mxu0
        %v2426 = vadd.f32 %v2334, %v2425
        %2427 = vmatmul.f32.gmra.mxu0 %v1925
        %v2428 = vpop.f32.mrf.mxu0
        %v2429 = vadd.f32 %v2334, %v2428
        %2430 = vmatmul.f32.gmra.mxu0 %v1926
        %v2431 = vpop.f32.mrf.mxu0
        %v2432 = vadd.f32 %v2334, %v2431
        %2433 = vmatmul.f32.gmra.mxu0 %v1927
        %v2434 = vpop.f32.mrf.mxu0
        %v2435 = vadd.f32 %v2334, %v2434
        %2436 = vmatmul.f32.gmra.mxu0 %v1928
        %v2437 = vpop.f32.mrf.mxu0
        %v2438 = vadd.f32 %v2334, %v2437
        %2439 = vmatmul.f32.gmra.mxu0 %v1929
        %v2440 = vpop.f32.mrf.mxu0
        %v2441 = vadd.f32 %v2334, %v2440
        %2442 = vmatmul.f32.gmra.mxu0 %v1930
        %v2443 = vpop.f32.mrf.mxu0
        %v2444 = vadd.f32 %v2334, %v2443
        %2445 = vmatmul.f32.gmra.mxu0 %v1931
        %v2446 = vpop.f32.mrf.mxu0
        %v2447 = vadd.f32 %v2334, %v2446
        %2448 = vdwg.mxu0
        %2449 = vmatpush.msra.mxu0 %v2219
        %2450 = vmatpush.msra.mxu0 %v2218
        %2451 = vmatpush.msra.mxu0 %v2217
        %2452 = vmatpush.msra.mxu0 %v2216
        %2453 = vmatpush.msra.mxu0 %v2215
        %2454 = vmatpush.msra.mxu0 %v2214
        %2455 = vmatpush.msra.mxu0 %v2213
        %2456 = vmatpush.msra.mxu0 %v2212
        %2457 = vmatpush.msra.mxu0 %v2211
        %2458 = vmatpush.msra.mxu0 %v2210
        %2459 = vmatpush.msra.mxu0 %v2209
        %2460 = vmatpush.msra.mxu0 %v2208
        %2461 = vmatpush.msra.mxu0 %v2207
        %2462 = vmatpush.msra.mxu0 %v2206
        %2463 = vmatpush.msra.mxu0 %v2205
        %2464 = vmatpush.msra.mxu0 %v2204
        %2465 = vmatmul.f32.gmra.mxu0 %v1932
        %v2466 = vpop.f32.mrf.mxu0
        %v2467 = vadd.f32 %v2354, %v2466
        %2468 = vmatmul.f32.gmra.mxu0 %v1933
        %v2469 = vpop.f32.mrf.mxu0
        %v2470 = vadd.f32 %v2357, %v2469
        %2471 = vmatmul.f32.gmra.mxu0 %v1934
        %v2472 = vpop.f32.mrf.mxu0
        %v2473 = vadd.f32 %v2360, %v2472
        %2474 = vmatmul.f32.gmra.mxu0 %v1935
        %v2475 = vpop.f32.mrf.mxu0
        %v2476 = vadd.f32 %v2363, %v2475
        %2477 = vmatmul.f32.gmra.mxu0 %v1936
        %v2478 = vpop.f32.mrf.mxu0
        %v2479 = vadd.f32 %v2366, %v2478
        %2480 = vmatmul.f32.gmra.mxu0 %v1937
        %v2481 = vpop.f32.mrf.mxu0
        %v2482 = vadd.f32 %v2369, %v2481
        %2483 = vmatmul.f32.gmra.mxu0 %v1938
        %v2484 = vpop.f32.mrf.mxu0
        %v2485 = vadd.f32 %v2372, %v2484
        %2486 = vmatmul.f32.gmra.mxu0 %v1939
        %v2487 = vpop.f32.mrf.mxu0
        %v2488 = vadd.f32 %v2375, %v2487
        %2489 = vmatmul.f32.gmra.mxu0 %v1940
        %v2490 = vpop.f32.mrf.mxu0
        %v2491 = vadd.f32 %v2378, %v2490
        %2492 = vmatmul.f32.gmra.mxu0 %v1941
        %v2493 = vpop.f32.mrf.mxu0
        %v2494 = vadd.f32 %v2381, %v2493
        %2495 = vmatmul.f32.gmra.mxu0 %v1942
        %v2496 = vpop.f32.mrf.mxu0
        %v2497 = vadd.f32 %v2384, %v2496
        %2498 = vmatmul.f32.gmra.mxu0 %v1943
        %v2499 = vpop.f32.mrf.mxu0
        %v2500 = vadd.f32 %v2387, %v2499
        %2501 = vmatmul.f32.gmra.mxu0 %v1944
        %v2502 = vpop.f32.mrf.mxu0
        %v2503 = vadd.f32 %v2390, %v2502
        %2504 = vmatmul.f32.gmra.mxu0 %v1945
        %v2505 = vpop.f32.mrf.mxu0
        %v2506 = vadd.f32 %v2393, %v2505
        %2507 = vmatmul.f32.gmra.mxu0 %v1946
        %v2508 = vpop.f32.mrf.mxu0
        %v2509 = vadd.f32 %v2396, %v2508
        %2510 = vmatmul.f32.gmra.mxu0 %v1947
        %v2511 = vpop.f32.mrf.mxu0
        %v2512 = vadd.f32 %v2399, %v2511
        %2513 = vmatmul.f32.gmra.mxu0 %v1948
        %v2514 = vpop.f32.mrf.mxu0
        %v2515 = vadd.f32 %v2402, %v2514
        %2516 = vmatmul.f32.gmra.mxu0 %v1949
        %v2517 = vpop.f32.mrf.mxu0
        %v2518 = vadd.f32 %v2405, %v2517
        %2519 = vmatmul.f32.gmra.mxu0 %v1950
        %v2520 = vpop.f32.mrf.mxu0
        %v2521 = vadd.f32 %v2408, %v2520
        %2522 = vmatmul.f32.gmra.mxu0 %v1951
        %v2523 = vpop.f32.mrf.mxu0
        %v2524 = vadd.f32 %v2411, %v2523
        %2525 = vmatmul.f32.gmra.mxu0 %v1952
        %v2526 = vpop.f32.mrf.mxu0
        %v2527 = vadd.f32 %v2414, %v2526
        %2528 = vmatmul.f32.gmra.mxu0 %v1953
        %v2529 = vpop.f32.mrf.mxu0
        %v2530 = vadd.f32 %v2417, %v2529
        %2531 = vmatmul.f32.gmra.mxu0 %v1954
        %v2532 = vpop.f32.mrf.mxu0
        %v2533 = vadd.f32 %v2420, %v2532
        %2534 = vmatmul.f32.gmra.mxu0 %v1955
        %v2535 = vpop.f32.mrf.mxu0
        %v2536 = vadd.f32 %v2423, %v2535
        %2537 = vmatmul.f32.gmra.mxu0 %v1956
        %v2538 = vpop.f32.mrf.mxu0
        %v2539 = vadd.f32 %v2426, %v2538
        %2540 = vmatmul.f32.gmra.mxu0 %v1957
        %v2541 = vpop.f32.mrf.mxu0
        %v2542 = vadd.f32 %v2429, %v2541
        %2543 = vmatmul.f32.gmra.mxu0 %v1958
        %v2544 = vpop.f32.mrf.mxu0
        %v2545 = vadd.f32 %v2432, %v2544
        %2546 = vmatmul.f32.gmra.mxu0 %v1959
        %v2547 = vpop.f32.mrf.mxu0
        %v2548 = vadd.f32 %v2435, %v2547
        %2549 = vmatmul.f32.gmra.mxu0 %v1960
        %v2550 = vpop.f32.mrf.mxu0
        %v2551 = vadd.f32 %v2438, %v2550
        %2552 = vmatmul.f32.gmra.mxu0 %v1961
        %v2553 = vpop.f32.mrf.mxu0
        %v2554 = vadd.f32 %v2441, %v2553
        %2555 = vmatmul.f32.gmra.mxu0 %v1962
        %v2556 = vpop.f32.mrf.mxu0
        %v2557 = vadd.f32 %v2444, %v2556
        %2558 = vmatmul.f32.gmra.mxu0 %v1963
        %v2559 = vpop.f32.mrf.mxu0
        %v2560 = vadd.f32 %v2447, %v2559
        %2561 = vdwg.mxu0
        %2562 = vmatpush.msra.mxu0 %v2235
        %2563 = vmatpush.msra.mxu0 %v2234
        %2564 = vmatpush.msra.mxu0 %v2233
        %2565 = vmatpush.msra.mxu0 %v2232
        %2566 = vmatpush.msra.mxu0 %v2231
        %2567 = vmatpush.msra.mxu0 %v2230
        %2568 = vmatpush.msra.mxu0 %v2229
        %2569 = vmatpush.msra.mxu0 %v2228
        %2570 = vmatpush.msra.mxu0 %v2227
        %2571 = vmatpush.msra.mxu0 %v2226
        %2572 = vmatpush.msra.mxu0 %v2225
        %2573 = vmatpush.msra.mxu0 %v2224
        %2574 = vmatpush.msra.mxu0 %v2223
        %2575 = vmatpush.msra.mxu0 %v2222
        %2576 = vmatpush.msra.mxu0 %v2221
        %2577 = vmatpush.msra.mxu0 %v2220
        %2578 = vmatmul.f32.gmra.mxu0 %v1964
        %v2579 = vpop.f32.mrf.mxu0
        %v2580 = vadd.f32 %v2467, %v2579
        %2581 = vmatmul.f32.gmra.mxu0 %v1965
        %v2582 = vpop.f32.mrf.mxu0
        %v2583 = vadd.f32 %v2470, %v2582
        %2584 = vmatmul.f32.gmra.mxu0 %v1966
        %v2585 = vpop.f32.mrf.mxu0
        %v2586 = vadd.f32 %v2473, %v2585
        %2587 = vmatmul.f32.gmra.mxu0 %v1967
        %v2588 = vpop.f32.mrf.mxu0
        %v2589 = vadd.f32 %v2476, %v2588
        %2590 = vmatmul.f32.gmra.mxu0 %v1968
        %v2591 = vpop.f32.mrf.mxu0
        %v2592 = vadd.f32 %v2479, %v2591
        %2593 = vmatmul.f32.gmra.mxu0 %v1969
        %v2594 = vpop.f32.mrf.mxu0
        %v2595 = vadd.f32 %v2482, %v2594
        %2596 = vmatmul.f32.gmra.mxu0 %v1970
        %v2597 = vpop.f32.mrf.mxu0
        %v2598 = vadd.f32 %v2485, %v2597
        %2599 = vmatmul.f32.gmra.mxu0 %v1971
        %v2600 = vpop.f32.mrf.mxu0
        %v2601 = vadd.f32 %v2488, %v2600
        %2602 = vmatmul.f32.gmra.mxu0 %v1972
        %v2603 = vpop.f32.mrf.mxu0
        %v2604 = vadd.f32 %v2491, %v2603
        %2605 = vmatmul.f32.gmra.mxu0 %v1973
        %v2606 = vpop.f32.mrf.mxu0
        %v2607 = vadd.f32 %v2494, %v2606
        %2608 = vmatmul.f32.gmra.mxu0 %v1974
        %v2609 = vpop.f32.mrf.mxu0
        %v2610 = vadd.f32 %v2497, %v2609
        %2611 = vmatmul.f32.gmra.mxu0 %v1975
        %v2612 = vpop.f32.mrf.mxu0
        %v2613 = vadd.f32 %v2500, %v2612
        %2614 = vmatmul.f32.gmra.mxu0 %v1976
        %v2615 = vpop.f32.mrf.mxu0
        %v2616 = vadd.f32 %v2503, %v2615
        %2617 = vmatmul.f32.gmra.mxu0 %v1977
        %v2618 = vpop.f32.mrf.mxu0
        %v2619 = vadd.f32 %v2506, %v2618
        %2620 = vmatmul.f32.gmra.mxu0 %v1978
        %v2621 = vpop.f32.mrf.mxu0
        %v2622 = vadd.f32 %v2509, %v2621
        %2623 = vmatmul.f32.gmra.mxu0 %v1979
        %v2624 = vpop.f32.mrf.mxu0
        %v2625 = vadd.f32 %v2512, %v2624
        %2626 = vmatmul.f32.gmra.mxu0 %v1980
        %v2627 = vpop.f32.mrf.mxu0
        %v2628 = vadd.f32 %v2515, %v2627
        %2629 = vmatmul.f32.gmra.mxu0 %v1981
        %v2630 = vpop.f32.mrf.mxu0
        %v2631 = vadd.f32 %v2518, %v2630
        %2632 = vmatmul.f32.gmra.mxu0 %v1982
        %v2633 = vpop.f32.mrf.mxu0
        %v2634 = vadd.f32 %v2521, %v2633
        %2635 = vmatmul.f32.gmra.mxu0 %v1983
        %v2636 = vpop.f32.mrf.mxu0
        %v2637 = vadd.f32 %v2524, %v2636
        %2638 = vmatmul.f32.gmra.mxu0 %v1984
        %v2639 = vpop.f32.mrf.mxu0
        %v2640 = vadd.f32 %v2527, %v2639
        %2641 = vmatmul.f32.gmra.mxu0 %v1985
        %v2642 = vpop.f32.mrf.mxu0
        %v2643 = vadd.f32 %v2530, %v2642
        %2644 = vmatmul.f32.gmra.mxu0 %v1986
        %v2645 = vpop.f32.mrf.mxu0
        %v2646 = vadd.f32 %v2533, %v2645
        %2647 = vmatmul.f32.gmra.mxu0 %v1987
        %v2648 = vpop.f32.mrf.mxu0
        %v2649 = vadd.f32 %v2536, %v2648
        %2650 = vmatmul.f32.gmra.mxu0 %v1988
        %v2651 = vpop.f32.mrf.mxu0
        %v2652 = vadd.f32 %v2539, %v2651
        %2653 = vmatmul.f32.gmra.mxu0 %v1989
        %v2654 = vpop.f32.mrf.mxu0
        %v2655 = vadd.f32 %v2542, %v2654
        %2656 = vmatmul.f32.gmra.mxu0 %v1990
        %v2657 = vpop.f32.mrf.mxu0
        %v2658 = vadd.f32 %v2545, %v2657
        %2659 = vmatmul.f32.gmra.mxu0 %v1991
        %v2660 = vpop.f32.mrf.mxu0
        %v2661 = vadd.f32 %v2548, %v2660
        %2662 = vmatmul.f32.gmra.mxu0 %v1992
        %v2663 = vpop.f32.mrf.mxu0
        %v2664 = vadd.f32 %v2551, %v2663
        %2665 = vmatmul.f32.gmra.mxu0 %v1993
        %v2666 = vpop.f32.mrf.mxu0
        %v2667 = vadd.f32 %v2554, %v2666
        %2668 = vmatmul.f32.gmra.mxu0 %v1994
        %v2669 = vpop.f32.mrf.mxu0
        %v2670 = vadd.f32 %v2557, %v2669
        %2671 = vmatmul.f32.gmra.mxu0 %v1995
        %v2672 = vpop.f32.mrf.mxu0
        %v2673 = vadd.f32 %v2560, %v2672
        %2674 = vdwg.mxu0
        %2675 = vmatpush.msra.mxu0 %v2251
        %2676 = vmatpush.msra.mxu0 %v2250
        %2677 = vmatpush.msra.mxu0 %v2249
        %2678 = vmatpush.msra.mxu0 %v2248
        %2679 = vmatpush.msra.mxu0 %v2247
        %2680 = vmatpush.msra.mxu0 %v2246
        %2681 = vmatpush.msra.mxu0 %v2245
        %2682 = vmatpush.msra.mxu0 %v2244
        %2683 = vmatpush.msra.mxu0 %v2243
        %2684 = vmatpush.msra.mxu0 %v2242
        %2685 = vmatpush.msra.mxu0 %v2241
        %2686 = vmatpush.msra.mxu0 %v2240
        %2687 = vmatpush.msra.mxu0 %v2239
        %2688 = vmatpush.msra.mxu0 %v2238
        %2689 = vmatpush.msra.mxu0 %v2237
        %2690 = vmatpush.msra.mxu0 %v2236
        %2691 = vmatmul.f32.gmra.mxu0 %v1996
        %v2692 = vpop.f32.mrf.mxu0
        %v2693 = vadd.f32 %v2580, %v2692
        %2694 = vmatmul.f32.gmra.mxu0 %v1997
        %v2695 = vpop.f32.mrf.mxu0
        %v2696 = vadd.f32 %v2583, %v2695
        %2697 = vmatmul.f32.gmra.mxu0 %v1998
        %v2698 = vpop.f32.mrf.mxu0
        %v2699 = vadd.f32 %v2586, %v2698
        %2700 = vmatmul.f32.gmra.mxu0 %v1999
        %v2701 = vpop.f32.mrf.mxu0
        %v2702 = vadd.f32 %v2589, %v2701
        %2703 = vmatmul.f32.gmra.mxu0 %v2000
        %v2704 = vpop.f32.mrf.mxu0
        %v2705 = vadd.f32 %v2592, %v2704
        %2706 = vmatmul.f32.gmra.mxu0 %v2001
        %v2707 = vpop.f32.mrf.mxu0
        %v2708 = vadd.f32 %v2595, %v2707
        %2709 = vmatmul.f32.gmra.mxu0 %v2002
        %v2710 = vpop.f32.mrf.mxu0
        %v2711 = vadd.f32 %v2598, %v2710
        %2712 = vmatmul.f32.gmra.mxu0 %v2003
        %v2713 = vpop.f32.mrf.mxu0
        %v2714 = vadd.f32 %v2601, %v2713
        %2715 = vmatmul.f32.gmra.mxu0 %v2004
        %v2716 = vpop.f32.mrf.mxu0
        %v2717 = vadd.f32 %v2604, %v2716
        %2718 = vmatmul.f32.gmra.mxu0 %v2005
        %v2719 = vpop.f32.mrf.mxu0
        %v2720 = vadd.f32 %v2607, %v2719
        %2721 = vmatmul.f32.gmra.mxu0 %v2006
        %v2722 = vpop.f32.mrf.mxu0
        %v2723 = vadd.f32 %v2610, %v2722
        %2724 = vmatmul.f32.gmra.mxu0 %v2007
        %v2725 = vpop.f32.mrf.mxu0
        %v2726 = vadd.f32 %v2613, %v2725
        %2727 = vmatmul.f32.gmra.mxu0 %v2008
        %v2728 = vpop.f32.mrf.mxu0
        %v2729 = vadd.f32 %v2616, %v2728
        %2730 = vmatmul.f32.gmra.mxu0 %v2009
        %v2731 = vpop.f32.mrf.mxu0
        %v2732 = vadd.f32 %v2619, %v2731
        %2733 = vmatmul.f32.gmra.mxu0 %v2010
        %v2734 = vpop.f32.mrf.mxu0
        %v2735 = vadd.f32 %v2622, %v2734
        %2736 = vmatmul.f32.gmra.mxu0 %v2011
        %v2737 = vpop.f32.mrf.mxu0
        %v2738 = vadd.f32 %v2625, %v2737
        %2739 = vmatmul.f32.gmra.mxu0 %v2012
        %v2740 = vpop.f32.mrf.mxu0
        %v2741 = vadd.f32 %v2628, %v2740
        %2742 = vmatmul.f32.gmra.mxu0 %v2013
        %v2743 = vpop.f32.mrf.mxu0
        %v2744 = vadd.f32 %v2631, %v2743
        %2745 = vmatmul.f32.gmra.mxu0 %v2014
        %v2746 = vpop.f32.mrf.mxu0
        %v2747 = vadd.f32 %v2634, %v2746
        %2748 = vmatmul.f32.gmra.mxu0 %v2015
        %v2749 = vpop.f32.mrf.mxu0
        %v2750 = vadd.f32 %v2637, %v2749
        %2751 = vmatmul.f32.gmra.mxu0 %v2016
        %v2752 = vpop.f32.mrf.mxu0
        %v2753 = vadd.f32 %v2640, %v2752
        %2754 = vmatmul.f32.gmra.mxu0 %v2017
        %v2755 = vpop.f32.mrf.mxu0
        %v2756 = vadd.f32 %v2643, %v2755
        %2757 = vmatmul.f32.gmra.mxu0 %v2018
        %v2758 = vpop.f32.mrf.mxu0
        %v2759 = vadd.f32 %v2646, %v2758
        %2760 = vmatmul.f32.gmra.mxu0 %v2019
        %v2761 = vpop.f32.mrf.mxu0
        %v2762 = vadd.f32 %v2649, %v2761
        %2763 = vmatmul.f32.gmra.mxu0 %v2020
        %v2764 = vpop.f32.mrf.mxu0
        %v2765 = vadd.f32 %v2652, %v2764
        %2766 = vmatmul.f32.gmra.mxu0 %v2021
        %v2767 = vpop.f32.mrf.mxu0
        %v2768 = vadd.f32 %v2655, %v2767
        %2769 = vmatmul.f32.gmra.mxu0 %v2022
        %v2770 = vpop.f32.mrf.mxu0
        %v2771 = vadd.f32 %v2658, %v2770
        %2772 = vmatmul.f32.gmra.mxu0 %v2023
        %v2773 = vpop.f32.mrf.mxu0
        %v2774 = vadd.f32 %v2661, %v2773
        %2775 = vmatmul.f32.gmra.mxu0 %v2024
        %v2776 = vpop.f32.mrf.mxu0
        %v2777 = vadd.f32 %v2664, %v2776
        %2778 = vmatmul.f32.gmra.mxu0 %v2025
        %v2779 = vpop.f32.mrf.mxu0
        %v2780 = vadd.f32 %v2667, %v2779
        %2781 = vmatmul.f32.gmra.mxu0 %v2026
        %v2782 = vpop.f32.mrf.mxu0
        %v2783 = vadd.f32 %v2670, %v2782
        %2784 = vmatmul.f32.gmra.mxu0 %v2027
        %v2785 = vpop.f32.mrf.mxu0
        %v2786 = vadd.f32 %v2673, %v2785
        %2787 = vdwg.mxu0
        %2788 = vmatpush.msra.mxu0 %v2267
        %2789 = vmatpush.msra.mxu0 %v2266
        %2790 = vmatpush.msra.mxu0 %v2265
        %2791 = vmatpush.msra.mxu0 %v2264
        %2792 = vmatpush.msra.mxu0 %v2263
        %2793 = vmatpush.msra.mxu0 %v2262
        %2794 = vmatpush.msra.mxu0 %v2261
        %2795 = vmatpush.msra.mxu0 %v2260
        %2796 = vmatpush.msra.mxu0 %v2259
        %2797 = vmatpush.msra.mxu0 %v2258
        %2798 = vmatpush.msra.mxu0 %v2257
        %2799 = vmatpush.msra.mxu0 %v2256
        %2800 = vmatpush.msra.mxu0 %v2255
        %2801 = vmatpush.msra.mxu0 %v2254
        %2802 = vmatpush.msra.mxu0 %v2253
        %2803 = vmatpush.msra.mxu0 %v2252
        %2804 = vmatmul.f32.gmra.mxu0 %v2028
        %v2805 = vpop.f32.mrf.mxu0
        %v2806 = vadd.f32 %v2693, %v2805
        %2807 = vmatmul.f32.gmra.mxu0 %v2029
        %v2808 = vpop.f32.mrf.mxu0
        %v2809 = vadd.f32 %v2696, %v2808
        %2810 = vmatmul.f32.gmra.mxu0 %v2030
        %v2811 = vpop.f32.mrf.mxu0
        %v2812 = vadd.f32 %v2699, %v2811
        %2813 = vmatmul.f32.gmra.mxu0 %v2031
        %v2814 = vpop.f32.mrf.mxu0
        %v2815 = vadd.f32 %v2702, %v2814
        %2816 = vmatmul.f32.gmra.mxu0 %v2032
        %v2817 = vpop.f32.mrf.mxu0
        %v2818 = vadd.f32 %v2705, %v2817
        %2819 = vmatmul.f32.gmra.mxu0 %v2033
        %v2820 = vpop.f32.mrf.mxu0
        %v2821 = vadd.f32 %v2708, %v2820
        %2822 = vmatmul.f32.gmra.mxu0 %v2034
        %v2823 = vpop.f32.mrf.mxu0
        %v2824 = vadd.f32 %v2711, %v2823
        %2825 = vmatmul.f32.gmra.mxu0 %v2035
        %v2826 = vpop.f32.mrf.mxu0
        %v2827 = vadd.f32 %v2714, %v2826
        %2828 = vmatmul.f32.gmra.mxu0 %v2036
        %v2829 = vpop.f32.mrf.mxu0
        %v2830 = vadd.f32 %v2717, %v2829
        %2831 = vmatmul.f32.gmra.mxu0 %v2037
        %v2832 = vpop.f32.mrf.mxu0
        %v2833 = vadd.f32 %v2720, %v2832
        %2834 = vmatmul.f32.gmra.mxu0 %v2038
        %v2835 = vpop.f32.mrf.mxu0
        %v2836 = vadd.f32 %v2723, %v2835
        %2837 = vmatmul.f32.gmra.mxu0 %v2039
        %v2838 = vpop.f32.mrf.mxu0
        %v2839 = vadd.f32 %v2726, %v2838
        %2840 = vmatmul.f32.gmra.mxu0 %v2040
        %v2841 = vpop.f32.mrf.mxu0
        %v2842 = vadd.f32 %v2729, %v2841
        %2843 = vmatmul.f32.gmra.mxu0 %v2041
        %v2844 = vpop.f32.mrf.mxu0
        %v2845 = vadd.f32 %v2732, %v2844
        %2846 = vmatmul.f32.gmra.mxu0 %v2042
        %v2847 = vpop.f32.mrf.mxu0
        %v2848 = vadd.f32 %v2735, %v2847
        %2849 = vmatmul.f32.gmra.mxu0 %v2043
        %v2850 = vpop.f32.mrf.mxu0
        %v2851 = vadd.f32 %v2738, %v2850
        %2852 = vmatmul.f32.gmra.mxu0 %v2044
        %v2853 = vpop.f32.mrf.mxu0
        %v2854 = vadd.f32 %v2741, %v2853
        %2855 = vmatmul.f32.gmra.mxu0 %v2045
        %v2856 = vpop.f32.mrf.mxu0
        %v2857 = vadd.f32 %v2744, %v2856
        %2858 = vmatmul.f32.gmra.mxu0 %v2046
        %v2859 = vpop.f32.mrf.mxu0
        %v2860 = vadd.f32 %v2747, %v2859
        %2861 = vmatmul.f32.gmra.mxu0 %v2047
        %v2862 = vpop.f32.mrf.mxu0
        %v2863 = vadd.f32 %v2750, %v2862
        %2864 = vmatmul.f32.gmra.mxu0 %v2048
        %v2865 = vpop.f32.mrf.mxu0
        %v2866 = vadd.f32 %v2753, %v2865
        %2867 = vmatmul.f32.gmra.mxu0 %v2049
        %v2868 = vpop.f32.mrf.mxu0
        %v2869 = vadd.f32 %v2756, %v2868
        %2870 = vmatmul.f32.gmra.mxu0 %v2050
        %v2871 = vpop.f32.mrf.mxu0
        %v2872 = vadd.f32 %v2759, %v2871
        %2873 = vmatmul.f32.gmra.mxu0 %v2051
        %v2874 = vpop.f32.mrf.mxu0
        %v2875 = vadd.f32 %v2762, %v2874
        %2876 = vmatmul.f32.gmra.mxu0 %v2052
        %v2877 = vpop.f32.mrf.mxu0
        %v2878 = vadd.f32 %v2765, %v2877
        %2879 = vmatmul.f32.gmra.mxu0 %v2053
        %v2880 = vpop.f32.mrf.mxu0
        %v2881 = vadd.f32 %v2768, %v2880
        %2882 = vmatmul.f32.gmra.mxu0 %v2054
        %v2883 = vpop.f32.mrf.mxu0
        %v2884 = vadd.f32 %v2771, %v2883
        %2885 = vmatmul.f32.gmra.mxu0 %v2055
        %v2886 = vpop.f32.mrf.mxu0
        %v2887 = vadd.f32 %v2774, %v2886
        %2888 = vmatmul.f32.gmra.mxu0 %v2056
        %v2889 = vpop.f32.mrf.mxu0
        %v2890 = vadd.f32 %v2777, %v2889
        %2891 = vmatmul.f32.gmra.mxu0 %v2057
        %v2892 = vpop.f32.mrf.mxu0
        %v2893 = vadd.f32 %v2780, %v2892
        %2894 = vmatmul.f32.gmra.mxu0 %v2058
        %v2895 = vpop.f32.mrf.mxu0
        %v2896 = vadd.f32 %v2783, %v2895
        %2897 = vmatmul.f32.gmra.mxu0 %v2059
        %v2898 = vpop.f32.mrf.mxu0
        %v2899 = vadd.f32 %v2786, %v2898
        %2900 = vdwg.mxu0
        %2901 = vmatpush.msra.mxu0 %v2283
        %2902 = vmatpush.msra.mxu0 %v2282
        %2903 = vmatpush.msra.mxu0 %v2281
        %2904 = vmatpush.msra.mxu0 %v2280
        %2905 = vmatpush.msra.mxu0 %v2279
        %2906 = vmatpush.msra.mxu0 %v2278
        %2907 = vmatpush.msra.mxu0 %v2277
        %2908 = vmatpush.msra.mxu0 %v2276
        %2909 = vmatpush.msra.mxu0 %v2275
        %2910 = vmatpush.msra.mxu0 %v2274
        %2911 = vmatpush.msra.mxu0 %v2273
        %2912 = vmatpush.msra.mxu0 %v2272
        %2913 = vmatpush.msra.mxu0 %v2271
        %2914 = vmatpush.msra.mxu0 %v2270
        %2915 = vmatpush.msra.mxu0 %v2269
        %2916 = vmatpush.msra.mxu0 %v2268
        %2917 = vmatmul.f32.gmra.mxu0 %v2060
        %v2918 = vpop.f32.mrf.mxu0
        %v2919 = vadd.f32 %v2806, %v2918
        %2920 = vmatmul.f32.gmra.mxu0 %v2061
        %v2921 = vpop.f32.mrf.mxu0
        %v2922 = vadd.f32 %v2809, %v2921
        %2923 = vmatmul.f32.gmra.mxu0 %v2062
        %v2924 = vpop.f32.mrf.mxu0
        %v2925 = vadd.f32 %v2812, %v2924
        %2926 = vmatmul.f32.gmra.mxu0 %v2063
        %v2927 = vpop.f32.mrf.mxu0
        %v2928 = vadd.f32 %v2815, %v2927
        %2929 = vmatmul.f32.gmra.mxu0 %v2064
        %v2930 = vpop.f32.mrf.mxu0
        %v2931 = vadd.f32 %v2818, %v2930
        %2932 = vmatmul.f32.gmra.mxu0 %v2065
        %v2933 = vpop.f32.mrf.mxu0
        %v2934 = vadd.f32 %v2821, %v2933
        %2935 = vmatmul.f32.gmra.mxu0 %v2066
        %v2936 = vpop.f32.mrf.mxu0
        %v2937 = vadd.f32 %v2824, %v2936
        %2938 = vmatmul.f32.gmra.mxu0 %v2067
        %v2939 = vpop.f32.mrf.mxu0
        %v2940 = vadd.f32 %v2827, %v2939
        %2941 = vmatmul.f32.gmra.mxu0 %v2068
        %v2942 = vpop.f32.mrf.mxu0
        %v2943 = vadd.f32 %v2830, %v2942
        %2944 = vmatmul.f32.gmra.mxu0 %v2069
        %v2945 = vpop.f32.mrf.mxu0
        %v2946 = vadd.f32 %v2833, %v2945
        %2947 = vmatmul.f32.gmra.mxu0 %v2070
        %v2948 = vpop.f32.mrf.mxu0
        %v2949 = vadd.f32 %v2836, %v2948
        %2950 = vmatmul.f32.gmra.mxu0 %v2071
        %v2951 = vpop.f32.mrf.mxu0
        %v2952 = vadd.f32 %v2839, %v2951
        %2953 = vmatmul.f32.gmra.mxu0 %v2072
        %v2954 = vpop.f32.mrf.mxu0
        %v2955 = vadd.f32 %v2842, %v2954
        %2956 = vmatmul.f32.gmra.mxu0 %v2073
        %v2957 = vpop.f32.mrf.mxu0
        %v2958 = vadd.f32 %v2845, %v2957
        %2959 = vmatmul.f32.gmra.mxu0 %v2074
        %v2960 = vpop.f32.mrf.mxu0
        %v2961 = vadd.f32 %v2848, %v2960
        %2962 = vmatmul.f32.gmra.mxu0 %v2075
        %v2963 = vpop.f32.mrf.mxu0
        %v2964 = vadd.f32 %v2851, %v2963
        %2965 = vmatmul.f32.gmra.mxu0 %v2076
        %v2966 = vpop.f32.mrf.mxu0
        %v2967 = vadd.f32 %v2854, %v2966
        %2968 = vmatmul.f32.gmra.mxu0 %v2077
        %v2969 = vpop.f32.mrf.mxu0
        %v2970 = vadd.f32 %v2857, %v2969
        %2971 = vmatmul.f32.gmra.mxu0 %v2078
        %v2972 = vpop.f32.mrf.mxu0
        %v2973 = vadd.f32 %v2860, %v2972
        %2974 = vmatmul.f32.gmra.mxu0 %v2079
        %v2975 = vpop.f32.mrf.mxu0
        %v2976 = vadd.f32 %v2863, %v2975
        %2977 = vmatmul.f32.gmra.mxu0 %v2080
        %v2978 = vpop.f32.mrf.mxu0
        %v2979 = vadd.f32 %v2866, %v2978
        %2980 = vmatmul.f32.gmra.mxu0 %v2081
        %v2981 = vpop.f32.mrf.mxu0
        %v2982 = vadd.f32 %v2869, %v2981
        %2983 = vmatmul.f32.gmra.mxu0 %v2082
        %v2984 = vpop.f32.mrf.mxu0
        %v2985 = vadd.f32 %v2872, %v2984
        %2986 = vmatmul.f32.gmra.mxu0 %v2083
        %v2987 = vpop.f32.mrf.mxu0
        %v2988 = vadd.f32 %v2875, %v2987
        %2989 = vmatmul.f32.gmra.mxu0 %v2084
        %v2990 = vpop.f32.mrf.mxu0
        %v2991 = vadd.f32 %v2878, %v2990
        %2992 = vmatmul.f32.gmra.mxu0 %v2085
        %v2993 = vpop.f32.mrf.mxu0
        %v2994 = vadd.f32 %v2881, %v2993
        %2995 = vmatmul.f32.gmra.mxu0 %v2086
        %v2996 = vpop.f32.mrf.mxu0
        %v2997 = vadd.f32 %v2884, %v2996
        %2998 = vmatmul.f32.gmra.mxu0 %v2087
        %v2999 = vpop.f32.mrf.mxu0
        %v3000 = vadd.f32 %v2887, %v2999
        %3001 = vmatmul.f32.gmra.mxu0 %v2088
        %v3002 = vpop.f32.mrf.mxu0
        %v3003 = vadd.f32 %v2890, %v3002
        %3004 = vmatmul.f32.gmra.mxu0 %v2089
        %v3005 = vpop.f32.mrf.mxu0
        %v3006 = vadd.f32 %v2893, %v3005
        %3007 = vmatmul.f32.gmra.mxu0 %v2090
        %v3008 = vpop.f32.mrf.mxu0
        %v3009 = vadd.f32 %v2896, %v3008
        %3010 = vmatmul.f32.gmra.mxu0 %v2091
        %v3011 = vpop.f32.mrf.mxu0
        %v3012 = vadd.f32 %v2899, %v3011
        %3013 = vdwg.mxu0
        %3014 = vmatpush.msra.mxu0 %v2299
        %3015 = vmatpush.msra.mxu0 %v2298
        %3016 = vmatpush.msra.mxu0 %v2297
        %3017 = vmatpush.msra.mxu0 %v2296
        %3018 = vmatpush.msra.mxu0 %v2295
        %3019 = vmatpush.msra.mxu0 %v2294
        %3020 = vmatpush.msra.mxu0 %v2293
        %3021 = vmatpush.msra.mxu0 %v2292
        %3022 = vmatpush.msra.mxu0 %v2291
        %3023 = vmatpush.msra.mxu0 %v2290
        %3024 = vmatpush.msra.mxu0 %v2289
        %3025 = vmatpush.msra.mxu0 %v2288
        %3026 = vmatpush.msra.mxu0 %v2287
        %3027 = vmatpush.msra.mxu0 %v2286
        %3028 = vmatpush.msra.mxu0 %v2285
        %3029 = vmatpush.msra.mxu0 %v2284
        %3030 = vmatmul.f32.gmra.mxu0 %v2092
        %v3031 = vpop.f32.mrf.mxu0
        %v3032 = vadd.f32 %v2919, %v3031
        %3033 = vmatmul.f32.gmra.mxu0 %v2093
        %v3034 = vpop.f32.mrf.mxu0
        %v3035 = vadd.f32 %v2922, %v3034
        %3036 = vmatmul.f32.gmra.mxu0 %v2094
        %v3037 = vpop.f32.mrf.mxu0
        %v3038 = vadd.f32 %v2925, %v3037
        %3039 = vmatmul.f32.gmra.mxu0 %v2095
        %v3040 = vpop.f32.mrf.mxu0
        %v3041 = vadd.f32 %v2928, %v3040
        %3042 = vmatmul.f32.gmra.mxu0 %v2096
        %v3043 = vpop.f32.mrf.mxu0
        %v3044 = vadd.f32 %v2931, %v3043
        %3045 = vmatmul.f32.gmra.mxu0 %v2097
        %v3046 = vpop.f32.mrf.mxu0
        %v3047 = vadd.f32 %v2934, %v3046
        %3048 = vmatmul.f32.gmra.mxu0 %v2098
        %v3049 = vpop.f32.mrf.mxu0
        %v3050 = vadd.f32 %v2937, %v3049
        %3051 = vmatmul.f32.gmra.mxu0 %v2099
        %v3052 = vpop.f32.mrf.mxu0
        %v3053 = vadd.f32 %v2940, %v3052
        %3054 = vmatmul.f32.gmra.mxu0 %v2100
        %v3055 = vpop.f32.mrf.mxu0
        %v3056 = vadd.f32 %v2943, %v3055
        %3057 = vmatmul.f32.gmra.mxu0 %v2101
        %v3058 = vpop.f32.mrf.mxu0
        %v3059 = vadd.f32 %v2946, %v3058
        %3060 = vmatmul.f32.gmra.mxu0 %v2102
        %v3061 = vpop.f32.mrf.mxu0
        %v3062 = vadd.f32 %v2949, %v3061
        %3063 = vmatmul.f32.gmra.mxu0 %v2103
        %v3064 = vpop.f32.mrf.mxu0
        %v3065 = vadd.f32 %v2952, %v3064
        %3066 = vmatmul.f32.gmra.mxu0 %v2104
        %v3067 = vpop.f32.mrf.mxu0
        %v3068 = vadd.f32 %v2955, %v3067
        %3069 = vmatmul.f32.gmra.mxu0 %v2105
        %v3070 = vpop.f32.mrf.mxu0
        %v3071 = vadd.f32 %v2958, %v3070
        %3072 = vmatmul.f32.gmra.mxu0 %v2106
        %v3073 = vpop.f32.mrf.mxu0
        %v3074 = vadd.f32 %v2961, %v3073
        %3075 = vmatmul.f32.gmra.mxu0 %v2107
        %v3076 = vpop.f32.mrf.mxu0
        %v3077 = vadd.f32 %v2964, %v3076
        %3078 = vmatmul.f32.gmra.mxu0 %v2108
        %v3079 = vpop.f32.mrf.mxu0
        %v3080 = vadd.f32 %v2967, %v3079
        %3081 = vmatmul.f32.gmra.mxu0 %v2109
        %v3082 = vpop.f32.mrf.mxu0
        %v3083 = vadd.f32 %v2970, %v3082
        %3084 = vmatmul.f32.gmra.mxu0 %v2110
        %v3085 = vpop.f32.mrf.mxu0
        %v3086 = vadd.f32 %v2973, %v3085
        %3087 = vmatmul.f32.gmra.mxu0 %v2111
        %v3088 = vpop.f32.mrf.mxu0
        %v3089 = vadd.f32 %v2976, %v3088
        %3090 = vmatmul.f32.gmra.mxu0 %v2112
        %v3091 = vpop.f32.mrf.mxu0
        %v3092 = vadd.f32 %v2979, %v3091
        %3093 = vmatmul.f32.gmra.mxu0 %v2113
        %v3094 = vpop.f32.mrf.mxu0
        %v3095 = vadd.f32 %v2982, %v3094
        %3096 = vmatmul.f32.gmra.mxu0 %v2114
        %v3097 = vpop.f32.mrf.mxu0
        %v3098 = vadd.f32 %v2985, %v3097
        %3099 = vmatmul.f32.gmra.mxu0 %v2115
        %v3100 = vpop.f32.mrf.mxu0
        %v3101 = vadd.f32 %v2988, %v3100
        %3102 = vmatmul.f32.gmra.mxu0 %v2116
        %v3103 = vpop.f32.mrf.mxu0
        %v3104 = vadd.f32 %v2991, %v3103
        %3105 = vmatmul.f32.gmra.mxu0 %v2117
        %v3106 = vpop.f32.mrf.mxu0
        %v3107 = vadd.f32 %v2994, %v3106
        %3108 = vmatmul.f32.gmra.mxu0 %v2118
        %v3109 = vpop.f32.mrf.mxu0
        %v3110 = vadd.f32 %v2997, %v3109
        %3111 = vmatmul.f32.gmra.mxu0 %v2119
        %v3112 = vpop.f32.mrf.mxu0
        %v3113 = vadd.f32 %v3000, %v3112
        %3114 = vmatmul.f32.gmra.mxu0 %v2120
        %v3115 = vpop.f32.mrf.mxu0
        %v3116 = vadd.f32 %v3003, %v3115
        %3117 = vmatmul.f32.gmra.mxu0 %v2121
        %v3118 = vpop.f32.mrf.mxu0
        %v3119 = vadd.f32 %v3006, %v3118
        %3120 = vmatmul.f32.gmra.mxu0 %v2122
        %v3121 = vpop.f32.mrf.mxu0
        %v3122 = vadd.f32 %v3009, %v3121
        %3123 = vmatmul.f32.gmra.mxu0 %v2123
        %v3124 = vpop.f32.mrf.mxu0
        %v3125 = vadd.f32 %v3012, %v3124
        %3126 = vdwg.mxu0
        %3127 = vmatpush.msra.mxu0 %v2315
        %3128 = vmatpush.msra.mxu0 %v2314
        %3129 = vmatpush.msra.mxu0 %v2313
        %3130 = vmatpush.msra.mxu0 %v2312
        %3131 = vmatpush.msra.mxu0 %v2311
        %3132 = vmatpush.msra.mxu0 %v2310
        %3133 = vmatpush.msra.mxu0 %v2309
        %3134 = vmatpush.msra.mxu0 %v2308
        %3135 = vmatpush.msra.mxu0 %v2307
        %3136 = vmatpush.msra.mxu0 %v2306
        %3137 = vmatpush.msra.mxu0 %v2305
        %3138 = vmatpush.msra.mxu0 %v2304
        %3139 = vmatpush.msra.mxu0 %v2303
        %3140 = vmatpush.msra.mxu0 %v2302
        %3141 = vmatpush.msra.mxu0 %v2301
        %3142 = vmatpush.msra.mxu0 %v2300
        %3143 = vmatmul.f32.gmra.mxu0 %v2124
        %v3144 = vpop.f32.mrf.mxu0
        %v3145 = vadd.f32 %v3032, %v3144
        %3146 = vmatmul.f32.gmra.mxu0 %v2125
        %v3147 = vpop.f32.mrf.mxu0
        %v3148 = vadd.f32 %v3035, %v3147
        %3149 = vmatmul.f32.gmra.mxu0 %v2126
        %v3150 = vpop.f32.mrf.mxu0
        %v3151 = vadd.f32 %v3038, %v3150
        %3152 = vmatmul.f32.gmra.mxu0 %v2127
        %v3153 = vpop.f32.mrf.mxu0
        %v3154 = vadd.f32 %v3041, %v3153
        %3155 = vmatmul.f32.gmra.mxu0 %v2128
        %v3156 = vpop.f32.mrf.mxu0
        %v3157 = vadd.f32 %v3044, %v3156
        %3158 = vmatmul.f32.gmra.mxu0 %v2129
        %v3159 = vpop.f32.mrf.mxu0
        %v3160 = vadd.f32 %v3047, %v3159
        %3161 = vmatmul.f32.gmra.mxu0 %v2130
        %v3162 = vpop.f32.mrf.mxu0
        %v3163 = vadd.f32 %v3050, %v3162
        %3164 = vmatmul.f32.gmra.mxu0 %v2131
        %v3165 = vpop.f32.mrf.mxu0
        %v3166 = vadd.f32 %v3053, %v3165
        %3167 = vmatmul.f32.gmra.mxu0 %v2132
        %v3168 = vpop.f32.mrf.mxu0
        %v3169 = vadd.f32 %v3056, %v3168
        %3170 = vmatmul.f32.gmra.mxu0 %v2133
        %v3171 = vpop.f32.mrf.mxu0
        %v3172 = vadd.f32 %v3059, %v3171
        %3173 = vmatmul.f32.gmra.mxu0 %v2134
        %v3174 = vpop.f32.mrf.mxu0
        %v3175 = vadd.f32 %v3062, %v3174
        %3176 = vmatmul.f32.gmra.mxu0 %v2135
        %v3177 = vpop.f32.mrf.mxu0
        %v3178 = vadd.f32 %v3065, %v3177
        %3179 = vmatmul.f32.gmra.mxu0 %v2136
        %v3180 = vpop.f32.mrf.mxu0
        %v3181 = vadd.f32 %v3068, %v3180
        %3182 = vmatmul.f32.gmra.mxu0 %v2137
        %v3183 = vpop.f32.mrf.mxu0
        %v3184 = vadd.f32 %v3071, %v3183
        %3185 = vmatmul.f32.gmra.mxu0 %v2138
        %v3186 = vpop.f32.mrf.mxu0
        %v3187 = vadd.f32 %v3074, %v3186
        %3188 = vmatmul.f32.gmra.mxu0 %v2139
        %v3189 = vpop.f32.mrf.mxu0
        %v3190 = vadd.f32 %v3077, %v3189
        %3191 = vmatmul.f32.gmra.mxu0 %v2140
        %v3192 = vpop.f32.mrf.mxu0
        %v3193 = vadd.f32 %v3080, %v3192
        %3194 = vmatmul.f32.gmra.mxu0 %v2141
        %v3195 = vpop.f32.mrf.mxu0
        %v3196 = vadd.f32 %v3083, %v3195
        %3197 = vmatmul.f32.gmra.mxu0 %v2142
        %v3198 = vpop.f32.mrf.mxu0
        %v3199 = vadd.f32 %v3086, %v3198
        %3200 = vmatmul.f32.gmra.mxu0 %v2143
        %v3201 = vpop.f32.mrf.mxu0
        %v3202 = vadd.f32 %v3089, %v3201
        %3203 = vmatmul.f32.gmra.mxu0 %v2144
        %v3204 = vpop.f32.mrf.mxu0
        %v3205 = vadd.f32 %v3092, %v3204
        %3206 = vmatmul.f32.gmra.mxu0 %v2145
        %v3207 = vpop.f32.mrf.mxu0
        %v3208 = vadd.f32 %v3095, %v3207
        %3209 = vmatmul.f32.gmra.mxu0 %v2146
        %v3210 = vpop.f32.mrf.mxu0
        %v3211 = vadd.f32 %v3098, %v3210
        %3212 = vmatmul.f32.gmra.mxu0 %v2147
        %v3213 = vpop.f32.mrf.mxu0
        %v3214 = vadd.f32 %v3101, %v3213
        %3215 = vmatmul.f32.gmra.mxu0 %v2148
        %v3216 = vpop.f32.mrf.mxu0
        %v3217 = vadd.f32 %v3104, %v3216
        %3218 = vmatmul.f32.gmra.mxu0 %v2149
        %v3219 = vpop.f32.mrf.mxu0
        %v3220 = vadd.f32 %v3107, %v3219
        %3221 = vmatmul.f32.gmra.mxu0 %v2150
        %v3222 = vpop.f32.mrf.mxu0
        %v3223 = vadd.f32 %v3110, %v3222
        %3224 = vmatmul.f32.gmra.mxu0 %v2151
        %v3225 = vpop.f32.mrf.mxu0
        %v3226 = vadd.f32 %v3113, %v3225
        %3227 = vmatmul.f32.gmra.mxu0 %v2152
        %v3228 = vpop.f32.mrf.mxu0
        %v3229 = vadd.f32 %v3116, %v3228
        %3230 = vmatmul.f32.gmra.mxu0 %v2153
        %v3231 = vpop.f32.mrf.mxu0
        %v3232 = vadd.f32 %v3119, %v3231
        %3233 = vmatmul.f32.gmra.mxu0 %v2154
        %v3234 = vpop.f32.mrf.mxu0
        %v3235 = vadd.f32 %v3122, %v3234
        %3236 = vmatmul.f32.gmra.mxu0 %v2155
        %v3237 = vpop.f32.mrf.mxu0
        %v3238 = vadd.f32 %v3125, %v3237
        %3239 = vdwg.mxu0
        %3240 = vmatpush.msra.mxu0 %v2331
        %3241 = vmatpush.msra.mxu0 %v2330
        %3242 = vmatpush.msra.mxu0 %v2329
        %3243 = vmatpush.msra.mxu0 %v2328
        %3244 = vmatpush.msra.mxu0 %v2327
        %3245 = vmatpush.msra.mxu0 %v2326
        %3246 = vmatpush.msra.mxu0 %v2325
        %3247 = vmatpush.msra.mxu0 %v2324
        %3248 = vmatpush.msra.mxu0 %v2323
        %3249 = vmatpush.msra.mxu0 %v2322
        %3250 = vmatpush.msra.mxu0 %v2321
        %3251 = vmatpush.msra.mxu0 %v2320
        %3252 = vmatpush.msra.mxu0 %v2319
        %3253 = vmatpush.msra.mxu0 %v2318
        %3254 = vmatpush.msra.mxu0 %v2317
        %3255 = vmatpush.msra.mxu0 %v2316
        %3256 = vmatmul.f32.gmra.mxu0 %v2156
        %v3257 = vpop.f32.mrf.mxu0
        %v3258 = vadd.f32 %v3145, %v3257
        %3259 = vmatmul.f32.gmra.mxu0 %v2157
        %v3260 = vpop.f32.mrf.mxu0
        %v3261 = vadd.f32 %v3148, %v3260
        %3262 = vmatmul.f32.gmra.mxu0 %v2158
        %v3263 = vpop.f32.mrf.mxu0
        %v3264 = vadd.f32 %v3151, %v3263
        %3265 = vmatmul.f32.gmra.mxu0 %v2159
        %v3266 = vpop.f32.mrf.mxu0
        %v3267 = vadd.f32 %v3154, %v3266
        %3268 = vmatmul.f32.gmra.mxu0 %v2160
        %v3269 = vpop.f32.mrf.mxu0
        %v3270 = vadd.f32 %v3157, %v3269
        %3271 = vmatmul.f32.gmra.mxu0 %v2161
        %v3272 = vpop.f32.mrf.mxu0
        %v3273 = vadd.f32 %v3160, %v3272
        %3274 = vmatmul.f32.gmra.mxu0 %v2162
        %v3275 = vpop.f32.mrf.mxu0
        %v3276 = vadd.f32 %v3163, %v3275
        %3277 = vmatmul.f32.gmra.mxu0 %v2163
        %v3278 = vpop.f32.mrf.mxu0
        %v3279 = vadd.f32 %v3166, %v3278
        %3280 = vmatmul.f32.gmra.mxu0 %v2164
        %v3281 = vpop.f32.mrf.mxu0
        %v3282 = vadd.f32 %v3169, %v3281
        %3283 = vmatmul.f32.gmra.mxu0 %v2165
        %v3284 = vpop.f32.mrf.mxu0
        %v3285 = vadd.f32 %v3172, %v3284
        %3286 = vmatmul.f32.gmra.mxu0 %v2166
        %v3287 = vpop.f32.mrf.mxu0
        %v3288 = vadd.f32 %v3175, %v3287
        %3289 = vmatmul.f32.gmra.mxu0 %v2167
        %v3290 = vpop.f32.mrf.mxu0
        %v3291 = vadd.f32 %v3178, %v3290
        %3292 = vmatmul.f32.gmra.mxu0 %v2168
        %v3293 = vpop.f32.mrf.mxu0
        %v3294 = vadd.f32 %v3181, %v3293
        %3295 = vmatmul.f32.gmra.mxu0 %v2169
        %v3296 = vpop.f32.mrf.mxu0
        %v3297 = vadd.f32 %v3184, %v3296
        %3298 = vmatmul.f32.gmra.mxu0 %v2170
        %v3299 = vpop.f32.mrf.mxu0
        %v3300 = vadd.f32 %v3187, %v3299
        %3301 = vmatmul.f32.gmra.mxu0 %v2171
        %v3302 = vpop.f32.mrf.mxu0
        %v3303 = vadd.f32 %v3190, %v3302
        %3304 = vmatmul.f32.gmra.mxu0 %v2172
        %v3305 = vpop.f32.mrf.mxu0
        %v3306 = vadd.f32 %v3193, %v3305
        %3307 = vmatmul.f32.gmra.mxu0 %v2173
        %v3308 = vpop.f32.mrf.mxu0
        %v3309 = vadd.f32 %v3196, %v3308
        %3310 = vmatmul.f32.gmra.mxu0 %v2174
        %v3311 = vpop.f32.mrf.mxu0
        %v3312 = vadd.f32 %v3199, %v3311
        %3313 = vmatmul.f32.gmra.mxu0 %v2175
        %v3314 = vpop.f32.mrf.mxu0
        %v3315 = vadd.f32 %v3202, %v3314
        %3316 = vmatmul.f32.gmra.mxu0 %v2176
        %v3317 = vpop.f32.mrf.mxu0
        %v3318 = vadd.f32 %v3205, %v3317
        %3319 = vmatmul.f32.gmra.mxu0 %v2177
        %v3320 = vpop.f32.mrf.mxu0
        %v3321 = vadd.f32 %v3208, %v3320
        %3322 = vmatmul.f32.gmra.mxu0 %v2178
        %v3323 = vpop.f32.mrf.mxu0
        %v3324 = vadd.f32 %v3211, %v3323
        %3325 = vmatmul.f32.gmra.mxu0 %v2179
        %v3326 = vpop.f32.mrf.mxu0
        %v3327 = vadd.f32 %v3214, %v3326
        %3328 = vmatmul.f32.gmra.mxu0 %v2180
        %v3329 = vpop.f32.mrf.mxu0
        %v3330 = vadd.f32 %v3217, %v3329
        %3331 = vmatmul.f32.gmra.mxu0 %v2181
        %v3332 = vpop.f32.mrf.mxu0
        %v3333 = vadd.f32 %v3220, %v3332
        %3334 = vmatmul.f32.gmra.mxu0 %v2182
        %v3335 = vpop.f32.mrf.mxu0
        %v3336 = vadd.f32 %v3223, %v3335
        %3337 = vmatmul.f32.gmra.mxu0 %v2183
        %v3338 = vpop.f32.mrf.mxu0
        %v3339 = vadd.f32 %v3226, %v3338
        %3340 = vmatmul.f32.gmra.mxu0 %v2184
        %v3341 = vpop.f32.mrf.mxu0
        %v3342 = vadd.f32 %v3229, %v3341
        %3343 = vmatmul.f32.gmra.mxu0 %v2185
        %v3344 = vpop.f32.mrf.mxu0
        %v3345 = vadd.f32 %v3232, %v3344
        %3346 = vmatmul.f32.gmra.mxu0 %v2186
        %v3347 = vpop.f32.mrf.mxu0
        %v3348 = vadd.f32 %v3235, %v3347
        %3349 = vmatmul.f32.gmra.mxu0 %v2187
        %v3350 = vpop.f32.mrf.mxu0
        %v3351 = vadd.f32 %v3238, %v3350
        %3352 = vdwg.mxu0
        %v3353 = vld [vmem:[%s240] sm:$0xff]
        %v3354 = vld [vmem:[%s240 + $0x8] sm:$0xff]
        %v3355 = vld [vmem:[%s240 + $0x10] sm:$0xff]
        %v3356 = vld [vmem:[%s240 + $0x18] sm:$0xff]
        %v3357 = vld [vmem:[%s240 + $0x20] sm:$0xff]
        %v3358 = vld [vmem:[%s240 + $0x28] sm:$0xff]
        %v3359 = vld [vmem:[%s240 + $0x30] sm:$0xff]
        %v3360 = vld [vmem:[%s240 + $0x38] sm:$0xff]
        %v3361 = vld [vmem:[%s240 + $0x40] sm:$0xff]
        %v3362 = vld [vmem:[%s240 + $0x48] sm:$0xff]
        %v3363 = vld [vmem:[%s240 + $0x50] sm:$0xff]
        %v3364 = vld [vmem:[%s240 + $0x58] sm:$0xff]
        %v3365 = vld [vmem:[%s240 + $0x60] sm:$0xff]
        %v3366 = vld [vmem:[%s240 + $0x68] sm:$0xff]
        %v3367 = vld [vmem:[%s240 + $0x70] sm:$0xff]
        %v3368 = vld [vmem:[%s240 + $0x78] sm:$0xff]
        %v3369 = vld [vmem:[%s240 + $0x80] sm:$0xff]
        %v3370 = vld [vmem:[%s240 + $0x88] sm:$0xff]
        %v3371 = vld [vmem:[%s240 + $0x90] sm:$0xff]
        %v3372 = vld [vmem:[%s240 + $0x98] sm:$0xff]
        %v3373 = vld [vmem:[%s240 + $0xa0] sm:$0xff]
        %v3374 = vld [vmem:[%s240 + $0xa8] sm:$0xff]
        %v3375 = vld [vmem:[%s240 + $0xb0] sm:$0xff]
        %v3376 = vld [vmem:[%s240 + $0xb8] sm:$0xff]
        %v3377 = vld [vmem:[%s240 + $0xc0] sm:$0xff]
        %v3378 = vld [vmem:[%s240 + $0xc8] sm:$0xff]
        %v3379 = vld [vmem:[%s240 + $0xd0] sm:$0xff]
        %v3380 = vld [vmem:[%s240 + $0xd8] sm:$0xff]
        %v3381 = vld [vmem:[%s240 + $0xe0] sm:$0xff]
        %v3382 = vld [vmem:[%s240 + $0xe8] sm:$0xff]
        %v3383 = vld [vmem:[%s240 + $0xf0] sm:$0xff]
        %v3384 = vld [vmem:[%s240 + $0xf8] sm:$0xff]
        %v3385 = vadd.f32 %v3258, %v3353
        %v3386 = vadd.f32 %v3261, %v3354
        %v3387 = vadd.f32 %v3264, %v3355
        %v3388 = vadd.f32 %v3267, %v3356
        %v3389 = vadd.f32 %v3270, %v3357
        %v3390 = vadd.f32 %v3273, %v3358
        %v3391 = vadd.f32 %v3276, %v3359
        %v3392 = vadd.f32 %v3279, %v3360
        %v3393 = vadd.f32 %v3282, %v3361
        %v3394 = vadd.f32 %v3285, %v3362
        %v3395 = vadd.f32 %v3288, %v3363
        %v3396 = vadd.f32 %v3291, %v3364
        %v3397 = vadd.f32 %v3294, %v3365
        %v3398 = vadd.f32 %v3297, %v3366
        %v3399 = vadd.f32 %v3300, %v3367
        %v3400 = vadd.f32 %v3303, %v3368
        %v3401 = vadd.f32 %v3306, %v3369
        %v3402 = vadd.f32 %v3309, %v3370
        %v3403 = vadd.f32 %v3312, %v3371
        %v3404 = vadd.f32 %v3315, %v3372
        %v3405 = vadd.f32 %v3318, %v3373
        %v3406 = vadd.f32 %v3321, %v3374
        %v3407 = vadd.f32 %v3324, %v3375
        %v3408 = vadd.f32 %v3327, %v3376
        %v3409 = vadd.f32 %v3330, %v3377
        %v3410 = vadd.f32 %v3333, %v3378
        %v3411 = vadd.f32 %v3336, %v3379
        %v3412 = vadd.f32 %v3339, %v3380
        %v3413 = vadd.f32 %v3342, %v3381
        %v3414 = vadd.f32 %v3345, %v3382
        %v3415 = vadd.f32 %v3348, %v3383
        %v3416 = vadd.f32 %v3351, %v3384
        %v3417 = vmax.f32 %v3385, 0.0
        %v3418 = vmax.f32 %v3386, 0.0
        %v3419 = vmax.f32 %v3387, 0.0
        %v3420 = vmax.f32 %v3388, 0.0
        %v3421 = vmax.f32 %v3389, 0.0
        %v3422 = vmax.f32 %v3390, 0.0
        %v3423 = vmax.f32 %v3391, 0.0
        %v3424 = vmax.f32 %v3392, 0.0
        %v3425 = vmax.f32 %v3393, 0.0
        %v3426 = vmax.f32 %v3394, 0.0
        %v3427 = vmax.f32 %v3395, 0.0
        %v3428 = vmax.f32 %v3396, 0.0
        %v3429 = vmax.f32 %v3397, 0.0
        %v3430 = vmax.f32 %v3398, 0.0
        %v3431 = vmax.f32 %v3399, 0.0
        %v3432 = vmax.f32 %v3400, 0.0
        %v3433 = vmax.f32 %v3401, 0.0
        %v3434 = vmax.f32 %v3402, 0.0
        %v3435 = vmax.f32 %v3403, 0.0
        %v3436 = vmax.f32 %v3404, 0.0
        %v3437 = vmax.f32 %v3405, 0.0
        %v3438 = vmax.f32 %v3406, 0.0
        %v3439 = vmax.f32 %v3407, 0.0
        %v3440 = vmax.f32 %v3408, 0.0
        %v3441 = vmax.f32 %v3409, 0.0
        %v3442 = vmax.f32 %v3410, 0.0
        %v3443 = vmax.f32 %v3411, 0.0
        %v3444 = vmax.f32 %v3412, 0.0
        %v3445 = vmax.f32 %v3413, 0.0
        %v3446 = vmax.f32 %v3414, 0.0
        %v3447 = vmax.f32 %v3415, 0.0
        %v3448 = vmax.f32 %v3416, 0.0
        %3449 = vst [vmem:[%s277] sm:$0xff] %v3417
        %3450 = vst [vmem:[%s277 + $0x8] sm:$0xff] %v3418
        %3451 = vst [vmem:[%s277 + $0x10] sm:$0xff] %v3419
        %3452 = vst [vmem:[%s277 + $0x18] sm:$0xff] %v3420
        %3453 = vst [vmem:[%s277 + $0x20] sm:$0xff] %v3421
        %3454 = vst [vmem:[%s277 + $0x28] sm:$0xff] %v3422
        %3455 = vst [vmem:[%s277 + $0x30] sm:$0xff] %v3423
        %3456 = vst [vmem:[%s277 + $0x38] sm:$0xff] %v3424
        %3457 = vst [vmem:[%s277 + $0x40] sm:$0xff] %v3425
        %3458 = vst [vmem:[%s277 + $0x48] sm:$0xff] %v3426
        %3459 = vst [vmem:[%s277 + $0x50] sm:$0xff] %v3427
        %3460 = vst [vmem:[%s277 + $0x58] sm:$0xff] %v3428
        %3461 = vst [vmem:[%s277 + $0x60] sm:$0xff] %v3429
        %3462 = vst [vmem:[%s277 + $0x68] sm:$0xff] %v3430
        %3463 = vst [vmem:[%s277 + $0x70] sm:$0xff] %v3431
        %3464 = vst [vmem:[%s277 + $0x78] sm:$0xff] %v3432
        %3465 = vst [vmem:[%s277 + $0x80] sm:$0xff] %v3433
        %3466 = vst [vmem:[%s277 + $0x88] sm:$0xff] %v3434
        %3467 = vst [vmem:[%s277 + $0x90] sm:$0xff] %v3435
        %3468 = vst [vmem:[%s277 + $0x98] sm:$0xff] %v3436
        %3469 = vst [vmem:[%s277 + $0xa0] sm:$0xff] %v3437
        %3470 = vst [vmem:[%s277 + $0xa8] sm:$0xff] %v3438
        %3471 = vst [vmem:[%s277 + $0xb0] sm:$0xff] %v3439
        %3472 = vst [vmem:[%s277 + $0xb8] sm:$0xff] %v3440
        %3473 = vst [vmem:[%s277 + $0xc0] sm:$0xff] %v3441
        %3474 = vst [vmem:[%s277 + $0xc8] sm:$0xff] %v3442
        %3475 = vst [vmem:[%s277 + $0xd0] sm:$0xff] %v3443
        %3476 = vst [vmem:[%s277 + $0xd8] sm:$0xff] %v3444
        %3477 = vst [vmem:[%s277 + $0xe0] sm:$0xff] %v3445
        %3478 = vst [vmem:[%s277 + $0xe8] sm:$0xff] %v3446
        %3479 = vst [vmem:[%s277 + $0xf0] sm:$0xff] %v3447
        %3480 = vst [vmem:[%s277 + $0xf8] sm:$0xff] %v3448
        %s3481 = sand.u32 %s141, 1
        %s3482 = scalar_lea.sflag [#allocation5], %s3481
        %s3483 = sand.u32 %s141, 1
        %s3484 = smul.addr %s3483, 256
        %s3485 = scalar_lea.vmem [#allocation9], %s3484
        // Predicated region
        $region53: #{tpu_custom_call.1} parent=39 // pred_check
          %p3486 = pneg %p151
        $region54: #{tpu_custom_call.1} parent=39 // pred_check_branch
          %3488 = sbr.rel (%p3486) target = $region56
        $region55: #{tpu_custom_call.1} parent=39 // pred_region
          %3490 = vsyncadd %s3482, 0
          %s3491 = smul.addr %s23, 32
          %s3492 = smul.addr %s3491, 8
          %s3493 = scalar_lea.hbm %s5, %s3492
          %s3494 = sshll.u32 %s3485, 4
          %s3495 = int_to_ptr.vmem [resolvable:$true] %s3494
          %s3496 = sshll.u32 %s3493, 4
          %s3497 = int_to_ptr.hbm [resolvable:$true] %s3496
          %3502 = dma.vmem_to_hbm [thread:$0]  %s3495, 4096, %s3497, %s3482, 128, 128, 8
        $region56: #{tpu_custom_call.1} parent=39 // pred_fallthru
          _
      $region40: #{tpu_custom_call.1} parent=5 // pred_fallthru
        _
      %p3503 = scmp.le.s32.totalorder 2, %s18
      // Predicated region
      $region57: #{tpu_custom_call.1} parent=5 // pred_check
        %p3504 = pneg %p3503
      $region58: #{tpu_custom_call.1} parent=5 // pred_check_branch
        %3506 = sbr.rel (%p3504) target = $region60
      $region59: #{tpu_custom_call.1} parent=5 // pred_region
        %s3507 = ssub.s32 %s18, 2
        // Predicated region
        $region61: #{tpu_custom_call.1} parent=59 // pred_check
          %p3508 = pneg %p157
        $region62: #{tpu_custom_call.1} parent=59 // pred_check_branch
          %3510 = sbr.rel (%p3508) target = $region64
        $region63: #{tpu_custom_call.1} parent=59 // pred_region
          %s3511 = sand.u32 %s142, 1
          %s3512 = scalar_lea.sflag [#allocation5], %s3511
          %s3513 = sand.u32 %s142, 1
          %s3514 = smul.addr %s3513, 256
          %s3515 = scalar_lea.vmem [#allocation9], %s3514
          %3517 = dma.done %s3512, 4096
        $region64: #{tpu_custom_call.1} parent=59 // pred_fallthru
          _
      $region60: #{tpu_custom_call.1} parent=5 // pred_fallthru
        _
    $region6: #{tpu_custom_call.1} parent=1 // loop_footer
      %s22 = sadd.s32 1, %s18
    $region7: #{tpu_custom_call.1} parent=1 // loop_footer_branch
      %17 = sbr.rel target = $region3
    $region8: #{tpu_custom_call.1} parent=1 // loop_exit
      _
    %3518 = vsyncpa [#allocation4], 1
    %s3519 = scalar_lea.sflag [#allocation4], 1
    %3520 = vsyncpa %s3519, 1
    %3521 = vsyncpa [#allocation7], 1
    %3522 = vsyncpa [#allocation5], 1
    %s3523 = scalar_lea.sflag [#allocation5], 1
    %3524 = vsyncpa %s3523, 1

</llo_original>
